<compile_context>
chip_gen: v6e
topology: v6e:2x2x1
jax: 0.10.0
libtpu: 0.0.40
codegen_flags: <defaults>
</compile_context>

<pallas_src>
import functools

import jax
import jax.numpy as jnp
from jax.experimental import pallas as pl
from jax.experimental.pallas import tpu as pltpu


def _round_up(x, m):
    return ((x + m - 1) // m) * m


def _device_vmem_bytes():
    """Physical VMEM per TensorCore (v5e/v6e: 128 MiB, v7x: 64 MiB)."""
    try:
        info = pltpu.get_tpu_info()
        for attr in ("vmem_capacity_bytes", "vmem_bytes", "vmem_size_bytes"):
            v = getattr(info, attr, None)
            if v:
                return int(v)
    except Exception:
        pass
    return 64 << 20  # conservative default (v7x per-TC)


# ----------------------------- Pallas kernel --------------------------------
def lm_forward_kernel(x_ref, w1_ref, b1_ref, wh_ref, bh_ref, wo_ref, bo_ref,
                      out_ref, h_scratch, *, num_hidden_layers):
    """One (token-tile i, vocab-tile j) grid step.

    x_ref  : (TN, E)   bf16  embedded tokens          (constant across vocab axis)
    w1_ref : (E, H) bf16, b1_ref: (1, H) f32
    wh_ref : (L-1, H, H) bf16, bh_ref: (L-1, 1, H) f32   stacked hidden layers
    wo_ref : (H, TV) bf16, bo_ref: (1, TV) f32           vocab-projection tile
    out_ref: (TN, TV)  logits tile
    h_scratch: (TN, H) bf16 VMEM scratch; hidden state of this token tile,
               computed once at vocab-tile 0 and reused for all vocab tiles.

    DO NOT reorder the grid or mark the vocab axis parallel/core_parallel:
    the h_scratch reuse relies on all j for a token tile running back-to-back
    sequentially on the same core.
    """
    # Hidden stack is independent of the vocab tile -> compute only at j == 0.
    @pl.when(pl.program_id(1) == 0)
    def _compute_hidden():
        # Input projection: (TN, E) @ (E, H) -> (TN, H), f32 accumulate + tanh.
        h = jnp.tanh(
            jnp.dot(x_ref[...], w1_ref[...],
                    preferred_element_type=jnp.float32)
            + b1_ref[...]
        )
        # Hidden stack (static unrolled loop -> MXU matmuls back to back).
        # TODO(synk): for very large H (L1*H*H*2 bytes comparable to VMEM),
        # stream wh per layer with a manual double-buffered DMA instead of
        # keeping the whole stack resident.
        for l in range(num_hidden_layers):
            h = jnp.tanh(
                jnp.dot(h.astype(wh_ref.dtype), wh_ref[l],
                        preferred_element_type=jnp.float32)
                + bh_ref[l]
            )
        h_scratch[...] = h.astype(h_scratch.dtype)

    # Vocab projection for this vocab tile: (TN, H) @ (H, TV) -> (TN, TV).
    out_ref[...] = (
        jnp.dot(h_scratch[...], wo_ref[...],
                preferred_element_type=jnp.float32)
        + bo_ref[...]
    ).astype(out_ref.dtype)


# ------------------------------ Wrapper --------------------------------------
def lm_forward(input_ids, params, *, tile_n=256, tile_v=512,
               pad_token_id=0, logits_dtype=jnp.float32):
    """Forward pass: (B, S) int32 token ids -> (B, S, V) logits."""
    emb = params["embedding"]            # (V, E)  bf16
    w1, b1 = params["w1"], params["b1"]  # (E, H) bf16, (1, H) f32
    wh, bh = params["wh"], params["bh"]  # (L-1, H, H) bf16, (L-1, 1, H) f32
    wo, bo = params["wo"], params["bo"]  # (H, V) bf16, (1, V) f32

    B, S = input_ids.shape
    V, E = emb.shape
    H = w1.shape[1]
    L1 = wh.shape[0]
    compute_dtype = w1.dtype
    out_itemsize = jnp.dtype(logits_dtype).itemsize

    assert E % 128 == 0 and H % 128 == 0, "embed/hidden dims must be lane-dense"

    N = B * S

    # ------------------------- tile selection --------------------------------
    tile_n = max(128, _round_up(int(tile_n), 128))
    tile_n = min(tile_n, _round_up(N, 128))   # don't over-pad tiny/decode batches
    tile_v = max(128, (int(tile_v) // 128) * 128)

    vmem_cap = _device_vmem_bytes()
    budget = max(vmem_cap - (8 << 20), 16 << 20)   # generation-aware headroom

    def footprint(tn, tv, dbuf_weights):
        wmult = 2 if dbuf_weights else 1
        resident = wmult * (tn * E * 2                     # x tile (bf16)
                            + E * H * 2 + H * 4            # w1 + b1
                            + L1 * H * H * 2 + L1 * H * 4)  # wh + bh stacks
        streamed = 2 * (H * tv * 2 + tv * 4)               # wo + bo (double-buf)
        outbuf = 2 * tn * tv * out_itemsize                # logits tile
        scratch = tn * H * 2                               # h_scratch (bf16)
        return resident + streamed + outbuf + scratch

    while tile_v > 128 and footprint(tile_n, tile_v, False) > budget:
        tile_v -= 128
    while tile_n > 128 and footprint(tile_n, tile_v, False) > budget:
        tile_n -= 128

    N_pad = _round_up(N, tile_n)
    n_tok_tiles = N_pad // tile_n
    V_pad = _round_up(V, tile_v)
    n_voc_tiles = V_pad // tile_v

    # -------- pad vocab weights (no full-V fallback) and token ids -----------
    if V_pad != V:
        wo = jnp.pad(wo, ((0, 0), (0, V_pad - V)))
        bo = jnp.pad(bo, ((0, 0), (0, V_pad - V)))

    ids_flat = input_ids.reshape(-1).astype(jnp.int32)
    if N_pad != N:
        # Pad the tiny int32 id array (free) instead of the (N,E) activations.
        ids_flat = jnp.pad(ids_flat, (0, N_pad - N),
                           constant_values=pad_token_id)
    # TODO(synk): the embedding gather could be fused into the kernel via
    # scalar-prefetched token ids + a manual DMA gather from emb in pl.ANY;
    # kept as an XLA gather on the padded id array for clarity.
    x = emb[ids_flat].astype(compute_dtype)               # (N_pad, E)

    kernel = functools.partial(lm_forward_kernel, num_hidden_layers=L1)
    grid = (n_tok_tiles, n_voc_tiles)

    # Advisory cost estimate; wo/bo are re-streamed once per token tile.
    cost = pl.CostEstimate(
        flops=2 * N_pad * (E * H + L1 * H * H + H * V_pad),
        transcendentals=N_pad * H * (L1 + 1),
        bytes_accessed=(N_pad * E * 2
                        + (E * H + L1 * H * H) * 2 + (H + L1 * H) * 4
                        + n_tok_tiles * (H * V_pad * 2 + V_pad * 4)
                        + N_pad * V_pad * out_itemsize),
    )

    # TODO(synk): for decode-shaped calls on v7x (n_tok_tiles < 2) both
    # TensorCores could be used by splitting into a hidden-MLP call followed
    # by a vocab-parallel projection call; not done here.
    def run(single_buffer_weights):
        kw = {"pipeline_mode": pl.Buffered(1)} if single_buffer_weights else {}
        in_specs = [
            pl.BlockSpec((tile_n, E), lambda i, j: (i, 0), **kw),        # x tile
            pl.BlockSpec((E, H), lambda i, j: (0, 0), **kw),             # w1
            pl.BlockSpec((1, H), lambda i, j: (0, 0), **kw),             # b1
            pl.BlockSpec((L1, H, H), lambda i, j: (0, 0, 0), **kw),      # wh stack
            pl.BlockSpec((L1, 1, H), lambda i, j: (0, 0, 0), **kw),      # bh stack
            pl.BlockSpec((H, tile_v), lambda i, j: (0, j)),              # wo tile
            pl.BlockSpec((1, tile_v), lambda i, j: (0, j)),              # bo tile
        ]
        vmem_limit = int(min(
            max(footprint(tile_n, tile_v, not single_buffer_weights) + (4 << 20),
                32 << 20),
            budget))
        return pl.pallas_call(
            kernel,
            out_shape=jax.ShapeDtypeStruct((N_pad, V_pad), logits_dtype),
            grid_spec=pltpu.PrefetchScalarGridSpec(
                num_scalar_prefetch=0,
                grid=grid,
                in_specs=in_specs,
                out_specs=pl.BlockSpec((tile_n, tile_v), lambda i, j: (i, j)),
                scratch_shapes=[pltpu.VMEM((tile_n, H), compute_dtype)],
            ),
            compiler_params=pltpu.CompilerParams(
                # token axis parallel (megacore), vocab axis MUST stay the
                # trailing sequential axis (h_scratch reuse invariant).
                dimension_semantics=("parallel", "arbitrary"),
                vmem_limit_bytes=vmem_limit,
            ),
            cost_estimate=cost,
        )(x, w1, b1, wh, bh, wo, bo)

    try:
        logits_flat = run(True)
    except Exception:
        # Fallback if this jax build rejects pipeline_mode=pl.Buffered(1).
        logits_flat = run(False)

    return logits_flat[:N, :V].reshape(B, S, V)


# --------------------------- Parameter init ----------------------------------
def init_params(key, vocab_size, embed_dim, hidden_dim, num_layers,
                pad_token_id=0, dtype=jnp.bfloat16):
    assert num_layers >= 2, "need at least one hidden layer after the input proj"
    ks = jax.random.split(key, 7)
    emb = (jax.random.normal(ks[0], (vocab_size, embed_dim), jnp.float32)
           * 0.02).astype(dtype)
    # padding_idx semantics: pad token embeds to the zero vector.
    emb = emb.at[pad_token_id].set(0.0)
    w1 = (jax.random.normal(ks[1], (embed_dim, hidden_dim), jnp.float32)
          * 0.05).astype(dtype)
    b1 = jnp.zeros((1, hidden_dim), jnp.float32)
    wh = (jax.random.normal(
        ks[2], (num_layers - 1, hidden_dim, hidden_dim), jnp.float32)
        * 0.05).astype(dtype)
    bh = jnp.zeros((num_layers - 1, 1, hidden_dim), jnp.float32)
    wo = (jax.random.normal(ks[3], (hidden_dim, vocab_size), jnp.float32)
          * 0.05).astype(dtype)
    bo = jnp.zeros((1, vocab_size), jnp.float32)
    return {"embedding": emb, "w1": w1, "b1": b1,
            "wh": wh, "bh": bh, "wo": wo, "bo": bo}


# Pure-JAX reference for correctness checking (mirrors the kernel's bf16
# matmul inputs + f32 accumulation / f32 tanh).
def lm_forward_ref(input_ids, params):
    f32 = jnp.float32

    def bf(v):  # round to bf16 then widen, matching the kernel's MXU inputs
        return v.astype(jnp.bfloat16).astype(f32)

    x = params["embedding"][input_ids].astype(f32)               # (B, S, E)
    h = jnp.tanh(bf(x) @ params["w1"].astype(f32) + params["b1"])
    for l in range(params["wh"].shape[0]):
        h = jnp.tanh(bf(h) @ params["wh"][l].astype(f32) + params["bh"][l])
    return bf(h) @ params["wo"].astype(f32) + params["bo"]


# ------------------------------- Main -----------------------------------------
if __name__ == "__main__":
    # Small shapes that still exercise every path: V=1000 is NOT a multiple of
    # the vocab tile (exercises vocab padding), B*S = 512 tokens -> 2 token
    # tiles at tile_n=256, V padded to 1024 -> 2 vocab tiles.
    VOCAB, EMBED, HIDDEN, LAYERS, PAD = 1000, 128, 128, 3, 0
    B, S = 8, 64

    key = jax.random.PRNGKey(0)
    pkey, dkey = jax.random.split(key)
    params = init_params(pkey, VOCAB, EMBED, HIDDEN, LAYERS, pad_token_id=PAD)

    input_ids = jax.random.randint(dkey, (B, S), 0, VOCAB, dtype=jnp.int32)
    # Put a few pad tokens in, as the docstring implies padded sequences.
    input_ids = input_ids.at[:, -2:].set(PAD)

    logits = lm_forward(input_ids, params, tile_n=256, tile_v=512,
                        pad_token_id=PAD)
    logits = jax.block_until_ready(logits)

    ref = lm_forward_ref(input_ids, params)
    assert logits.shape == (B, S, VOCAB)
    assert jnp.allclose(logits, ref, atol=2e-2, rtol=2e-2), "mismatch vs reference"

    # TODO(synk): predict_next_token's nucleus sampling (sort / cumsum /
    # multinomial) is host-side generation logic, not a kernel hot path; it is
    # intentionally left outside the Pallas kernel.
    print("KERNEL_OK")
</pallas_src>

<mosaic_0001>
module attributes {stable_mosaic.version = 11 : i64} {
  func.func @lm_forward_kernel(%arg0: i32, %arg1: i32, %arg2: memref<256x128xbf16, #tpu.memory_space<vmem>>, %arg3: memref<128x128xbf16, #tpu.memory_space<vmem>>, %arg4: memref<1x128xf32, #tpu.memory_space<vmem>>, %arg5: memref<2x128x128xbf16, #tpu.memory_space<vmem>>, %arg6: memref<2x1x128xf32, #tpu.memory_space<vmem>>, %arg7: memref<128x512xbf16, #tpu.memory_space<vmem>>, %arg8: memref<1x512xf32, #tpu.memory_space<vmem>>, %arg9: memref<256x512xf32, #tpu.memory_space<vmem>>, %arg10: memref<256x128xbf16, #tpu.memory_space<vmem>>) attributes {dimension_semantics = [#tpu.dimension_semantics<parallel>, #tpu.dimension_semantics<arbitrary>], iteration_bounds = array<i64: 2, 2>, scalar_prefetch = 0 : i64, scratch_operands = 1 : i64, tpu.core_type = #tpu.core_type<tc>, window_params = [{pipeline_mode = #tpu.pipeline_mode<synchronous>, transform_indices = @transform_0, window_bounds = array<i64: 256, 128>}, {pipeline_mode = #tpu.pipeline_mode<synchronous>, transform_indices = @transform_1, window_bounds = array<i64: 128, 128>}, {pipeline_mode = #tpu.pipeline_mode<synchronous>, transform_indices = @transform_2, window_bounds = array<i64: 1, 128>}, {pipeline_mode = #tpu.pipeline_mode<synchronous>, transform_indices = @transform_3, window_bounds = array<i64: 2, 128, 128>}, {pipeline_mode = #tpu.pipeline_mode<synchronous>, transform_indices = @transform_4, window_bounds = array<i64: 2, 1, 128>}, {transform_indices = @transform_5, window_bounds = array<i64: 128, 512>}, {transform_indices = @transform_6, window_bounds = array<i64: 1, 512>}, {transform_indices = @transform_7, window_bounds = array<i64: 256, 512>}]} {
    %c0_i32 = arith.constant 0 : i32
    %0 = arith.cmpi eq, %arg1, %c0_i32 : i32
    %1 = arith.extui %0 : i1 to i32
    %c0_i32_0 = arith.constant 0 : i32
    %2 = arith.cmpi ne, %1, %c0_i32_0 : i32
    scf.if %2 {
      %c0_8 = arith.constant 0 : index
      %c0_9 = arith.constant 0 : index
      %10 = vector.load %arg2[%c0_8, %c0_9] : memref<256x128xbf16, #tpu.memory_space<vmem>>, vector<256x128xbf16>
      %c0_10 = arith.constant 0 : index
      %c0_11 = arith.constant 0 : index
      %11 = vector.load %arg3[%c0_10, %c0_11] : memref<128x128xbf16, #tpu.memory_space<vmem>>, vector<128x128xbf16>
      %cst_12 = arith.constant dense<0.000000e+00> : vector<256x128xf32>
      %12 = tpu.matmul %10, %11, %cst_12 {dimension_numbers = #tpu.dot_dimension_numbers<[1], [0], [0], [1], [0, 0, 1, 1], [], []>} : vector<256x128xbf16>, vector<128x128xbf16>, vector<256x128xf32> -> vector<256x128xf32>
      %c0_13 = arith.constant 0 : index
      %c0_14 = arith.constant 0 : index
      %13 = vector.load %arg4[%c0_13, %c0_14] : memref<1x128xf32, #tpu.memory_space<vmem>>, vector<1x128xf32>
      %14 = vector.broadcast %13 : vector<1x128xf32> to vector<256x128xf32>
      %15 = arith.addf %12, %14 : vector<256x128xf32>
      %16 = math.tanh %15 : vector<256x128xf32>
      %17 = arith.truncf %16 : vector<256x128xf32> to vector<256x128xbf16>
      %c0_15 = arith.constant 0 : index
      %c0_16 = arith.constant 0 : index
      %c0_17 = arith.constant 0 : index
      %18 = vector.load %arg5[%c0_15, %c0_16, %c0_17] : memref<2x128x128xbf16, #tpu.memory_space<vmem>>, vector<1x128x128xbf16>
      %19 = vector.shape_cast %18 : vector<1x128x128xbf16> to vector<128x128xbf16>
      %cst_18 = arith.constant dense<0.000000e+00> : vector<256x128xf32>
      %20 = tpu.matmul %17, %19, %cst_18 {dimension_numbers = #tpu.dot_dimension_numbers<[1], [0], [0], [1], [0, 0, 1, 1], [], []>} : vector<256x128xbf16>, vector<128x128xbf16>, vector<256x128xf32> -> vector<256x128xf32>
      %c0_19 = arith.constant 0 : index
      %c0_20 = arith.constant 0 : index
      %c0_21 = arith.constant 0 : index
      %21 = vector.load %arg6[%c0_19, %c0_20, %c0_21] : memref<2x1x128xf32, #tpu.memory_space<vmem>>, vector<1x1x128xf32>
      %22 = vector.shape_cast %21 : vector<1x1x128xf32> to vector<1x128xf32>
      %23 = vector.broadcast %22 : vector<1x128xf32> to vector<256x128xf32>
      %24 = arith.addf %20, %23 : vector<256x128xf32>
      %25 = math.tanh %24 : vector<256x128xf32>
      %26 = arith.truncf %25 : vector<256x128xf32> to vector<256x128xbf16>
      %c1 = arith.constant 1 : index
      %c0_22 = arith.constant 0 : index
      %c0_23 = arith.constant 0 : index
      %27 = vector.load %arg5[%c1, %c0_22, %c0_23] : memref<2x128x128xbf16, #tpu.memory_space<vmem>>, vector<1x128x128xbf16>
      %28 = vector.shape_cast %27 : vector<1x128x128xbf16> to vector<128x128xbf16>
      %cst_24 = arith.constant dense<0.000000e+00> : vector<256x128xf32>
      %29 = tpu.matmul %26, %28, %cst_24 {dimension_numbers = #tpu.dot_dimension_numbers<[1], [0], [0], [1], [0, 0, 1, 1], [], []>} : vector<256x128xbf16>, vector<128x128xbf16>, vector<256x128xf32> -> vector<256x128xf32>
      %c1_25 = arith.constant 1 : index
      %c0_26 = arith.constant 0 : index
      %c0_27 = arith.constant 0 : index
      %30 = vector.load %arg6[%c1_25, %c0_26, %c0_27] : memref<2x1x128xf32, #tpu.memory_space<vmem>>, vector<1x1x128xf32>
      %31 = vector.shape_cast %30 : vector<1x1x128xf32> to vector<1x128xf32>
      %32 = vector.broadcast %31 : vector<1x128xf32> to vector<256x128xf32>
      %33 = arith.addf %29, %32 : vector<256x128xf32>
      %34 = math.tanh %33 : vector<256x128xf32>
      %35 = arith.truncf %34 : vector<256x128xf32> to vector<256x128xbf16>
      %c0_28 = arith.constant 0 : index
      %c0_29 = arith.constant 0 : index
      %36 = vector.load %arg10[%c0_28, %c0_29] : memref<256x128xbf16, #tpu.memory_space<vmem>>, vector<256x128xbf16>
      tpu.vector_store %arg10[%c0_28, %c0_29], %35 {strides = array<i32>} : memref<256x128xbf16, #tpu.memory_space<vmem>>, vector<256x128xbf16>,
    } else {
    }
    %c0 = arith.constant 0 : index
    %c0_1 = arith.constant 0 : index
    %3 = vector.load %arg10[%c0, %c0_1] : memref<256x128xbf16, #tpu.memory_space<vmem>>, vector<256x128xbf16>
    %c0_2 = arith.constant 0 : index
    %c0_3 = arith.constant 0 : index
    %4 = vector.load %arg7[%c0_2, %c0_3] : memref<128x512xbf16, #tpu.memory_space<vmem>>, vector<128x512xbf16>
    %cst = arith.constant dense<0.000000e+00> : vector<256x512xf32>
    %5 = tpu.matmul %3, %4, %cst {dimension_numbers = #tpu.dot_dimension_numbers<[1], [0], [0], [1], [0, 0, 1, 1], [], []>} : vector<256x128xbf16>, vector<128x512xbf16>, vector<256x512xf32> -> vector<256x512xf32>
    %c0_4 = arith.constant 0 : index
    %c0_5 = arith.constant 0 : index
    %6 = vector.load %arg8[%c0_4, %c0_5] : memref<1x512xf32, #tpu.memory_space<vmem>>, vector<1x512xf32>
    %7 = vector.broadcast %6 : vector<1x512xf32> to vector<256x512xf32>
    %8 = arith.addf %5, %7 : vector<256x512xf32>
    %c0_6 = arith.constant 0 : index
    %c0_7 = arith.constant 0 : index
    %9 = vector.load %arg9[%c0_6, %c0_7] : memref<256x512xf32, #tpu.memory_space<vmem>>, vector<256x512xf32>
    tpu.vector_store %arg9[%c0_6, %c0_7], %8 {strides = array<i32>} : memref<256x512xf32, #tpu.memory_space<vmem>>, vector<256x512xf32>,
    return
  }
  func.func @transform_0(%arg0: i32, %arg1: i32) -> (i32, i32) {
    %c0_i32 = arith.constant 0 : i32
    %c0_i32_0 = arith.constant 0 : i32
    return %arg0, %c0_i32 : i32, i32
  }
  func.func @transform_1(%arg0: i32, %arg1: i32) -> (i32, i32) {
    %c0_i32 = arith.constant 0 : i32
    %c0_i32_0 = arith.constant 0 : i32
    %c0_i32_1 = arith.constant 0 : i32
    return %c0_i32, %c0_i32_0 : i32, i32
  }
  func.func @transform_2(%arg0: i32, %arg1: i32) -> (i32, i32) {
    %c0_i32 = arith.constant 0 : i32
    %c0_i32_0 = arith.constant 0 : i32
    %c0_i32_1 = arith.constant 0 : i32
    return %c0_i32, %c0_i32_0 : i32, i32
  }
  func.func @transform_3(%arg0: i32, %arg1: i32) -> (i32, i32, i32) {
    %c0_i32 = arith.constant 0 : i32
    %c0_i32_0 = arith.constant 0 : i32
    %c0_i32_1 = arith.constant 0 : i32
    %c0_i32_2 = arith.constant 0 : i32
    return %c0_i32, %c0_i32_0, %c0_i32_1 : i32, i32, i32
  }
  func.func @transform_4(%arg0: i32, %arg1: i32) -> (i32, i32, i32) {
    %c0_i32 = arith.constant 0 : i32
    %c0_i32_0 = arith.constant 0 : i32
    %c0_i32_1 = arith.constant 0 : i32
    %c0_i32_2 = arith.constant 0 : i32
    return %c0_i32, %c0_i32_0, %c0_i32_1 : i32, i32, i32
  }
  func.func @transform_5(%arg0: i32, %arg1: i32) -> (i32, i32) {
    %c0_i32 = arith.constant 0 : i32
    %c0_i32_0 = arith.constant 0 : i32
    return %c0_i32, %arg1 : i32, i32
  }
  func.func @transform_6(%arg0: i32, %arg1: i32) -> (i32, i32) {
    %c0_i32 = arith.constant 0 : i32
    %c0_i32_0 = arith.constant 0 : i32
    return %c0_i32, %arg1 : i32, i32
  }
  func.func @transform_7(%arg0: i32, %arg1: i32) -> (i32, i32) {
    %c0_i32 = arith.constant 0 : i32
    return %arg0, %arg1 : i32, i32
  }
}

module attributes {stable_mosaic.version = 11 : i64} {
  func.func @lm_forward_kernel(%arg0: i32, %arg1: i32, %arg2: memref<256x128xbf16, #tpu.memory_space<vmem>>, %arg3: memref<128x128xbf16, #tpu.memory_space<vmem>>, %arg4: memref<1x128xf32, #tpu.memory_space<vmem>>, %arg5: memref<2x128x128xbf16, #tpu.memory_space<vmem>>, %arg6: memref<2x1x128xf32, #tpu.memory_space<vmem>>, %arg7: memref<128x512xbf16, #tpu.memory_space<vmem>>, %arg8: memref<1x512xf32, #tpu.memory_space<vmem>>, %arg9: memref<256x512xf32, #tpu.memory_space<vmem>>, %arg10: memref<256x128xbf16, #tpu.memory_space<vmem>>) attributes {dimension_semantics = [#tpu.dimension_semantics<parallel>, #tpu.dimension_semantics<arbitrary>], iteration_bounds = array<i64: 2, 2>, scalar_prefetch = 0 : i64, scratch_operands = 1 : i64, tpu.core_type = #tpu.core_type<tc>, window_params = [{transform_indices = @transform_0, window_bounds = array<i64: 256, 128>}, {pipeline_mode = #tpu.pipeline_mode<synchronous>, transform_indices = @transform_1, window_bounds = array<i64: 128, 128>}, {pipeline_mode = #tpu.pipeline_mode<synchronous>, transform_indices = @transform_2, window_bounds = array<i64: 1, 128>}, {pipeline_mode = #tpu.pipeline_mode<synchronous>, transform_indices = @transform_3, window_bounds = array<i64: 2, 128, 128>}, {pipeline_mode = #tpu.pipeline_mode<synchronous>, transform_indices = @transform_4, window_bounds = array<i64: 2, 1, 128>}, {transform_indices = @transform_5, window_bounds = array<i64: 128, 512>}, {transform_indices = @transform_6, window_bounds = array<i64: 1, 512>}, {transform_indices = @transform_7, window_bounds = array<i64: 256, 512>}]} {
    %c0_i32 = arith.constant 0 : i32
    %0 = arith.cmpi eq, %arg1, %c0_i32 : i32
    %1 = arith.extui %0 : i1 to i32
    %c0_i32_0 = arith.constant 0 : i32
    %2 = arith.cmpi ne, %1, %c0_i32_0 : i32
    scf.if %2 {
      %c0_8 = arith.constant 0 : index
      %c0_9 = arith.constant 0 : index
      %10 = vector.load %arg2[%c0_8, %c0_9] : memref<256x128xbf16, #tpu.memory_space<vmem>>, vector<256x128xbf16>
      %c0_10 = arith.constant 0 : index
      %c0_11 = arith.constant 0 : index
      %11 = vector.load %arg3[%c0_10, %c0_11] : memref<128x128xbf16, #tpu.memory_space<vmem>>, vector<128x128xbf16>
      %cst_12 = arith.constant dense<0.000000e+00> : vector<256x128xf32>
      %12 = tpu.matmul %10, %11, %cst_12 {dimension_numbers = #tpu.dot_dimension_numbers<[1], [0], [0], [1], [0, 0, 1, 1], [], []>} : vector<256x128xbf16>, vector<128x128xbf16>, vector<256x128xf32> -> vector<256x128xf32>
      %c0_13 = arith.constant 0 : index
      %c0_14 = arith.constant 0 : index
      %13 = vector.load %arg4[%c0_13, %c0_14] : memref<1x128xf32, #tpu.memory_space<vmem>>, vector<1x128xf32>
      %14 = vector.broadcast %13 : vector<1x128xf32> to vector<256x128xf32>
      %15 = arith.addf %12, %14 : vector<256x128xf32>
      %16 = math.tanh %15 : vector<256x128xf32>
      %17 = arith.truncf %16 : vector<256x128xf32> to vector<256x128xbf16>
      %c0_15 = arith.constant 0 : index
      %c0_16 = arith.constant 0 : index
      %c0_17 = arith.constant 0 : index
      %18 = vector.load %arg5[%c0_15, %c0_16, %c0_17] : memref<2x128x128xbf16, #tpu.memory_space<vmem>>, vector<1x128x128xbf16>
      %19 = vector.shape_cast %18 : vector<1x128x128xbf16> to vector<128x128xbf16>
      %cst_18 = arith.constant dense<0.000000e+00> : vector<256x128xf32>
      %20 = tpu.matmul %17, %19, %cst_18 {dimension_numbers = #tpu.dot_dimension_numbers<[1], [0], [0], [1], [0, 0, 1, 1], [], []>} : vector<256x128xbf16>, vector<128x128xbf16>, vector<256x128xf32> -> vector<256x128xf32>
      %c0_19 = arith.constant 0 : index
      %c0_20 = arith.constant 0 : index
      %c0_21 = arith.constant 0 : index
      %21 = vector.load %arg6[%c0_19, %c0_20, %c0_21] : memref<2x1x128xf32, #tpu.memory_space<vmem>>, vector<1x1x128xf32>
      %22 = vector.shape_cast %21 : vector<1x1x128xf32> to vector<1x128xf32>
      %23 = vector.broadcast %22 : vector<1x128xf32> to vector<256x128xf32>
      %24 = arith.addf %20, %23 : vector<256x128xf32>
      %25 = math.tanh %24 : vector<256x128xf32>
      %26 = arith.truncf %25 : vector<256x128xf32> to vector<256x128xbf16>
      %c1 = arith.constant 1 : index
      %c0_22 = arith.constant 0 : index
      %c0_23 = arith.constant 0 : index
      %27 = vector.load %arg5[%c1, %c0_22, %c0_23] : memref<2x128x128xbf16, #tpu.memory_space<vmem>>, vector<1x128x128xbf16>
      %28 = vector.shape_cast %27 : vector<1x128x128xbf16> to vector<128x128xbf16>
      %cst_24 = arith.constant dense<0.000000e+00> : vector<256x128xf32>
      %29 = tpu.matmul %26, %28, %cst_24 {dimension_numbers = #tpu.dot_dimension_numbers<[1], [0], [0], [1], [0, 0, 1, 1], [], []>} : vector<256x128xbf16>, vector<128x128xbf16>, vector<256x128xf32> -> vector<256x128xf32>
      %c1_25 = arith.constant 1 : index
      %c0_26 = arith.constant 0 : index
      %c0_27 = arith.constant 0 : index
      %30 = vector.load %arg6[%c1_25, %c0_26, %c0_27] : memref<2x1x128xf32, #tpu.memory_space<vmem>>, vector<1x1x128xf32>
      %31 = vector.shape_cast %30 : vector<1x1x128xf32> to vector<1x128xf32>
      %32 = vector.broadcast %31 : vector<1x128xf32> to vector<256x128xf32>
      %33 = arith.addf %29, %32 : vector<256x128xf32>
      %34 = math.tanh %33 : vector<256x128xf32>
      %35 = arith.truncf %34 : vector<256x128xf32> to vector<256x128xbf16>
      %c0_28 = arith.constant 0 : index
      %c0_29 = arith.constant 0 : index
      %36 = vector.load %arg10[%c0_28, %c0_29] : memref<256x128xbf16, #tpu.memory_space<vmem>>, vector<256x128xbf16>
      tpu.vector_store %arg10[%c0_28, %c0_29], %35 {strides = array<i32>} : memref<256x128xbf16, #tpu.memory_space<vmem>>, vector<256x128xbf16>,
    } else {
    }
    %c0 = arith.constant 0 : index
    %c0_1 = arith.constant 0 : index
    %3 = vector.load %arg10[%c0, %c0_1] : memref<256x128xbf16, #tpu.memory_space<vmem>>, vector<256x128xbf16>
    %c0_2 = arith.constant 0 : index
    %c0_3 = arith.constant 0 : index
    %4 = vector.load %arg7[%c0_2, %c0_3] : memref<128x512xbf16, #tpu.memory_space<vmem>>, vector<128x512xbf16>
    %cst = arith.constant dense<0.000000e+00> : vector<256x512xf32>
    %5 = tpu.matmul %3, %4, %cst {dimension_numbers = #tpu.dot_dimension_numbers<[1], [0], [0], [1], [0, 0, 1, 1], [], []>} : vector<256x128xbf16>, vector<128x512xbf16>, vector<256x512xf32> -> vector<256x512xf32>
    %c0_4 = arith.constant 0 : index
    %c0_5 = arith.constant 0 : index
    %6 = vector.load %arg8[%c0_4, %c0_5] : memref<1x512xf32, #tpu.memory_space<vmem>>, vector<1x512xf32>
    %7 = vector.broadcast %6 : vector<1x512xf32> to vector<256x512xf32>
    %8 = arith.addf %5, %7 : vector<256x512xf32>
    %c0_6 = arith.constant 0 : index
    %c0_7 = arith.constant 0 : index
    %9 = vector.load %arg9[%c0_6, %c0_7] : memref<256x512xf32, #tpu.memory_space<vmem>>, vector<256x512xf32>
    tpu.vector_store %arg9[%c0_6, %c0_7], %8 {strides = array<i32>} : memref<256x512xf32, #tpu.memory_space<vmem>>, vector<256x512xf32>,
    return
  }
  func.func @transform_0(%arg0: i32, %arg1: i32) -> (i32, i32) {
    %c0_i32 = arith.constant 0 : i32
    %c0_i32_0 = arith.constant 0 : i32
    return %arg0, %c0_i32 : i32, i32
  }
  func.func @transform_1(%arg0: i32, %arg1: i32) -> (i32, i32) {
    %c0_i32 = arith.constant 0 : i32
    %c0_i32_0 = arith.constant 0 : i32
    %c0_i32_1 = arith.constant 0 : i32
    return %c0_i32, %c0_i32_0 : i32, i32
  }
  func.func @transform_2(%arg0: i32, %arg1: i32) -> (i32, i32) {
    %c0_i32 = arith.constant 0 : i32
    %c0_i32_0 = arith.constant 0 : i32
    %c0_i32_1 = arith.constant 0 : i32
    return %c0_i32, %c0_i32_0 : i32, i32
  }
  func.func @transform_3(%arg0: i32, %arg1: i32) -> (i32, i32, i32) {
    %c0_i32 = arith.constant 0 : i32
    %c0_i32_0 = arith.constant 0 : i32
    %c0_i32_1 = arith.constant 0 : i32
    %c0_i32_2 = arith.constant 0 : i32
    return %c0_i32, %c0_i32_0, %c0_i32_1 : i32, i32, i32
  }
  func.func @transform_4(%arg0: i32, %arg1: i32) -> (i32, i32, i32) {
    %c0_i32 = arith.constant 0 : i32
    %c0_i32_0 = arith.constant 0 : i32
    %c0_i32_1 = arith.constant 0 : i32
    %c0_i32_2 = arith.constant 0 : i32
    return %c0_i32, %c0_i32_0, %c0_i32_1 : i32, i32, i32
  }
  func.func @transform_5(%arg0: i32, %arg1: i32) -> (i32, i32) {
    %c0_i32 = arith.constant 0 : i32
    %c0_i32_0 = arith.constant 0 : i32
    return %c0_i32, %arg1 : i32, i32
  }
  func.func @transform_6(%arg0: i32, %arg1: i32) -> (i32, i32) {
    %c0_i32 = arith.constant 0 : i32
    %c0_i32_0 = arith.constant 0 : i32
    return %c0_i32, %arg1 : i32, i32
  }
  func.func @transform_7(%arg0: i32, %arg1: i32) -> (i32, i32) {
    %c0_i32 = arith.constant 0 : i32
    return %arg0, %arg1 : i32, i32
  }
}

</mosaic_0001>

<llo_original>
// kernel: tpu_custom_call.1
$region0: #{tpu_custom_call.1}
  #allocation0 [shape = 'u32[]', space=smem, size = 0x4, offset = 0x4, fixed_abs, tag = 'smem constant byte address 0x4 - core index']
  #allocation1 [shape = 'u32[144,128]{1,0:T(1,128)}', space=vmem, size = 0x12000, scoped, tag = 'internal scratch']
  #allocation2 [shape = 'bf16[256,128]{1,0:T(8,128)(2,1)}', space=vmem, size = 0x10000, scoped, tag = 'scratch operand']
  %s0 = inlined_call_operand.hbm [shape: bf16[512,128], index: 0, kind: input, shape index: {}]
  %s1 = inlined_call_operand.hbm [shape: bf16[128,128], index: 1, kind: input, shape index: {}]
  %s2 = inlined_call_operand.hbm [shape: f32[1,128], index: 2, kind: input, shape index: {}]
  %s3 = inlined_call_operand.hbm [shape: bf16[2,128,128], index: 3, kind: input, shape index: {}]
  %s4 = inlined_call_operand.hbm [shape: f32[2,1,128], index: 4, kind: input, shape index: {}]
  %s5 = inlined_call_operand.hbm [shape: bf16[128,1024], index: 5, kind: input, shape index: {}]
  %s6 = inlined_call_operand.hbm [shape: f32[1,1024], index: 6, kind: input, shape index: {}]
  %s7 = inlined_call_operand.hbm [shape: f32[512,1024], index: 7, kind: output, shape index: {}]
  %s8 = sld [smem:[#allocation0]]
  $region93: #{tpu_custom_call.1} parent=0
    _
  %s10 = ssub.s32 1, %s8
  %s11 = scalar_select 0, %s10, %s8
  $region1: #{tpu_custom_call.1} parent=0
    #allocation3 [shape = 'u8[65536]{0}', space=vmem, size = 0x10000, scoped, tag = 'input window, operand 0, single buffered']
    #allocation4 [shape = 's32[2]{0}', space=sflag, size = 0x8, scoped, tag = 'scoped memory for tpu_custom_call.1']
    #allocation5 [shape = 's32[2]{0}', space=sflag, size = 0x8, scoped, tag = 'scoped memory for tpu_custom_call.1']
    #allocation6 [shape = 'u8[32768]{0}', space=vmem, size = 0x8000, scoped, tag = 'input window, operand 1, single buffered']
    #allocation7 [shape = 's32[1]{0}', space=sflag, size = 0x4, scoped, tag = 'scoped memory for tpu_custom_call.1']
    #allocation8 [shape = 'u8[512]{0}', space=vmem, size = 0x400, scoped, tag = 'input window, operand 2, single buffered']
    #allocation9 [shape = 'u8[65536]{0}', space=vmem, size = 0x10000, scoped, tag = 'input window, operand 3, single buffered']
    #allocation10 [shape = 's32[1]{0}', space=sflag, size = 0x4, scoped, tag = 'scoped memory for tpu_custom_call.1']
    #allocation11 [shape = 'u8[1024]{0}', space=vmem, size = 0x400, scoped, tag = 'input window, operand 4, single buffered']
    #allocation12 [shape = 'u8[262144]{0}', space=vmem, size = 0x40000, scoped, tag = 'input window, operand 5']
    #allocation13 [shape = 's32[2]{0}', space=sflag, size = 0x8, scoped, tag = 'scoped memory for tpu_custom_call.1']
    #allocation14 [shape = 'u8[4096]{0}', space=vmem, size = 0x1000, scoped, tag = 'input window, operand 6']
    #allocation15 [shape = 'u8[1048576]{0}', space=vmem, size = 0x100000, scoped, tag = 'output window, operand 0']
    %12 = vsyncpa [#allocation4], 0
    %13 = vsyncpa [#allocation7], 0
    %14 = vsyncpa [#allocation10], 0
    %15 = vsyncpa [#allocation13], 0
    %s16 = scalar_lea.sflag [#allocation13], 1
    %17 = vsyncpa %s16, 0
    %18 = vsyncpa [#allocation5], 0
    %s19 = scalar_lea.sflag [#allocation5], 1
    %20 = vsyncpa %s19, 0
    loop: start=0, step=1, limit=6
    $region2: #{tpu_custom_call.1} parent=1 // loop_pre_header
      _
    $region3: #{tpu_custom_call.1} parent=1 // loop_header
      %s22 = sphi 0, %s26
      %p23 = scmp.ge.s32.totalorder %s22, 6
      %s29 = sphi 0, %s41
      %s30 = sphi 0, %s37
      %s31 = sphi 0, %s29
      %s32 = sphi 0, %s30
      %s33 = sphi 0, %s31
      %s34 = sphi 0, %s32
      %s44 = sphi 0, %s46
      %s47 = sphi 0, %s44
      %s48 = sphi 0, %s47
      %s64 = sphi 0, %s48
      %s68 = sphi 0, %s68
      %s70 = sphi 0, %s68
      %s71 = sphi 0, %s70
      %s85 = sphi 0, %s71
      %s89 = sphi 0, %s89
      %s91 = sphi 0, %s89
      %s92 = sphi 0, %s91
      %s106 = sphi 0, %s92
      %s110 = sphi 0, %s110
      %s112 = sphi 0, %s110
      %s113 = sphi 0, %s112
      %s127 = sphi 0, %s113
      %s131 = sphi 0, %s131
      %s133 = sphi 0, %s131
      %s134 = sphi 0, %s133
      %s148 = sphi 0, %s134
      %s154 = sphi 0, %s156
      %s157 = sphi 0, %s154
      %s158 = sphi 0, %s157
      %s174 = sphi 0, %s158
      %s180 = sphi 0, %s182
      %s183 = sphi 0, %s180
      %s184 = sphi 0, %s183
      %s200 = sphi 0, %s184
      %s208 = sphi 0, %s210
      %s211 = sphi 0, %s208
      %s212 = sphi 0, %s211
      %s228 = sphi 0, %s212
    $region4: #{tpu_custom_call.1} parent=1 // loop_header_branch
      %25 = sbr.rel (%p23) target = $region8
    $region5: #{tpu_custom_call.1} parent=1 // loop_body
      %s27 = ssub.s32 %s22, 1
      %s28 = ssub.s32 %s22, 2
      %s35 = sadd.s32 1, %s30
      %p36 = scmp.ge.s32.totalorder %s35, 2
      %s37 = scalar_select %p36, 0, %s35
      %s38 = sadd.s32 1, %s29
      %s39 = scalar_select %p36, %s38, %s29
      %p40 = scmp.ge.s32.totalorder %s39, 2
      %s41 = scalar_select %p40, 0, %s39
      %s42 = ssub.s32 %s29, %s41
      %p43 = scmp.eq.s32.totalorder %s42, 0
      %s45 = sadd.s32 %s44, 1
      %s46 = scalar_select %p43, %s44, %s45
      %p49 = pneg %p43
      %p50 = scmp.eq.s32.totalorder %s22, 3
      %p51 = por %p49, %p50
      %p52 = scmp.ne.s32.totalorder %s44, %s47
      %p53 = scmp.eq.s32.totalorder %s22, 0
      %p54 = por %p52, %p53
      %p55 = scmp.ne.s32.totalorder %s44, %s47
      %p56 = scmp.eq.s32.totalorder %s27, 3
      %p57 = por %p55, %p56
      %p58 = scmp.ne.s32.totalorder %s47, %s48
      %p59 = scmp.eq.s32.totalorder %s27, 0
      %p60 = por %p58, %p59
      %p61 = scmp.ne.s32.totalorder %s47, %s48
      %p62 = scmp.eq.s32.totalorder %s28, 3
      %p63 = por %p61, %p62
      %p65 = scmp.ne.s32.totalorder %s48, %s64
      %p66 = scmp.eq.s32.totalorder %s28, 0
      %p67 = por %p65, %p66
      %s69 = sadd.s32 %s68, 1
      %p72 = scmp.eq.s32.totalorder %s22, 3
      %p73 = scmp.ne.s32.totalorder %s68, %s70
      %p74 = scmp.eq.s32.totalorder %s22, 0
      %p75 = por %p73, %p74
      %p76 = scmp.ne.s32.totalorder %s68, %s70
      %p77 = scmp.eq.s32.totalorder %s27, 3
      %p78 = por %p76, %p77
      %p79 = scmp.ne.s32.totalorder %s70, %s71
      %p80 = scmp.eq.s32.totalorder %s27, 0
      %p81 = por %p79, %p80
      %p82 = scmp.ne.s32.totalorder %s70, %s71
      %p83 = scmp.eq.s32.totalorder %s28, 3
      %p84 = por %p82, %p83
      %p86 = scmp.ne.s32.totalorder %s71, %s85
      %p87 = scmp.eq.s32.totalorder %s28, 0
      %p88 = por %p86, %p87
      %s90 = sadd.s32 %s89, 1
      %p93 = scmp.eq.s32.totalorder %s22, 3
      %p94 = scmp.ne.s32.totalorder %s89, %s91
      %p95 = scmp.eq.s32.totalorder %s22, 0
      %p96 = por %p94, %p95
      %p97 = scmp.ne.s32.totalorder %s89, %s91
      %p98 = scmp.eq.s32.totalorder %s27, 3
      %p99 = por %p97, %p98
      %p100 = scmp.ne.s32.totalorder %s91, %s92
      %p101 = scmp.eq.s32.totalorder %s27, 0
      %p102 = por %p100, %p101
      %p103 = scmp.ne.s32.totalorder %s91, %s92
      %p104 = scmp.eq.s32.totalorder %s28, 3
      %p105 = por %p103, %p104
      %p107 = scmp.ne.s32.totalorder %s92, %s106
      %p108 = scmp.eq.s32.totalorder %s28, 0
      %p109 = por %p107, %p108
      %s111 = sadd.s32 %s110, 1
      %p114 = scmp.eq.s32.totalorder %s22, 3
      %p115 = scmp.ne.s32.totalorder %s110, %s112
      %p116 = scmp.eq.s32.totalorder %s22, 0
      %p117 = por %p115, %p116
      %p118 = scmp.ne.s32.totalorder %s110, %s112
      %p119 = scmp.eq.s32.totalorder %s27, 3
      %p120 = por %p118, %p119
      %p121 = scmp.ne.s32.totalorder %s112, %s113
      %p122 = scmp.eq.s32.totalorder %s27, 0
      %p123 = por %p121, %p122
      %p124 = scmp.ne.s32.totalorder %s112, %s113
      %p125 = scmp.eq.s32.totalorder %s28, 3
      %p126 = por %p124, %p125
      %p128 = scmp.ne.s32.totalorder %s113, %s127
      %p129 = scmp.eq.s32.totalorder %s28, 0
      %p130 = por %p128, %p129
      %s132 = sadd.s32 %s131, 1
      %p135 = scmp.eq.s32.totalorder %s22, 3
      %p136 = scmp.ne.s32.totalorder %s131, %s133
      %p137 = scmp.eq.s32.totalorder %s22, 0
      %p138 = por %p136, %p137
      %p139 = scmp.ne.s32.totalorder %s131, %s133
      %p140 = scmp.eq.s32.totalorder %s27, 3
      %p141 = por %p139, %p140
      %p142 = scmp.ne.s32.totalorder %s133, %s134
      %p143 = scmp.eq.s32.totalorder %s27, 0
      %p144 = por %p142, %p143
      %p145 = scmp.ne.s32.totalorder %s133, %s134
      %p146 = scmp.eq.s32.totalorder %s28, 3
      %p147 = por %p145, %p146
      %p149 = scmp.ne.s32.totalorder %s134, %s148
      %p150 = scmp.eq.s32.totalorder %s28, 0
      %p151 = por %p149, %p150
      %s152 = ssub.s32 %s30, %s37
      %p153 = scmp.eq.s32.totalorder %s152, 0
      %s155 = sadd.s32 %s154, 1
      %s156 = scalar_select %p153, %s154, %s155
      %p159 = pneg %p153
      %p160 = scmp.eq.s32.totalorder %s22, 3
      %p161 = por %p159, %p160
      %p162 = scmp.ne.s32.totalorder %s154, %s157
      %p163 = scmp.eq.s32.totalorder %s22, 0
      %p164 = por %p162, %p163
      %p165 = scmp.ne.s32.totalorder %s154, %s157
      %p166 = scmp.eq.s32.totalorder %s27, 3
      %p167 = por %p165, %p166
      %p168 = scmp.ne.s32.totalorder %s157, %s158
      %p169 = scmp.eq.s32.totalorder %s27, 0
      %p170 = por %p168, %p169
      %p171 = scmp.ne.s32.totalorder %s157, %s158
      %p172 = scmp.eq.s32.totalorder %s28, 3
      %p173 = por %p171, %p172
      %p175 = scmp.ne.s32.totalorder %s158, %s174
      %p176 = scmp.eq.s32.totalorder %s28, 0
      %p177 = por %p175, %p176
      %s178 = ssub.s32 %s30, %s37
      %p179 = scmp.eq.s32.totalorder %s178, 0
      %s181 = sadd.s32 %s180, 1
      %s182 = scalar_select %p179, %s180, %s181
      %p185 = pneg %p179
      %p186 = scmp.eq.s32.totalorder %s22, 3
      %p187 = por %p185, %p186
      %p188 = scmp.ne.s32.totalorder %s180, %s183
      %p189 = scmp.eq.s32.totalorder %s22, 0
      %p190 = por %p188, %p189
      %p191 = scmp.ne.s32.totalorder %s180, %s183
      %p192 = scmp.eq.s32.totalorder %s27, 3
      %p193 = por %p191, %p192
      %p194 = scmp.ne.s32.totalorder %s183, %s184
      %p195 = scmp.eq.s32.totalorder %s27, 0
      %p196 = por %p194, %p195
      %p197 = scmp.ne.s32.totalorder %s183, %s184
      %p198 = scmp.eq.s32.totalorder %s28, 3
      %p199 = por %p197, %p198
      %p201 = scmp.ne.s32.totalorder %s184, %s200
      %p202 = scmp.eq.s32.totalorder %s28, 0
      %p203 = por %p201, %p202
      %s204 = ssub.s32 %s29, %s41
      %s205 = ssub.s32 %s30, %s37
      %s206 = sor.u32 %s204, %s205
      %p207 = scmp.eq.s32.totalorder %s206, 0
      %s209 = sadd.s32 %s208, 1
      %s210 = scalar_select %p207, %s208, %s209
      %p213 = pneg %p207
      %p214 = scmp.eq.s32.totalorder %s22, 3
      %p215 = por %p213, %p214
      %p216 = scmp.ne.s32.totalorder %s208, %s211
      %p217 = scmp.eq.s32.totalorder %s22, 0
      %p218 = por %p216, %p217
      %p219 = scmp.ne.s32.totalorder %s208, %s211
      %p220 = scmp.eq.s32.totalorder %s27, 3
      %p221 = por %p219, %p220
      %p222 = scmp.ne.s32.totalorder %s211, %s212
      %p223 = scmp.eq.s32.totalorder %s27, 0
      %p224 = por %p222, %p223
      %p225 = scmp.ne.s32.totalorder %s211, %s212
      %p226 = scmp.eq.s32.totalorder %s28, 3
      %p227 = por %p225, %p226
      %p229 = scmp.ne.s32.totalorder %s212, %s228
      %p230 = scmp.eq.s32.totalorder %s28, 0
      %p231 = por %p229, %p230
      %p232 = scmp.le.s32.totalorder 1, %s22
      %p233 = scmp.lt.s32.totalorder %s22, 5
      %p234 = pnand %p232, %p233
      %p235 = pneg %p234
      // Predicated region
      $region9: #{tpu_custom_call.1} parent=5 // pred_check
        _
      $region10: #{tpu_custom_call.1} parent=5 // pred_check_branch
        %237 = sbr.rel (%p234) target = $region12
      $region11: #{tpu_custom_call.1} parent=5 // pred_region
        %s238 = ssub.s32 %s22, 1
        // Predicated region
        $region13: #{tpu_custom_call.1} parent=11 // pred_check
          %p239 = pneg %p60
        $region14: #{tpu_custom_call.1} parent=11 // pred_check_branch
          %241 = sbr.rel (%p239) target = $region16
        $region15: #{tpu_custom_call.1} parent=11 // pred_region
          %s242 = smul.u32 32, %s31
          %s244 = ssub.s32 2048, 2048
          %245 = vsyncadd [#allocation4], %s244
          %s246 = smul.addr %s242, 64
          %s247 = scalar_lea.hbm %s0, %s246
          %s248 = sshll.u32 [#allocation3], 4
          %s249 = int_to_ptr.vmem [resolvable:$true] %s248
          %254 = dma.hbm_to_vmem [thread:$0]  %s247, 2048, %s249, [#allocation4], 64, 64, 4
        $region16: #{tpu_custom_call.1} parent=11 // pred_fallthru
          _
        // Predicated region
        $region17: #{tpu_custom_call.1} parent=11 // pred_check
          %p255 = pneg %p81
        $region18: #{tpu_custom_call.1} parent=11 // pred_check_branch
          %257 = sbr.rel (%p255) target = $region20
        $region19: #{tpu_custom_call.1} parent=11 // pred_region
          %s259 = ssub.s32 1024, 1024
          %260 = vsyncadd [#allocation7], %s259
          %s261 = sshll.u32 [#allocation6], 4
          %s262 = int_to_ptr.vmem [resolvable:$true] %s261
          %267 = dma.hbm_to_vmem [thread:$0]  %s1, 1024, %s262, [#allocation7], 64, 64, 4
        $region20: #{tpu_custom_call.1} parent=11 // pred_fallthru
          _
        // Predicated region
        $region21: #{tpu_custom_call.1} parent=11 // pred_check
          %p268 = pneg %p102
        $region22: #{tpu_custom_call.1} parent=11 // pred_check_branch
          %270 = sbr.rel (%p268) target = $region24
        $region23: #{tpu_custom_call.1} parent=11 // pred_region
          %s272 = ssub.s32 16, 16
          %273 = vsyncadd [#allocation7], %s272
          %s275 = sshll.u32 [#allocation8], 4
          %s276 = int_to_ptr.vmem [resolvable:$true] %s275
          %278 = dma.hbm_to_vmem [thread:$0]  %s2, 16, %s276, [#allocation7]
        $region24: #{tpu_custom_call.1} parent=11 // pred_fallthru
          _
        // Predicated region
        $region25: #{tpu_custom_call.1} parent=11 // pred_check
          %p279 = pneg %p123
        $region26: #{tpu_custom_call.1} parent=11 // pred_check_branch
          %281 = sbr.rel (%p279) target = $region28
        $region27: #{tpu_custom_call.1} parent=11 // pred_region
          %s283 = ssub.s32 2048, 2048
          %284 = vsyncadd [#allocation10], %s283
          %s285 = sshll.u32 [#allocation9], 4
          %s286 = int_to_ptr.vmem [resolvable:$true] %s285
          %291 = dma.hbm_to_vmem [thread:$0]  %s3, 2048, %s286, [#allocation10], 64, 64, 4
        $region28: #{tpu_custom_call.1} parent=11 // pred_fallthru
          _
        // Predicated region
        $region29: #{tpu_custom_call.1} parent=11 // pred_check
          %p292 = pneg %p144
        $region30: #{tpu_custom_call.1} parent=11 // pred_check_branch
          %294 = sbr.rel (%p292) target = $region32
        $region31: #{tpu_custom_call.1} parent=11 // pred_region
          %s296 = ssub.s32 32, 32
          %297 = vsyncadd [#allocation10], %s296
          %s298 = sshll.u32 [#allocation11], 4
          %s299 = int_to_ptr.vmem [resolvable:$true] %s298
          %304 = dma.hbm_to_vmem [thread:$0]  %s4, 32, %s299, [#allocation10], 16, 16, 1
        $region32: #{tpu_custom_call.1} parent=11 // pred_fallthru
          _
      $region12: #{tpu_custom_call.1} parent=5 // pred_fallthru
        _
      %p305 = scmp.lt.s32.totalorder %s22, 4
      // Predicated region
      $region33: #{tpu_custom_call.1} parent=5 // pred_check
        %p306 = pneg %p305
      $region34: #{tpu_custom_call.1} parent=5 // pred_check_branch
        %308 = sbr.rel (%p306) target = $region36
      $region35: #{tpu_custom_call.1} parent=5 // pred_region
        // Predicated region
        $region37: #{tpu_custom_call.1} parent=35 // pred_check
          %p309 = pneg %p164
        $region38: #{tpu_custom_call.1} parent=35 // pred_check_branch
          %311 = sbr.rel (%p309) target = $region40
        $region39: #{tpu_custom_call.1} parent=35 // pred_region
          %s312 = sand.u32 %s22, 1
          %s313 = scalar_lea.sflag [#allocation13], %s312
          %s314 = sand.u32 %s154, 1
          %s315 = smul.addr %s314, 256
          %s316 = scalar_lea.vmem [#allocation12], %s315
          %s317 = smul.u32 4, %s30
          %s319 = ssub.s32 4096, 4096
          %320 = vsyncadd %s313, %s319
          %s321 = smul.addr %s317, 64
          %s322 = scalar_lea.hbm %s5, %s321
          %s323 = sshll.u32 %s316, 4
          %s324 = int_to_ptr.vmem [resolvable:$true] %s323
          %329 = dma.hbm_to_vmem [thread:$0]  %s322, 4096, %s324, %s313, 512, 256, 16
        $region40: #{tpu_custom_call.1} parent=35 // pred_fallthru
          _
        // Predicated region
        $region41: #{tpu_custom_call.1} parent=35 // pred_check
          %p330 = pneg %p190
        $region42: #{tpu_custom_call.1} parent=35 // pred_check_branch
          %332 = sbr.rel (%p330) target = $region44
        $region43: #{tpu_custom_call.1} parent=35 // pred_region
          %s333 = sand.u32 %s22, 1
          %s334 = scalar_lea.sflag [#allocation13], %s333
          %s335 = sand.u32 %s180, 1
          %s336 = smul.addr %s335, 4
          %s337 = scalar_lea.vmem [#allocation14], %s336
          %s338 = smul.u32 4, %s30
          %s340 = ssub.s32 64, 64
          %341 = vsyncadd %s334, %s340
          %s342 = smul.addr %s338, 16
          %s343 = scalar_lea.hbm %s6, %s342
          %s345 = sshll.u32 %s337, 4
          %s346 = int_to_ptr.vmem [resolvable:$true] %s345
          %348 = dma.hbm_to_vmem [thread:$0]  %s343, 64, %s346, %s334
        $region44: #{tpu_custom_call.1} parent=35 // pred_fallthru
          _
      $region36: #{tpu_custom_call.1} parent=5 // pred_fallthru
        _
      %p349 = scmp.le.s32.totalorder 1, %s22
      %p350 = scmp.lt.s32.totalorder %s22, 5
      %p351 = pnand %p349, %p350
      %p352 = pneg %p351
      // Predicated region
      $region45: #{tpu_custom_call.1} parent=5 // pred_check
        _
      $region46: #{tpu_custom_call.1} parent=5 // pred_check_branch
        %354 = sbr.rel (%p351) target = $region48
      $region47: #{tpu_custom_call.1} parent=5 // pred_region
        %s355 = ssub.s32 %s22, 1
        // Predicated region
        $region49: #{tpu_custom_call.1} parent=47 // pred_check
          %p356 = pneg %p60
        $region50: #{tpu_custom_call.1} parent=47 // pred_check_branch
          %358 = sbr.rel (%p356) target = $region52
        $region51: #{tpu_custom_call.1} parent=47 // pred_region
          %359 = dma.done [#allocation4], 2048
        $region52: #{tpu_custom_call.1} parent=47 // pred_fallthru
          _
        // Predicated region
        $region53: #{tpu_custom_call.1} parent=47 // pred_check
          %p360 = pneg %p81
        $region54: #{tpu_custom_call.1} parent=47 // pred_check_branch
          %362 = sbr.rel (%p360) target = $region56
        $region55: #{tpu_custom_call.1} parent=47 // pred_region
          %363 = dma.done [#allocation7], 1024
        $region56: #{tpu_custom_call.1} parent=47 // pred_fallthru
          _
        // Predicated region
        $region57: #{tpu_custom_call.1} parent=47 // pred_check
          %p364 = pneg %p102
        $region58: #{tpu_custom_call.1} parent=47 // pred_check_branch
          %366 = sbr.rel (%p364) target = $region60
        $region59: #{tpu_custom_call.1} parent=47 // pred_region
          %367 = dma.done [#allocation7], 16
        $region60: #{tpu_custom_call.1} parent=47 // pred_fallthru
          _
        // Predicated region
        $region61: #{tpu_custom_call.1} parent=47 // pred_check
          %p368 = pneg %p123
        $region62: #{tpu_custom_call.1} parent=47 // pred_check_branch
          %370 = sbr.rel (%p368) target = $region64
        $region63: #{tpu_custom_call.1} parent=47 // pred_region
          %371 = dma.done [#allocation10], 2048
        $region64: #{tpu_custom_call.1} parent=47 // pred_fallthru
          _
        // Predicated region
        $region65: #{tpu_custom_call.1} parent=47 // pred_check
          %p372 = pneg %p144
        $region66: #{tpu_custom_call.1} parent=47 // pred_check_branch
          %374 = sbr.rel (%p372) target = $region68
        $region67: #{tpu_custom_call.1} parent=47 // pred_region
          %375 = dma.done [#allocation10], 32
        $region68: #{tpu_custom_call.1} parent=47 // pred_fallthru
          _
        %s376 = sand.u32 %s27, 1
        %s377 = scalar_lea.sflag [#allocation13], %s376
        %s378 = sand.u32 %s157, 1
        %s379 = smul.addr %s378, 256
        %s380 = scalar_lea.vmem [#allocation12], %s379
        // Predicated region
        $region69: #{tpu_custom_call.1} parent=47 // pred_check
          %p381 = pneg %p170
        $region70: #{tpu_custom_call.1} parent=47 // pred_check_branch
          %383 = sbr.rel (%p381) target = $region72
        $region71: #{tpu_custom_call.1} parent=47 // pred_region
          %384 = dma.done %s377, 4096
        $region72: #{tpu_custom_call.1} parent=47 // pred_fallthru
          _
        %s385 = sand.u32 %s27, 1
        %s386 = scalar_lea.sflag [#allocation13], %s385
        %s387 = sand.u32 %s183, 1
        %s388 = smul.addr %s387, 4
        %s389 = scalar_lea.vmem [#allocation14], %s388
        // Predicated region
        $region73: #{tpu_custom_call.1} parent=47 // pred_check
          %p390 = pneg %p196
        $region74: #{tpu_custom_call.1} parent=47 // pred_check_branch
          %392 = sbr.rel (%p390) target = $region76
        $region75: #{tpu_custom_call.1} parent=47 // pred_region
          %393 = dma.done %s386, 64
        $region76: #{tpu_custom_call.1} parent=47 // pred_fallthru
          _
        %p394 = pneg %p60
        %p395 = pneg %p57
        %p396 = pneg %p81
        %p397 = pneg %p78
        %p398 = pneg %p102
        %p399 = pneg %p99
        %p400 = pneg %p123
        %p401 = pneg %p120
        %p402 = pneg %p144
        %p403 = pneg %p141
        %s404 = sand.u32 %s27, 1
        %s405 = scalar_lea.sflag [#allocation13], %s404
        %s406 = sand.u32 %s157, 1
        %s407 = smul.addr %s406, 256
        %s408 = scalar_lea.vmem [#allocation12], %s407
        %p409 = pneg %p170
        %p410 = pneg %p167
        %s411 = sand.u32 %s27, 1
        %s412 = scalar_lea.sflag [#allocation13], %s411
        %s413 = sand.u32 %s183, 1
        %s414 = smul.addr %s413, 4
        %s415 = scalar_lea.vmem [#allocation14], %s414
        %p416 = pneg %p196
        %p417 = pneg %p193
        %p418 = pneg %p224
        %p419 = pneg %p221
        %s420 = sand.u32 %s211, 1
        %s421 = scalar_lea.sflag [#allocation5], %s420
        %s422 = sand.u32 %s211, 1
        %s423 = smul.addr %s422, 1024
        %s424 = scalar_lea.vmem [#allocation15], %s423
        %s425 = smul.u32 32, %s31
        %s426 = smul.u32 4, %s32
        %s427 = smul.u32 4, %s32
        %s428 = smul.u32 32, %s31
        %s429 = smul.u32 4, %s32
        %p431 = scmp.eq.s32.totalorder %s32, 0
        // Predicated region
        $region77: #{tpu_custom_call.1} parent=47 // pred_check
          %p432 = pneg %p431
        $region78: #{tpu_custom_call.1} parent=47 // pred_check_branch
          %434 = sbr.rel (%p432) target = $region80
        $region79: #{tpu_custom_call.1} parent=47 // pred_region
          %v435 = vld [vmem:[#allocation3] sm:$0xf]
          %v436 = vld [vmem:[#allocation3 + $0x4] sm:$0xf]
          %v437 = vld [vmem:[#allocation3 + $0x8] sm:$0xf]
          %v438 = vld [vmem:[#allocation3 + $0xc] sm:$0xf]
          %v439 = vld [vmem:[#allocation3 + $0x10] sm:$0xf]
          %v440 = vld [vmem:[#allocation3 + $0x14] sm:$0xf]
          %v441 = vld [vmem:[#allocation3 + $0x18] sm:$0xf]
          %v442 = vld [vmem:[#allocation3 + $0x1c] sm:$0xf]
          %v443 = vld [vmem:[#allocation3 + $0x20] sm:$0xf]
          %v444 = vld [vmem:[#allocation3 + $0x24] sm:$0xf]
          %v445 = vld [vmem:[#allocation3 + $0x28] sm:$0xf]
          %v446 = vld [vmem:[#allocation3 + $0x2c] sm:$0xf]
          %v447 = vld [vmem:[#allocation3 + $0x30] sm:$0xf]
          %v448 = vld [vmem:[#allocation3 + $0x34] sm:$0xf]
          %v449 = vld [vmem:[#allocation3 + $0x38] sm:$0xf]
          %v450 = vld [vmem:[#allocation3 + $0x3c] sm:$0xf]
          %v451 = vld [vmem:[#allocation3 + $0x40] sm:$0xf]
          %v452 = vld [vmem:[#allocation3 + $0x44] sm:$0xf]
          %v453 = vld [vmem:[#allocation3 + $0x48] sm:$0xf]
          %v454 = vld [vmem:[#allocation3 + $0x4c] sm:$0xf]
          %v455 = vld [vmem:[#allocation3 + $0x50] sm:$0xf]
          %v456 = vld [vmem:[#allocation3 + $0x54] sm:$0xf]
          %v457 = vld [vmem:[#allocation3 + $0x58] sm:$0xf]
          %v458 = vld [vmem:[#allocation3 + $0x5c] sm:$0xf]
          %v459 = vld [vmem:[#allocation3 + $0x60] sm:$0xf]
          %v460 = vld [vmem:[#allocation3 + $0x64] sm:$0xf]
          %v461 = vld [vmem:[#allocation3 + $0x68] sm:$0xf]
          %v462 = vld [vmem:[#allocation3 + $0x6c] sm:$0xf]
          %v463 = vld [vmem:[#allocation3 + $0x70] sm:$0xf]
          %v464 = vld [vmem:[#allocation3 + $0x74] sm:$0xf]
          %v465 = vld [vmem:[#allocation3 + $0x78] sm:$0xf]
          %v466 = vld [vmem:[#allocation3 + $0x7c] sm:$0xf]
          %v467 = vld [vmem:[#allocation6] sm:$0xf]
          %v468 = vld [vmem:[#allocation6 + $0x4] sm:$0xf]
          %v469 = vld [vmem:[#allocation6 + $0x8] sm:$0xf]
          %v470 = vld [vmem:[#allocation6 + $0xc] sm:$0xf]
          %v471 = vld [vmem:[#allocation6 + $0x10] sm:$0xf]
          %v472 = vld [vmem:[#allocation6 + $0x14] sm:$0xf]
          %v473 = vld [vmem:[#allocation6 + $0x18] sm:$0xf]
          %v474 = vld [vmem:[#allocation6 + $0x1c] sm:$0xf]
          %v475 = vld [vmem:[#allocation6 + $0x20] sm:$0xf]
          %v476 = vld [vmem:[#allocation6 + $0x24] sm:$0xf]
          %v477 = vld [vmem:[#allocation6 + $0x28] sm:$0xf]
          %v478 = vld [vmem:[#allocation6 + $0x2c] sm:$0xf]
          %v479 = vld [vmem:[#allocation6 + $0x30] sm:$0xf]
          %v480 = vld [vmem:[#allocation6 + $0x34] sm:$0xf]
          %v481 = vld [vmem:[#allocation6 + $0x38] sm:$0xf]
          %v482 = vld [vmem:[#allocation6 + $0x3c] sm:$0xf]
          %v483 = vld [vmem:[#allocation8] sm:$0x1]
          %v485 = vlaneseq
          %v486 = vshrl.u32 %v485, 7
          %v487 = vsub.s32 0, %v486
          %v488 = vrot.slane %v483, %v487
          %v522 = vunpack.c.l.b16 %v435
          %v523 = vunpack.c.l.b16 %v436
          %v524 = vunpack.c.l.b16 %v437
          %v525 = vunpack.c.l.b16 %v438
          %v526 = vunpack.c.l.b16 %v439
          %v527 = vunpack.c.l.b16 %v440
          %v528 = vunpack.c.l.b16 %v441
          %v529 = vunpack.c.l.b16 %v442
          %v530 = vunpack.c.l.b16 %v443
          %v531 = vunpack.c.l.b16 %v444
          %v532 = vunpack.c.l.b16 %v445
          %v533 = vunpack.c.l.b16 %v446
          %v534 = vunpack.c.l.b16 %v447
          %v535 = vunpack.c.l.b16 %v448
          %v536 = vunpack.c.l.b16 %v449
          %v537 = vunpack.c.l.b16 %v450
          %v538 = vunpack.c.l.b16 %v451
          %v539 = vunpack.c.l.b16 %v452
          %v540 = vunpack.c.l.b16 %v453
          %v541 = vunpack.c.l.b16 %v454
          %v542 = vunpack.c.l.b16 %v455
          %v543 = vunpack.c.l.b16 %v456
          %v544 = vunpack.c.l.b16 %v457
          %v545 = vunpack.c.l.b16 %v458
          %v546 = vunpack.c.l.b16 %v459
          %v547 = vunpack.c.l.b16 %v460
          %v548 = vunpack.c.l.b16 %v461
          %v549 = vunpack.c.l.b16 %v462
          %v550 = vunpack.c.l.b16 %v463
          %v551 = vunpack.c.l.b16 %v464
          %v552 = vunpack.c.l.b16 %v465
          %v553 = vunpack.c.l.b16 %v466
          %v554 = vpack.c.b16 %v523, %v522
          %v555 = vpack.c.b16 %v525, %v524
          %v556 = vpack.c.b16 %v527, %v526
          %v557 = vpack.c.b16 %v529, %v528
          %v558 = vpack.c.b16 %v531, %v530
          %v559 = vpack.c.b16 %v533, %v532
          %v560 = vpack.c.b16 %v535, %v534
          %v561 = vpack.c.b16 %v537, %v536
          %v562 = vpack.c.b16 %v539, %v538
          %v563 = vpack.c.b16 %v541, %v540
          %v564 = vpack.c.b16 %v543, %v542
          %v565 = vpack.c.b16 %v545, %v544
          %v566 = vpack.c.b16 %v547, %v546
          %v567 = vpack.c.b16 %v549, %v548
          %v568 = vpack.c.b16 %v551, %v550
          %v569 = vpack.c.b16 %v553, %v552
          %v602 = vunpack.c.l.b16 %v467
          %v603 = vunpack.c.l.b16 %v468
          %v604 = vunpack.c.l.b16 %v469
          %v605 = vunpack.c.l.b16 %v470
          %v606 = vunpack.c.l.b16 %v471
          %v607 = vunpack.c.l.b16 %v472
          %v608 = vunpack.c.l.b16 %v473
          %v609 = vunpack.c.l.b16 %v474
          %v610 = vunpack.c.l.b16 %v475
          %v611 = vunpack.c.l.b16 %v476
          %v612 = vunpack.c.l.b16 %v477
          %v613 = vunpack.c.l.b16 %v478
          %v614 = vunpack.c.l.b16 %v479
          %v615 = vunpack.c.l.b16 %v480
          %v616 = vunpack.c.l.b16 %v481
          %v617 = vunpack.c.l.b16 %v482
          %v618 = vpack.c.b16 %v603, %v602
          %v619 = vpack.c.b16 %v605, %v604
          %v620 = vpack.c.b16 %v607, %v606
          %v621 = vpack.c.b16 %v609, %v608
          %v622 = vpack.c.b16 %v611, %v610
          %v623 = vpack.c.b16 %v613, %v612
          %v624 = vpack.c.b16 %v615, %v614
          %v625 = vpack.c.b16 %v617, %v616
          %634 = vmatprep.subr.bf16.mxu0 0
          %635 = vmatpush1.bf16.msra.mxu0 %v625
          %636 = vmatprep.subr.bf16.mxu0 0
          %637 = vmatpush1.bf16.msra.mxu0 %v624
          %638 = vmatprep.subr.bf16.mxu0 0
          %639 = vmatpush1.bf16.msra.mxu0 %v623
          %640 = vmatprep.subr.bf16.mxu0 0
          %641 = vmatpush1.bf16.msra.mxu0 %v622
          %642 = vmatprep.subr.bf16.mxu0 0
          %643 = vmatpush1.bf16.msra.mxu0 %v621
          %644 = vmatprep.subr.bf16.mxu0 0
          %645 = vmatpush1.bf16.msra.mxu0 %v620
          %646 = vmatprep.subr.bf16.mxu0 0
          %647 = vmatpush1.bf16.msra.mxu0 %v619
          %648 = vmatprep.subr.bf16.mxu0 0
          %649 = vmatpush1.bf16.msra.mxu0 %v618
          %650 = vmatprep.subr.bf16.mxu0 0
          %651 = vmatpush2.bf16.msra.mxu0 0
          %652 = vmatprep.subr.bf16.mxu0 0
          %653 = vmatpush2.bf16.msra.mxu0 0
          %654 = vmatprep.subr.bf16.mxu0 0
          %655 = vmatpush2.bf16.msra.mxu0 0
          %656 = vmatprep.subr.bf16.mxu0 0
          %657 = vmatpush2.bf16.msra.mxu0 0
          %658 = vmatprep.subr.bf16.mxu0 0
          %659 = vmatpush2.bf16.msra.mxu0 0
          %660 = vmatprep.subr.bf16.mxu0 0
          %661 = vmatpush2.bf16.msra.mxu0 0
          %662 = vmatprep.subr.bf16.mxu0 0
          %663 = vmatpush2.bf16.msra.mxu0 0
          %664 = vmatprep.subr.bf16.mxu0 0
          %665 = vmatpush2.bf16.msra.mxu0 0
          %666 = vmatprep.mubr.bf16.mxu0 0
          %667 = vmatmul.mubr.bf16.gmra.mxu0 %v554
          %v668 = vpop.f32.mrf.mxu0
          %v669 = vadd.f32 %v488, %v668
          %v670 = vpop.f32.mrf.mxu0
          %v671 = vpop.f32.mrf.mxu0
          %v672 = vadd.f32 %v488, %v671
          %v673 = vpop.f32.mrf.mxu0
          %674 = vmatprep.mubr.bf16.mxu0 0
          %675 = vmatmul.mubr.bf16.gmra.mxu0 %v555
          %v676 = vpop.f32.mrf.mxu0
          %v677 = vadd.f32 %v488, %v676
          %v678 = vpop.f32.mrf.mxu0
          %v679 = vpop.f32.mrf.mxu0
          %v680 = vadd.f32 %v488, %v679
          %v681 = vpop.f32.mrf.mxu0
          %682 = vmatprep.mubr.bf16.mxu0 0
          %683 = vmatmul.mubr.bf16.gmra.mxu0 %v556
          %v684 = vpop.f32.mrf.mxu0
          %v685 = vadd.f32 %v488, %v684
          %v686 = vpop.f32.mrf.mxu0
          %v687 = vpop.f32.mrf.mxu0
          %v688 = vadd.f32 %v488, %v687
          %v689 = vpop.f32.mrf.mxu0
          %690 = vmatprep.mubr.bf16.mxu0 0
          %691 = vmatmul.mubr.bf16.gmra.mxu0 %v557
          %v692 = vpop.f32.mrf.mxu0
          %v693 = vadd.f32 %v488, %v692
          %v694 = vpop.f32.mrf.mxu0
          %v695 = vpop.f32.mrf.mxu0
          %v696 = vadd.f32 %v488, %v695
          %v697 = vpop.f32.mrf.mxu0
          %698 = vmatprep.mubr.bf16.mxu0 0
          %699 = vmatmul.mubr.bf16.gmra.mxu0 %v558
          %v700 = vpop.f32.mrf.mxu0
          %v701 = vadd.f32 %v488, %v700
          %v702 = vpop.f32.mrf.mxu0
          %v703 = vpop.f32.mrf.mxu0
          %v704 = vadd.f32 %v488, %v703
          %v705 = vpop.f32.mrf.mxu0
          %706 = vmatprep.mubr.bf16.mxu0 0
          %707 = vmatmul.mubr.bf16.gmra.mxu0 %v559
          %v708 = vpop.f32.mrf.mxu0
          %v709 = vadd.f32 %v488, %v708
          %v710 = vpop.f32.mrf.mxu0
          %v711 = vpop.f32.mrf.mxu0
          %v712 = vadd.f32 %v488, %v711
          %v713 = vpop.f32.mrf.mxu0
          %714 = vmatprep.mubr.bf16.mxu0 0
          %715 = vmatmul.mubr.bf16.gmra.mxu0 %v560
          %v716 = vpop.f32.mrf.mxu0
          %v717 = vadd.f32 %v488, %v716
          %v718 = vpop.f32.mrf.mxu0
          %v719 = vpop.f32.mrf.mxu0
          %v720 = vadd.f32 %v488, %v719
          %v721 = vpop.f32.mrf.mxu0
          %722 = vmatprep.mubr.bf16.mxu0 0
          %723 = vmatmul.mubr.bf16.gmra.mxu0 %v561
          %v724 = vpop.f32.mrf.mxu0
          %v725 = vadd.f32 %v488, %v724
          %v726 = vpop.f32.mrf.mxu0
          %v727 = vpop.f32.mrf.mxu0
          %v728 = vadd.f32 %v488, %v727
          %v729 = vpop.f32.mrf.mxu0
          %730 = vmatprep.mubr.bf16.mxu0 0
          %731 = vmatmul.mubr.bf16.gmra.mxu0 %v562
          %v732 = vpop.f32.mrf.mxu0
          %v733 = vadd.f32 %v488, %v732
          %v734 = vpop.f32.mrf.mxu0
          %v735 = vpop.f32.mrf.mxu0
          %v736 = vadd.f32 %v488, %v735
          %v737 = vpop.f32.mrf.mxu0
          %738 = vmatprep.mubr.bf16.mxu0 0
          %739 = vmatmul.mubr.bf16.gmra.mxu0 %v563
          %v740 = vpop.f32.mrf.mxu0
          %v741 = vadd.f32 %v488, %v740
          %v742 = vpop.f32.mrf.mxu0
          %v743 = vpop.f32.mrf.mxu0
          %v744 = vadd.f32 %v488, %v743
          %v745 = vpop.f32.mrf.mxu0
          %746 = vmatprep.mubr.bf16.mxu0 0
          %747 = vmatmul.mubr.bf16.gmra.mxu0 %v564
          %v748 = vpop.f32.mrf.mxu0
          %v749 = vadd.f32 %v488, %v748
          %v750 = vpop.f32.mrf.mxu0
          %v751 = vpop.f32.mrf.mxu0
          %v752 = vadd.f32 %v488, %v751
          %v753 = vpop.f32.mrf.mxu0
          %754 = vmatprep.mubr.bf16.mxu0 0
          %755 = vmatmul.mubr.bf16.gmra.mxu0 %v565
          %v756 = vpop.f32.mrf.mxu0
          %v757 = vadd.f32 %v488, %v756
          %v758 = vpop.f32.mrf.mxu0
          %v759 = vpop.f32.mrf.mxu0
          %v760 = vadd.f32 %v488, %v759
          %v761 = vpop.f32.mrf.mxu0
          %762 = vmatprep.mubr.bf16.mxu0 0
          %763 = vmatmul.mubr.bf16.gmra.mxu0 %v566
          %v764 = vpop.f32.mrf.mxu0
          %v765 = vadd.f32 %v488, %v764
          %v766 = vpop.f32.mrf.mxu0
          %v767 = vpop.f32.mrf.mxu0
          %v768 = vadd.f32 %v488, %v767
          %v769 = vpop.f32.mrf.mxu0
          %770 = vmatprep.mubr.bf16.mxu0 0
          %771 = vmatmul.mubr.bf16.gmra.mxu0 %v567
          %v772 = vpop.f32.mrf.mxu0
          %v773 = vadd.f32 %v488, %v772
          %v774 = vpop.f32.mrf.mxu0
          %v775 = vpop.f32.mrf.mxu0
          %v776 = vadd.f32 %v488, %v775
          %v777 = vpop.f32.mrf.mxu0
          %778 = vmatprep.mubr.bf16.mxu0 0
          %779 = vmatmul.mubr.bf16.gmra.mxu0 %v568
          %v780 = vpop.f32.mrf.mxu0
          %v781 = vadd.f32 %v488, %v780
          %v782 = vpop.f32.mrf.mxu0
          %v783 = vpop.f32.mrf.mxu0
          %v784 = vadd.f32 %v488, %v783
          %v785 = vpop.f32.mrf.mxu0
          %786 = vmatprep.mubr.bf16.mxu0 0
          %787 = vmatmul.mubr.bf16.gmra.mxu0 %v569
          %v788 = vpop.f32.mrf.mxu0
          %v789 = vadd.f32 %v488, %v788
          %v790 = vpop.f32.mrf.mxu0
          %v791 = vpop.f32.mrf.mxu0
          %v792 = vadd.f32 %v488, %v791
          %v793 = vpop.f32.mrf.mxu0
          %794 = vdwg.mxu0
          %v795 = vtanh.pop %v669
          %v796 = vtanh.pop %v672
          %v797 = vtanh.pop %v677
          %v798 = vtanh.pop %v680
          %v799 = vtanh.pop %v685
          %v800 = vtanh.pop %v688
          %v801 = vtanh.pop %v693
          %v802 = vtanh.pop %v696
          %v803 = vtanh.pop %v701
          %v804 = vtanh.pop %v704
          %v805 = vtanh.pop %v709
          %v806 = vtanh.pop %v712
          %v807 = vtanh.pop %v717
          %v808 = vtanh.pop %v720
          %v809 = vtanh.pop %v725
          %v810 = vtanh.pop %v728
          %v811 = vtanh.pop %v733
          %v812 = vtanh.pop %v736
          %v813 = vtanh.pop %v741
          %v814 = vtanh.pop %v744
          %v815 = vtanh.pop %v749
          %v816 = vtanh.pop %v752
          %v817 = vtanh.pop %v757
          %v818 = vtanh.pop %v760
          %v819 = vtanh.pop %v765
          %v820 = vtanh.pop %v768
          %v821 = vtanh.pop %v773
          %v822 = vtanh.pop %v776
          %v823 = vtanh.pop %v781
          %v824 = vtanh.pop %v784
          %v825 = vtanh.pop %v789
          %v826 = vtanh.pop %v792
          %v827 = vpack.c.bf16 %v796, %v795
          %v828 = vpack.c.bf16 %v798, %v797
          %v829 = vpack.c.bf16 %v800, %v799
          %v830 = vpack.c.bf16 %v802, %v801
          %v831 = vpack.c.bf16 %v804, %v803
          %v832 = vpack.c.bf16 %v806, %v805
          %v833 = vpack.c.bf16 %v808, %v807
          %v834 = vpack.c.bf16 %v810, %v809
          %v835 = vpack.c.bf16 %v812, %v811
          %v836 = vpack.c.bf16 %v814, %v813
          %v837 = vpack.c.bf16 %v816, %v815
          %v838 = vpack.c.bf16 %v818, %v817
          %v839 = vpack.c.bf16 %v820, %v819
          %v840 = vpack.c.bf16 %v822, %v821
          %v841 = vpack.c.bf16 %v824, %v823
          %v842 = vpack.c.bf16 %v826, %v825
          %v843 = vld [vmem:[#allocation9] sm:$0xf]
          %v844 = vld [vmem:[#allocation9 + $0x4] sm:$0xf]
          %v845 = vld [vmem:[#allocation9 + $0x8] sm:$0xf]
          %v846 = vld [vmem:[#allocation9 + $0xc] sm:$0xf]
          %v847 = vld [vmem:[#allocation9 + $0x10] sm:$0xf]
          %v848 = vld [vmem:[#allocation9 + $0x14] sm:$0xf]
          %v849 = vld [vmem:[#allocation9 + $0x18] sm:$0xf]
          %v850 = vld [vmem:[#allocation9 + $0x1c] sm:$0xf]
          %v851 = vld [vmem:[#allocation9 + $0x20] sm:$0xf]
          %v852 = vld [vmem:[#allocation9 + $0x24] sm:$0xf]
          %v853 = vld [vmem:[#allocation9 + $0x28] sm:$0xf]
          %v854 = vld [vmem:[#allocation9 + $0x2c] sm:$0xf]
          %v855 = vld [vmem:[#allocation9 + $0x30] sm:$0xf]
          %v856 = vld [vmem:[#allocation9 + $0x34] sm:$0xf]
          %v857 = vld [vmem:[#allocation9 + $0x38] sm:$0xf]
          %v858 = vld [vmem:[#allocation9 + $0x3c] sm:$0xf]
          %v859 = vld [vmem:[#allocation11] sm:$0x1]
          %v861 = vlaneseq
          %v862 = vshrl.u32 %v861, 7
          %v863 = vsub.s32 0, %v862
          %v864 = vrot.slane %v859, %v863
          %v882 = vunpack.c.l.b16 %v843
          %v883 = vunpack.c.l.b16 %v844
          %v884 = vunpack.c.l.b16 %v845
          %v885 = vunpack.c.l.b16 %v846
          %v886 = vunpack.c.l.b16 %v847
          %v887 = vunpack.c.l.b16 %v848
          %v888 = vunpack.c.l.b16 %v849
          %v889 = vunpack.c.l.b16 %v850
          %v890 = vunpack.c.l.b16 %v851
          %v891 = vunpack.c.l.b16 %v852
          %v892 = vunpack.c.l.b16 %v853
          %v893 = vunpack.c.l.b16 %v854
          %v894 = vunpack.c.l.b16 %v855
          %v895 = vunpack.c.l.b16 %v856
          %v896 = vunpack.c.l.b16 %v857
          %v897 = vunpack.c.l.b16 %v858
          %v898 = vpack.c.b16 %v883, %v882
          %v899 = vpack.c.b16 %v885, %v884
          %v900 = vpack.c.b16 %v887, %v886
          %v901 = vpack.c.b16 %v889, %v888
          %v902 = vpack.c.b16 %v891, %v890
          %v903 = vpack.c.b16 %v893, %v892
          %v904 = vpack.c.b16 %v895, %v894
          %v905 = vpack.c.b16 %v897, %v896
          %914 = vmatprep.subr.bf16.mxu0 0
          %915 = vmatpush1.bf16.msra.mxu0 %v905
          %916 = vmatprep.subr.bf16.mxu0 0
          %917 = vmatpush1.bf16.msra.mxu0 %v904
          %918 = vmatprep.subr.bf16.mxu0 0
          %919 = vmatpush1.bf16.msra.mxu0 %v903
          %920 = vmatprep.subr.bf16.mxu0 0
          %921 = vmatpush1.bf16.msra.mxu0 %v902
          %922 = vmatprep.subr.bf16.mxu0 0
          %923 = vmatpush1.bf16.msra.mxu0 %v901
          %924 = vmatprep.subr.bf16.mxu0 0
          %925 = vmatpush1.bf16.msra.mxu0 %v900
          %926 = vmatprep.subr.bf16.mxu0 0
          %927 = vmatpush1.bf16.msra.mxu0 %v899
          %928 = vmatprep.subr.bf16.mxu0 0
          %929 = vmatpush1.bf16.msra.mxu0 %v898
          %930 = vmatprep.subr.bf16.mxu0 0
          %931 = vmatpush2.bf16.msra.mxu0 0
          %932 = vmatprep.subr.bf16.mxu0 0
          %933 = vmatpush2.bf16.msra.mxu0 0
          %934 = vmatprep.subr.bf16.mxu0 0
          %935 = vmatpush2.bf16.msra.mxu0 0
          %936 = vmatprep.subr.bf16.mxu0 0
          %937 = vmatpush2.bf16.msra.mxu0 0
          %938 = vmatprep.subr.bf16.mxu0 0
          %939 = vmatpush2.bf16.msra.mxu0 0
          %940 = vmatprep.subr.bf16.mxu0 0
          %941 = vmatpush2.bf16.msra.mxu0 0
          %942 = vmatprep.subr.bf16.mxu0 0
          %943 = vmatpush2.bf16.msra.mxu0 0
          %944 = vmatprep.subr.bf16.mxu0 0
          %945 = vmatpush2.bf16.msra.mxu0 0
          %946 = vmatprep.mubr.bf16.mxu0 0
          %947 = vmatmul.mubr.bf16.gmra.mxu0 %v827
          %v948 = vpop.f32.mrf.mxu0
          %v949 = vadd.f32 %v864, %v948
          %v950 = vpop.f32.mrf.mxu0
          %v951 = vpop.f32.mrf.mxu0
          %v952 = vadd.f32 %v864, %v951
          %v953 = vpop.f32.mrf.mxu0
          %954 = vmatprep.mubr.bf16.mxu0 0
          %955 = vmatmul.mubr.bf16.gmra.mxu0 %v828
          %v956 = vpop.f32.mrf.mxu0
          %v957 = vadd.f32 %v864, %v956
          %v958 = vpop.f32.mrf.mxu0
          %v959 = vpop.f32.mrf.mxu0
          %v960 = vadd.f32 %v864, %v959
          %v961 = vpop.f32.mrf.mxu0
          %962 = vmatprep.mubr.bf16.mxu0 0
          %963 = vmatmul.mubr.bf16.gmra.mxu0 %v829
          %v964 = vpop.f32.mrf.mxu0
          %v965 = vadd.f32 %v864, %v964
          %v966 = vpop.f32.mrf.mxu0
          %v967 = vpop.f32.mrf.mxu0
          %v968 = vadd.f32 %v864, %v967
          %v969 = vpop.f32.mrf.mxu0
          %970 = vmatprep.mubr.bf16.mxu0 0
          %971 = vmatmul.mubr.bf16.gmra.mxu0 %v830
          %v972 = vpop.f32.mrf.mxu0
          %v973 = vadd.f32 %v864, %v972
          %v974 = vpop.f32.mrf.mxu0
          %v975 = vpop.f32.mrf.mxu0
          %v976 = vadd.f32 %v864, %v975
          %v977 = vpop.f32.mrf.mxu0
          %978 = vmatprep.mubr.bf16.mxu0 0
          %979 = vmatmul.mubr.bf16.gmra.mxu0 %v831
          %v980 = vpop.f32.mrf.mxu0
          %v981 = vadd.f32 %v864, %v980
          %v982 = vpop.f32.mrf.mxu0
          %v983 = vpop.f32.mrf.mxu0
          %v984 = vadd.f32 %v864, %v983
          %v985 = vpop.f32.mrf.mxu0
          %986 = vmatprep.mubr.bf16.mxu0 0
          %987 = vmatmul.mubr.bf16.gmra.mxu0 %v832
          %v988 = vpop.f32.mrf.mxu0
          %v989 = vadd.f32 %v864, %v988
          %v990 = vpop.f32.mrf.mxu0
          %v991 = vpop.f32.mrf.mxu0
          %v992 = vadd.f32 %v864, %v991
          %v993 = vpop.f32.mrf.mxu0
          %994 = vmatprep.mubr.bf16.mxu0 0
          %995 = vmatmul.mubr.bf16.gmra.mxu0 %v833
          %v996 = vpop.f32.mrf.mxu0
          %v997 = vadd.f32 %v864, %v996
          %v998 = vpop.f32.mrf.mxu0
          %v999 = vpop.f32.mrf.mxu0
          %v1000 = vadd.f32 %v864, %v999
          %v1001 = vpop.f32.mrf.mxu0
          %1002 = vmatprep.mubr.bf16.mxu0 0
          %1003 = vmatmul.mubr.bf16.gmra.mxu0 %v834
          %v1004 = vpop.f32.mrf.mxu0
          %v1005 = vadd.f32 %v864, %v1004
          %v1006 = vpop.f32.mrf.mxu0
          %v1007 = vpop.f32.mrf.mxu0
          %v1008 = vadd.f32 %v864, %v1007
          %v1009 = vpop.f32.mrf.mxu0
          %1010 = vmatprep.mubr.bf16.mxu0 0
          %1011 = vmatmul.mubr.bf16.gmra.mxu0 %v835
          %v1012 = vpop.f32.mrf.mxu0
          %v1013 = vadd.f32 %v864, %v1012
          %v1014 = vpop.f32.mrf.mxu0
          %v1015 = vpop.f32.mrf.mxu0
          %v1016 = vadd.f32 %v864, %v1015
          %v1017 = vpop.f32.mrf.mxu0
          %1018 = vmatprep.mubr.bf16.mxu0 0
          %1019 = vmatmul.mubr.bf16.gmra.mxu0 %v836
          %v1020 = vpop.f32.mrf.mxu0
          %v1021 = vadd.f32 %v864, %v1020
          %v1022 = vpop.f32.mrf.mxu0
          %v1023 = vpop.f32.mrf.mxu0
          %v1024 = vadd.f32 %v864, %v1023
          %v1025 = vpop.f32.mrf.mxu0
          %1026 = vmatprep.mubr.bf16.mxu0 0
          %1027 = vmatmul.mubr.bf16.gmra.mxu0 %v837
          %v1028 = vpop.f32.mrf.mxu0
          %v1029 = vadd.f32 %v864, %v1028
          %v1030 = vpop.f32.mrf.mxu0
          %v1031 = vpop.f32.mrf.mxu0
          %v1032 = vadd.f32 %v864, %v1031
          %v1033 = vpop.f32.mrf.mxu0
          %1034 = vmatprep.mubr.bf16.mxu0 0
          %1035 = vmatmul.mubr.bf16.gmra.mxu0 %v838
          %v1036 = vpop.f32.mrf.mxu0
          %v1037 = vadd.f32 %v864, %v1036
          %v1038 = vpop.f32.mrf.mxu0
          %v1039 = vpop.f32.mrf.mxu0
          %v1040 = vadd.f32 %v864, %v1039
          %v1041 = vpop.f32.mrf.mxu0
          %1042 = vmatprep.mubr.bf16.mxu0 0
          %1043 = vmatmul.mubr.bf16.gmra.mxu0 %v839
          %v1044 = vpop.f32.mrf.mxu0
          %v1045 = vadd.f32 %v864, %v1044
          %v1046 = vpop.f32.mrf.mxu0
          %v1047 = vpop.f32.mrf.mxu0
          %v1048 = vadd.f32 %v864, %v1047
          %v1049 = vpop.f32.mrf.mxu0
          %1050 = vmatprep.mubr.bf16.mxu0 0
          %1051 = vmatmul.mubr.bf16.gmra.mxu0 %v840
          %v1052 = vpop.f32.mrf.mxu0
          %v1053 = vadd.f32 %v864, %v1052
          %v1054 = vpop.f32.mrf.mxu0
          %v1055 = vpop.f32.mrf.mxu0
          %v1056 = vadd.f32 %v864, %v1055
          %v1057 = vpop.f32.mrf.mxu0
          %1058 = vmatprep.mubr.bf16.mxu0 0
          %1059 = vmatmul.mubr.bf16.gmra.mxu0 %v841
          %v1060 = vpop.f32.mrf.mxu0
          %v1061 = vadd.f32 %v864, %v1060
          %v1062 = vpop.f32.mrf.mxu0
          %v1063 = vpop.f32.mrf.mxu0
          %v1064 = vadd.f32 %v864, %v1063
          %v1065 = vpop.f32.mrf.mxu0
          %1066 = vmatprep.mubr.bf16.mxu0 0
          %1067 = vmatmul.mubr.bf16.gmra.mxu0 %v842
          %v1068 = vpop.f32.mrf.mxu0
          %v1069 = vadd.f32 %v864, %v1068
          %v1070 = vpop.f32.mrf.mxu0
          %v1071 = vpop.f32.mrf.mxu0
          %v1072 = vadd.f32 %v864, %v1071
          %v1073 = vpop.f32.mrf.mxu0
          %1074 = vdwg.mxu0
          %v1075 = vtanh.pop %v949
          %v1076 = vtanh.pop %v952
          %v1077 = vtanh.pop %v957
          %v1078 = vtanh.pop %v960
          %v1079 = vtanh.pop %v965
          %v1080 = vtanh.pop %v968
          %v1081 = vtanh.pop %v973
          %v1082 = vtanh.pop %v976
          %v1083 = vtanh.pop %v981
          %v1084 = vtanh.pop %v984
          %v1085 = vtanh.pop %v989
          %v1086 = vtanh.pop %v992
          %v1087 = vtanh.pop %v997
          %v1088 = vtanh.pop %v1000
          %v1089 = vtanh.pop %v1005
          %v1090 = vtanh.pop %v1008
          %v1091 = vtanh.pop %v1013
          %v1092 = vtanh.pop %v1016
          %v1093 = vtanh.pop %v1021
          %v1094 = vtanh.pop %v1024
          %v1095 = vtanh.pop %v1029
          %v1096 = vtanh.pop %v1032
          %v1097 = vtanh.pop %v1037
          %v1098 = vtanh.pop %v1040
          %v1099 = vtanh.pop %v1045
          %v1100 = vtanh.pop %v1048
          %v1101 = vtanh.pop %v1053
          %v1102 = vtanh.pop %v1056
          %v1103 = vtanh.pop %v1061
          %v1104 = vtanh.pop %v1064
          %v1105 = vtanh.pop %v1069
          %v1106 = vtanh.pop %v1072
          %v1107 = vpack.c.bf16 %v1076, %v1075
          %v1108 = vpack.c.bf16 %v1078, %v1077
          %v1109 = vpack.c.bf16 %v1080, %v1079
          %v1110 = vpack.c.bf16 %v1082, %v1081
          %v1111 = vpack.c.bf16 %v1084, %v1083
          %v1112 = vpack.c.bf16 %v1086, %v1085
          %v1113 = vpack.c.bf16 %v1088, %v1087
          %v1114 = vpack.c.bf16 %v1090, %v1089
          %v1115 = vpack.c.bf16 %v1092, %v1091
          %v1116 = vpack.c.bf16 %v1094, %v1093
          %v1117 = vpack.c.bf16 %v1096, %v1095
          %v1118 = vpack.c.bf16 %v1098, %v1097
          %v1119 = vpack.c.bf16 %v1100, %v1099
          %v1120 = vpack.c.bf16 %v1102, %v1101
          %v1121 = vpack.c.bf16 %v1104, %v1103
          %v1122 = vpack.c.bf16 %v1106, %v1105
          %s1123 = scalar_lea.vmem [#allocation9], 64
          %v1124 = vld [vmem:[%s1123] sm:$0xf]
          %v1125 = vld [vmem:[%s1123 + $0x4] sm:$0xf]
          %v1126 = vld [vmem:[%s1123 + $0x8] sm:$0xf]
          %v1127 = vld [vmem:[%s1123 + $0xc] sm:$0xf]
          %v1128 = vld [vmem:[%s1123 + $0x10] sm:$0xf]
          %v1129 = vld [vmem:[%s1123 + $0x14] sm:$0xf]
          %v1130 = vld [vmem:[%s1123 + $0x18] sm:$0xf]
          %v1131 = vld [vmem:[%s1123 + $0x1c] sm:$0xf]
          %v1132 = vld [vmem:[%s1123 + $0x20] sm:$0xf]
          %v1133 = vld [vmem:[%s1123 + $0x24] sm:$0xf]
          %v1134 = vld [vmem:[%s1123 + $0x28] sm:$0xf]
          %v1135 = vld [vmem:[%s1123 + $0x2c] sm:$0xf]
          %v1136 = vld [vmem:[%s1123 + $0x30] sm:$0xf]
          %v1137 = vld [vmem:[%s1123 + $0x34] sm:$0xf]
          %v1138 = vld [vmem:[%s1123 + $0x38] sm:$0xf]
          %v1139 = vld [vmem:[%s1123 + $0x3c] sm:$0xf]
          %s1140 = scalar_lea.vmem [#allocation11], 1
          %v1141 = vld [vmem:[%s1140] sm:$0x1]
          %v1143 = vlaneseq
          %v1144 = vshrl.u32 %v1143, 7
          %v1145 = vsub.s32 0, %v1144
          %v1146 = vrot.slane %v1141, %v1145
          %v1164 = vunpack.c.l.b16 %v1124
          %v1165 = vunpack.c.l.b16 %v1125
          %v1166 = vunpack.c.l.b16 %v1126
          %v1167 = vunpack.c.l.b16 %v1127
          %v1168 = vunpack.c.l.b16 %v1128
          %v1169 = vunpack.c.l.b16 %v1129
          %v1170 = vunpack.c.l.b16 %v1130
          %v1171 = vunpack.c.l.b16 %v1131
          %v1172 = vunpack.c.l.b16 %v1132
          %v1173 = vunpack.c.l.b16 %v1133
          %v1174 = vunpack.c.l.b16 %v1134
          %v1175 = vunpack.c.l.b16 %v1135
          %v1176 = vunpack.c.l.b16 %v1136
          %v1177 = vunpack.c.l.b16 %v1137
          %v1178 = vunpack.c.l.b16 %v1138
          %v1179 = vunpack.c.l.b16 %v1139
          %v1180 = vpack.c.b16 %v1165, %v1164
          %v1181 = vpack.c.b16 %v1167, %v1166
          %v1182 = vpack.c.b16 %v1169, %v1168
          %v1183 = vpack.c.b16 %v1171, %v1170
          %v1184 = vpack.c.b16 %v1173, %v1172
          %v1185 = vpack.c.b16 %v1175, %v1174
          %v1186 = vpack.c.b16 %v1177, %v1176
          %v1187 = vpack.c.b16 %v1179, %v1178
          %1196 = vmatprep.subr.bf16.mxu0 0
          %1197 = vmatpush1.bf16.msra.mxu0 %v1187
          %1198 = vmatprep.subr.bf16.mxu0 0
          %1199 = vmatpush1.bf16.msra.mxu0 %v1186
          %1200 = vmatprep.subr.bf16.mxu0 0
          %1201 = vmatpush1.bf16.msra.mxu0 %v1185
          %1202 = vmatprep.subr.bf16.mxu0 0
          %1203 = vmatpush1.bf16.msra.mxu0 %v1184
          %1204 = vmatprep.subr.bf16.mxu0 0
          %1205 = vmatpush1.bf16.msra.mxu0 %v1183
          %1206 = vmatprep.subr.bf16.mxu0 0
          %1207 = vmatpush1.bf16.msra.mxu0 %v1182
          %1208 = vmatprep.subr.bf16.mxu0 0
          %1209 = vmatpush1.bf16.msra.mxu0 %v1181
          %1210 = vmatprep.subr.bf16.mxu0 0
          %1211 = vmatpush1.bf16.msra.mxu0 %v1180
          %1212 = vmatprep.subr.bf16.mxu0 0
          %1213 = vmatpush2.bf16.msra.mxu0 0
          %1214 = vmatprep.subr.bf16.mxu0 0
          %1215 = vmatpush2.bf16.msra.mxu0 0
          %1216 = vmatprep.subr.bf16.mxu0 0
          %1217 = vmatpush2.bf16.msra.mxu0 0
          %1218 = vmatprep.subr.bf16.mxu0 0
          %1219 = vmatpush2.bf16.msra.mxu0 0
          %1220 = vmatprep.subr.bf16.mxu0 0
          %1221 = vmatpush2.bf16.msra.mxu0 0
          %1222 = vmatprep.subr.bf16.mxu0 0
          %1223 = vmatpush2.bf16.msra.mxu0 0
          %1224 = vmatprep.subr.bf16.mxu0 0
          %1225 = vmatpush2.bf16.msra.mxu0 0
          %1226 = vmatprep.subr.bf16.mxu0 0
          %1227 = vmatpush2.bf16.msra.mxu0 0
          %1228 = vmatprep.mubr.bf16.mxu0 0
          %1229 = vmatmul.mubr.bf16.gmra.mxu0 %v1107
          %v1230 = vpop.f32.mrf.mxu0
          %v1231 = vadd.f32 %v1146, %v1230
          %v1232 = vpop.f32.mrf.mxu0
          %v1233 = vpop.f32.mrf.mxu0
          %v1234 = vadd.f32 %v1146, %v1233
          %v1235 = vpop.f32.mrf.mxu0
          %1236 = vmatprep.mubr.bf16.mxu0 0
          %1237 = vmatmul.mubr.bf16.gmra.mxu0 %v1108
          %v1238 = vpop.f32.mrf.mxu0
          %v1239 = vadd.f32 %v1146, %v1238
          %v1240 = vpop.f32.mrf.mxu0
          %v1241 = vpop.f32.mrf.mxu0
          %v1242 = vadd.f32 %v1146, %v1241
          %v1243 = vpop.f32.mrf.mxu0
          %1244 = vmatprep.mubr.bf16.mxu0 0
          %1245 = vmatmul.mubr.bf16.gmra.mxu0 %v1109
          %v1246 = vpop.f32.mrf.mxu0
          %v1247 = vadd.f32 %v1146, %v1246
          %v1248 = vpop.f32.mrf.mxu0
          %v1249 = vpop.f32.mrf.mxu0
          %v1250 = vadd.f32 %v1146, %v1249
          %v1251 = vpop.f32.mrf.mxu0
          %1252 = vmatprep.mubr.bf16.mxu0 0
          %1253 = vmatmul.mubr.bf16.gmra.mxu0 %v1110
          %v1254 = vpop.f32.mrf.mxu0
          %v1255 = vadd.f32 %v1146, %v1254
          %v1256 = vpop.f32.mrf.mxu0
          %v1257 = vpop.f32.mrf.mxu0
          %v1258 = vadd.f32 %v1146, %v1257
          %v1259 = vpop.f32.mrf.mxu0
          %1260 = vmatprep.mubr.bf16.mxu0 0
          %1261 = vmatmul.mubr.bf16.gmra.mxu0 %v1111
          %v1262 = vpop.f32.mrf.mxu0
          %v1263 = vadd.f32 %v1146, %v1262
          %v1264 = vpop.f32.mrf.mxu0
          %v1265 = vpop.f32.mrf.mxu0
          %v1266 = vadd.f32 %v1146, %v1265
          %v1267 = vpop.f32.mrf.mxu0
          %1268 = vmatprep.mubr.bf16.mxu0 0
          %1269 = vmatmul.mubr.bf16.gmra.mxu0 %v1112
          %v1270 = vpop.f32.mrf.mxu0
          %v1271 = vadd.f32 %v1146, %v1270
          %v1272 = vpop.f32.mrf.mxu0
          %v1273 = vpop.f32.mrf.mxu0
          %v1274 = vadd.f32 %v1146, %v1273
          %v1275 = vpop.f32.mrf.mxu0
          %1276 = vmatprep.mubr.bf16.mxu0 0
          %1277 = vmatmul.mubr.bf16.gmra.mxu0 %v1113
          %v1278 = vpop.f32.mrf.mxu0
          %v1279 = vadd.f32 %v1146, %v1278
          %v1280 = vpop.f32.mrf.mxu0
          %v1281 = vpop.f32.mrf.mxu0
          %v1282 = vadd.f32 %v1146, %v1281
          %v1283 = vpop.f32.mrf.mxu0
          %1284 = vmatprep.mubr.bf16.mxu0 0
          %1285 = vmatmul.mubr.bf16.gmra.mxu0 %v1114
          %v1286 = vpop.f32.mrf.mxu0
          %v1287 = vadd.f32 %v1146, %v1286
          %v1288 = vpop.f32.mrf.mxu0
          %v1289 = vpop.f32.mrf.mxu0
          %v1290 = vadd.f32 %v1146, %v1289
          %v1291 = vpop.f32.mrf.mxu0
          %1292 = vmatprep.mubr.bf16.mxu0 0
          %1293 = vmatmul.mubr.bf16.gmra.mxu0 %v1115
          %v1294 = vpop.f32.mrf.mxu0
          %v1295 = vadd.f32 %v1146, %v1294
          %v1296 = vpop.f32.mrf.mxu0
          %v1297 = vpop.f32.mrf.mxu0
          %v1298 = vadd.f32 %v1146, %v1297
          %v1299 = vpop.f32.mrf.mxu0
          %1300 = vmatprep.mubr.bf16.mxu0 0
          %1301 = vmatmul.mubr.bf16.gmra.mxu0 %v1116
          %v1302 = vpop.f32.mrf.mxu0
          %v1303 = vadd.f32 %v1146, %v1302
          %v1304 = vpop.f32.mrf.mxu0
          %v1305 = vpop.f32.mrf.mxu0
          %v1306 = vadd.f32 %v1146, %v1305
          %v1307 = vpop.f32.mrf.mxu0
          %1308 = vmatprep.mubr.bf16.mxu0 0
          %1309 = vmatmul.mubr.bf16.gmra.mxu0 %v1117
          %v1310 = vpop.f32.mrf.mxu0
          %v1311 = vadd.f32 %v1146, %v1310
          %v1312 = vpop.f32.mrf.mxu0
          %v1313 = vpop.f32.mrf.mxu0
          %v1314 = vadd.f32 %v1146, %v1313
          %v1315 = vpop.f32.mrf.mxu0
          %1316 = vmatprep.mubr.bf16.mxu0 0
          %1317 = vmatmul.mubr.bf16.gmra.mxu0 %v1118
          %v1318 = vpop.f32.mrf.mxu0
          %v1319 = vadd.f32 %v1146, %v1318
          %v1320 = vpop.f32.mrf.mxu0
          %v1321 = vpop.f32.mrf.mxu0
          %v1322 = vadd.f32 %v1146, %v1321
          %v1323 = vpop.f32.mrf.mxu0
          %1324 = vmatprep.mubr.bf16.mxu0 0
          %1325 = vmatmul.mubr.bf16.gmra.mxu0 %v1119
          %v1326 = vpop.f32.mrf.mxu0
          %v1327 = vadd.f32 %v1146, %v1326
          %v1328 = vpop.f32.mrf.mxu0
          %v1329 = vpop.f32.mrf.mxu0
          %v1330 = vadd.f32 %v1146, %v1329
          %v1331 = vpop.f32.mrf.mxu0
          %1332 = vmatprep.mubr.bf16.mxu0 0
          %1333 = vmatmul.mubr.bf16.gmra.mxu0 %v1120
          %v1334 = vpop.f32.mrf.mxu0
          %v1335 = vadd.f32 %v1146, %v1334
          %v1336 = vpop.f32.mrf.mxu0
          %v1337 = vpop.f32.mrf.mxu0
          %v1338 = vadd.f32 %v1146, %v1337
          %v1339 = vpop.f32.mrf.mxu0
          %1340 = vmatprep.mubr.bf16.mxu0 0
          %1341 = vmatmul.mubr.bf16.gmra.mxu0 %v1121
          %v1342 = vpop.f32.mrf.mxu0
          %v1343 = vadd.f32 %v1146, %v1342
          %v1344 = vpop.f32.mrf.mxu0
          %v1345 = vpop.f32.mrf.mxu0
          %v1346 = vadd.f32 %v1146, %v1345
          %v1347 = vpop.f32.mrf.mxu0
          %1348 = vmatprep.mubr.bf16.mxu0 0
          %1349 = vmatmul.mubr.bf16.gmra.mxu0 %v1122
          %v1350 = vpop.f32.mrf.mxu0
          %v1351 = vadd.f32 %v1146, %v1350
          %v1352 = vpop.f32.mrf.mxu0
          %v1353 = vpop.f32.mrf.mxu0
          %v1354 = vadd.f32 %v1146, %v1353
          %v1355 = vpop.f32.mrf.mxu0
          %1356 = vdwg.mxu0
          %v1357 = vtanh.pop %v1231
          %v1358 = vtanh.pop %v1234
          %v1359 = vtanh.pop %v1239
          %v1360 = vtanh.pop %v1242
          %v1361 = vtanh.pop %v1247
          %v1362 = vtanh.pop %v1250
          %v1363 = vtanh.pop %v1255
          %v1364 = vtanh.pop %v1258
          %v1365 = vtanh.pop %v1263
          %v1366 = vtanh.pop %v1266
          %v1367 = vtanh.pop %v1271
          %v1368 = vtanh.pop %v1274
          %v1369 = vtanh.pop %v1279
          %v1370 = vtanh.pop %v1282
          %v1371 = vtanh.pop %v1287
          %v1372 = vtanh.pop %v1290
          %v1373 = vtanh.pop %v1295
          %v1374 = vtanh.pop %v1298
          %v1375 = vtanh.pop %v1303
          %v1376 = vtanh.pop %v1306
          %v1377 = vtanh.pop %v1311
          %v1378 = vtanh.pop %v1314
          %v1379 = vtanh.pop %v1319
          %v1380 = vtanh.pop %v1322
          %v1381 = vtanh.pop %v1327
          %v1382 = vtanh.pop %v1330
          %v1383 = vtanh.pop %v1335
          %v1384 = vtanh.pop %v1338
          %v1385 = vtanh.pop %v1343
          %v1386 = vtanh.pop %v1346
          %v1387 = vtanh.pop %v1351
          %v1388 = vtanh.pop %v1354
          %v1389 = vpack.c.bf16 %v1358, %v1357
          %v1390 = vpack.c.bf16 %v1360, %v1359
          %v1391 = vpack.c.bf16 %v1362, %v1361
          %v1392 = vpack.c.bf16 %v1364, %v1363
          %v1393 = vpack.c.bf16 %v1366, %v1365
          %v1394 = vpack.c.bf16 %v1368, %v1367
          %v1395 = vpack.c.bf16 %v1370, %v1369
          %v1396 = vpack.c.bf16 %v1372, %v1371
          %v1397 = vpack.c.bf16 %v1374, %v1373
          %v1398 = vpack.c.bf16 %v1376, %v1375
          %v1399 = vpack.c.bf16 %v1378, %v1377
          %v1400 = vpack.c.bf16 %v1380, %v1379
          %v1401 = vpack.c.bf16 %v1382, %v1381
          %v1402 = vpack.c.bf16 %v1384, %v1383
          %v1403 = vpack.c.bf16 %v1386, %v1385
          %v1404 = vpack.c.bf16 %v1388, %v1387
          %v1421 = vunpack.c.l.b16 %v1389
          %v1422 = vunpack.c.h.b16 %v1389
          %v1423 = vunpack.c.l.b16 %v1390
          %v1424 = vunpack.c.h.b16 %v1390
          %v1425 = vunpack.c.l.b16 %v1391
          %v1426 = vunpack.c.h.b16 %v1391
          %v1427 = vunpack.c.l.b16 %v1392
          %v1428 = vunpack.c.h.b16 %v1392
          %v1429 = vunpack.c.l.b16 %v1393
          %v1430 = vunpack.c.h.b16 %v1393
          %v1431 = vunpack.c.l.b16 %v1394
          %v1432 = vunpack.c.h.b16 %v1394
          %v1433 = vunpack.c.l.b16 %v1395
          %v1434 = vunpack.c.h.b16 %v1395
          %v1435 = vunpack.c.l.b16 %v1396
          %v1436 = vunpack.c.h.b16 %v1396
          %v1437 = vunpack.c.l.b16 %v1397
          %v1438 = vunpack.c.h.b16 %v1397
          %v1439 = vunpack.c.l.b16 %v1398
          %v1440 = vunpack.c.h.b16 %v1398
          %v1441 = vunpack.c.l.b16 %v1399
          %v1442 = vunpack.c.h.b16 %v1399
          %v1443 = vunpack.c.l.b16 %v1400
          %v1444 = vunpack.c.h.b16 %v1400
          %v1445 = vunpack.c.l.b16 %v1401
          %v1446 = vunpack.c.h.b16 %v1401
          %v1447 = vunpack.c.l.b16 %v1402
          %v1448 = vunpack.c.h.b16 %v1402
          %v1449 = vunpack.c.l.b16 %v1403
          %v1450 = vunpack.c.h.b16 %v1403
          %v1451 = vunpack.c.l.b16 %v1404
          %v1452 = vunpack.c.h.b16 %v1404
          %v1453 = vpack.c.b16 %v1421, %v1421
          %v1454 = vpack.c.b16 %v1422, %v1422
          %v1455 = vpack.c.b16 %v1423, %v1423
          %v1456 = vpack.c.b16 %v1424, %v1424
          %v1457 = vpack.c.b16 %v1425, %v1425
          %v1458 = vpack.c.b16 %v1426, %v1426
          %v1459 = vpack.c.b16 %v1427, %v1427
          %v1460 = vpack.c.b16 %v1428, %v1428
          %v1461 = vpack.c.b16 %v1429, %v1429
          %v1462 = vpack.c.b16 %v1430, %v1430
          %v1463 = vpack.c.b16 %v1431, %v1431
          %v1464 = vpack.c.b16 %v1432, %v1432
          %v1465 = vpack.c.b16 %v1433, %v1433
          %v1466 = vpack.c.b16 %v1434, %v1434
          %v1467 = vpack.c.b16 %v1435, %v1435
          %v1468 = vpack.c.b16 %v1436, %v1436
          %v1469 = vpack.c.b16 %v1437, %v1437
          %v1470 = vpack.c.b16 %v1438, %v1438
          %v1471 = vpack.c.b16 %v1439, %v1439
          %v1472 = vpack.c.b16 %v1440, %v1440
          %v1473 = vpack.c.b16 %v1441, %v1441
          %v1474 = vpack.c.b16 %v1442, %v1442
          %v1475 = vpack.c.b16 %v1443, %v1443
          %v1476 = vpack.c.b16 %v1444, %v1444
          %v1477 = vpack.c.b16 %v1445, %v1445
          %v1478 = vpack.c.b16 %v1446, %v1446
          %v1479 = vpack.c.b16 %v1447, %v1447
          %v1480 = vpack.c.b16 %v1448, %v1448
          %v1481 = vpack.c.b16 %v1449, %v1449
          %v1482 = vpack.c.b16 %v1450, %v1450
          %v1483 = vpack.c.b16 %v1451, %v1451
          %v1484 = vpack.c.b16 %v1452, %v1452
          %1517 = vst [vmem:[#allocation2] sm:$0xf] %v1453
          %1518 = vst [vmem:[#allocation2 + $0x4] sm:$0xf] %v1454
          %1519 = vst [vmem:[#allocation2 + $0x8] sm:$0xf] %v1455
          %1520 = vst [vmem:[#allocation2 + $0xc] sm:$0xf] %v1456
          %1521 = vst [vmem:[#allocation2 + $0x10] sm:$0xf] %v1457
          %1522 = vst [vmem:[#allocation2 + $0x14] sm:$0xf] %v1458
          %1523 = vst [vmem:[#allocation2 + $0x18] sm:$0xf] %v1459
          %1524 = vst [vmem:[#allocation2 + $0x1c] sm:$0xf] %v1460
          %1525 = vst [vmem:[#allocation2 + $0x20] sm:$0xf] %v1461
          %1526 = vst [vmem:[#allocation2 + $0x24] sm:$0xf] %v1462
          %1527 = vst [vmem:[#allocation2 + $0x28] sm:$0xf] %v1463
          %1528 = vst [vmem:[#allocation2 + $0x2c] sm:$0xf] %v1464
          %1529 = vst [vmem:[#allocation2 + $0x30] sm:$0xf] %v1465
          %1530 = vst [vmem:[#allocation2 + $0x34] sm:$0xf] %v1466
          %1531 = vst [vmem:[#allocation2 + $0x38] sm:$0xf] %v1467
          %1532 = vst [vmem:[#allocation2 + $0x3c] sm:$0xf] %v1468
          %1533 = vst [vmem:[#allocation2 + $0x40] sm:$0xf] %v1469
          %1534 = vst [vmem:[#allocation2 + $0x44] sm:$0xf] %v1470
          %1535 = vst [vmem:[#allocation2 + $0x48] sm:$0xf] %v1471
          %1536 = vst [vmem:[#allocation2 + $0x4c] sm:$0xf] %v1472
          %1537 = vst [vmem:[#allocation2 + $0x50] sm:$0xf] %v1473
          %1538 = vst [vmem:[#allocation2 + $0x54] sm:$0xf] %v1474
          %1539 = vst [vmem:[#allocation2 + $0x58] sm:$0xf] %v1475
          %1540 = vst [vmem:[#allocation2 + $0x5c] sm:$0xf] %v1476
          %1541 = vst [vmem:[#allocation2 + $0x60] sm:$0xf] %v1477
          %1542 = vst [vmem:[#allocation2 + $0x64] sm:$0xf] %v1478
          %1543 = vst [vmem:[#allocation2 + $0x68] sm:$0xf] %v1479
          %1544 = vst [vmem:[#allocation2 + $0x6c] sm:$0xf] %v1480
          %1545 = vst [vmem:[#allocation2 + $0x70] sm:$0xf] %v1481
          %1546 = vst [vmem:[#allocation2 + $0x74] sm:$0xf] %v1482
          %1547 = vst [vmem:[#allocation2 + $0x78] sm:$0xf] %v1483
          %1548 = vst [vmem:[#allocation2 + $0x7c] sm:$0xf] %v1484
        $region80: #{tpu_custom_call.1} parent=47 // pred_fallthru
          _
        %v1549 = vld [vmem:[#allocation2] sm:$0xf]
        %v1550 = vld [vmem:[#allocation2 + $0x4] sm:$0xf]
        %v1551 = vld [vmem:[#allocation2 + $0x8] sm:$0xf]
        %v1552 = vld [vmem:[#allocation2 + $0xc] sm:$0xf]
        %v1553 = vld [vmem:[#allocation2 + $0x10] sm:$0xf]
        %v1554 = vld [vmem:[#allocation2 + $0x14] sm:$0xf]
        %v1555 = vld [vmem:[#allocation2 + $0x18] sm:$0xf]
        %v1556 = vld [vmem:[#allocation2 + $0x1c] sm:$0xf]
        %v1557 = vld [vmem:[#allocation2 + $0x20] sm:$0xf]
        %v1558 = vld [vmem:[#allocation2 + $0x24] sm:$0xf]
        %v1559 = vld [vmem:[#allocation2 + $0x28] sm:$0xf]
        %v1560 = vld [vmem:[#allocation2 + $0x2c] sm:$0xf]
        %v1561 = vld [vmem:[#allocation2 + $0x30] sm:$0xf]
        %v1562 = vld [vmem:[#allocation2 + $0x34] sm:$0xf]
        %v1563 = vld [vmem:[#allocation2 + $0x38] sm:$0xf]
        %v1564 = vld [vmem:[#allocation2 + $0x3c] sm:$0xf]
        %v1565 = vld [vmem:[#allocation2 + $0x40] sm:$0xf]
        %v1566 = vld [vmem:[#allocation2 + $0x44] sm:$0xf]
        %v1567 = vld [vmem:[#allocation2 + $0x48] sm:$0xf]
        %v1568 = vld [vmem:[#allocation2 + $0x4c] sm:$0xf]
        %v1569 = vld [vmem:[#allocation2 + $0x50] sm:$0xf]
        %v1570 = vld [vmem:[#allocation2 + $0x54] sm:$0xf]
        %v1571 = vld [vmem:[#allocation2 + $0x58] sm:$0xf]
        %v1572 = vld [vmem:[#allocation2 + $0x5c] sm:$0xf]
        %v1573 = vld [vmem:[#allocation2 + $0x60] sm:$0xf]
        %v1574 = vld [vmem:[#allocation2 + $0x64] sm:$0xf]
        %v1575 = vld [vmem:[#allocation2 + $0x68] sm:$0xf]
        %v1576 = vld [vmem:[#allocation2 + $0x6c] sm:$0xf]
        %v1577 = vld [vmem:[#allocation2 + $0x70] sm:$0xf]
        %v1578 = vld [vmem:[#allocation2 + $0x74] sm:$0xf]
        %v1579 = vld [vmem:[#allocation2 + $0x78] sm:$0xf]
        %v1580 = vld [vmem:[#allocation2 + $0x7c] sm:$0xf]
        %v1581 = vld [vmem:[%s380] sm:$0xff]
        %v1582 = vld [vmem:[%s380 + $0x8] sm:$0xff]
        %v1583 = vld [vmem:[%s380 + $0x10] sm:$0xff]
        %v1584 = vld [vmem:[%s380 + $0x18] sm:$0xff]
        %v1585 = vld [vmem:[%s380 + $0x20] sm:$0xff]
        %v1586 = vld [vmem:[%s380 + $0x28] sm:$0xff]
        %v1587 = vld [vmem:[%s380 + $0x30] sm:$0xff]
        %v1588 = vld [vmem:[%s380 + $0x38] sm:$0xff]
        %v1589 = vld [vmem:[%s380 + $0x40] sm:$0xff]
        %v1590 = vld [vmem:[%s380 + $0x48] sm:$0xff]
        %v1591 = vld [vmem:[%s380 + $0x50] sm:$0xff]
        %v1592 = vld [vmem:[%s380 + $0x58] sm:$0xff]
        %v1593 = vld [vmem:[%s380 + $0x60] sm:$0xff]
        %v1594 = vld [vmem:[%s380 + $0x68] sm:$0xff]
        %v1595 = vld [vmem:[%s380 + $0x70] sm:$0xff]
        %v1596 = vld [vmem:[%s380 + $0x78] sm:$0xff]
        %v1597 = vld [vmem:[%s380 + $0x80] sm:$0xff]
        %v1598 = vld [vmem:[%s380 + $0x88] sm:$0xff]
        %v1599 = vld [vmem:[%s380 + $0x90] sm:$0xff]
        %v1600 = vld [vmem:[%s380 + $0x98] sm:$0xff]
        %v1601 = vld [vmem:[%s380 + $0xa0] sm:$0xff]
        %v1602 = vld [vmem:[%s380 + $0xa8] sm:$0xff]
        %v1603 = vld [vmem:[%s380 + $0xb0] sm:$0xff]
        %v1604 = vld [vmem:[%s380 + $0xb8] sm:$0xff]
        %v1605 = vld [vmem:[%s380 + $0xc0] sm:$0xff]
        %v1606 = vld [vmem:[%s380 + $0xc8] sm:$0xff]
        %v1607 = vld [vmem:[%s380 + $0xd0] sm:$0xff]
        %v1608 = vld [vmem:[%s380 + $0xd8] sm:$0xff]
        %v1609 = vld [vmem:[%s380 + $0xe0] sm:$0xff]
        %v1610 = vld [vmem:[%s380 + $0xe8] sm:$0xff]
        %v1611 = vld [vmem:[%s380 + $0xf0] sm:$0xff]
        %v1612 = vld [vmem:[%s380 + $0xf8] sm:$0xff]
        %v1613 = vld [vmem:[%s389] sm:$0xf]
        %v1615 = vlaneseq
        %v1616 = vshrl.u32 %v1615, 7
        %v1617 = vsub.s32 0, %v1616
        %v1618 = vrot.slane %v1613, %v1617
        %v1619 = vlaneseq
        %v1620 = vshrl.u32 %v1619, 7
        %v1621 = vsub.s32 1, %v1620
        %v1622 = vrot.slane %v1613, %v1621
        %v1623 = vlaneseq
        %v1624 = vshrl.u32 %v1623, 7
        %v1625 = vsub.s32 2, %v1624
        %v1626 = vrot.slane %v1613, %v1625
        %v1627 = vlaneseq
        %v1628 = vshrl.u32 %v1627, 7
        %v1629 = vsub.s32 3, %v1628
        %v1630 = vrot.slane %v1613, %v1629
        %v1667 = vunpack.c.l.b16 %v1549
        %v1668 = vunpack.c.l.b16 %v1550
        %v1669 = vunpack.c.l.b16 %v1551
        %v1670 = vunpack.c.l.b16 %v1552
        %v1671 = vunpack.c.l.b16 %v1553
        %v1672 = vunpack.c.l.b16 %v1554
        %v1673 = vunpack.c.l.b16 %v1555
        %v1674 = vunpack.c.l.b16 %v1556
        %v1675 = vunpack.c.l.b16 %v1557
        %v1676 = vunpack.c.l.b16 %v1558
        %v1677 = vunpack.c.l.b16 %v1559
        %v1678 = vunpack.c.l.b16 %v1560
        %v1679 = vunpack.c.l.b16 %v1561
        %v1680 = vunpack.c.l.b16 %v1562
        %v1681 = vunpack.c.l.b16 %v1563
        %v1682 = vunpack.c.l.b16 %v1564
        %v1683 = vunpack.c.l.b16 %v1565
        %v1684 = vunpack.c.l.b16 %v1566
        %v1685 = vunpack.c.l.b16 %v1567
        %v1686 = vunpack.c.l.b16 %v1568
        %v1687 = vunpack.c.l.b16 %v1569
        %v1688 = vunpack.c.l.b16 %v1570
        %v1689 = vunpack.c.l.b16 %v1571
        %v1690 = vunpack.c.l.b16 %v1572
        %v1691 = vunpack.c.l.b16 %v1573
        %v1692 = vunpack.c.l.b16 %v1574
        %v1693 = vunpack.c.l.b16 %v1575
        %v1694 = vunpack.c.l.b16 %v1576
        %v1695 = vunpack.c.l.b16 %v1577
        %v1696 = vunpack.c.l.b16 %v1578
        %v1697 = vunpack.c.l.b16 %v1579
        %v1698 = vunpack.c.l.b16 %v1580
        %v1699 = vpack.c.b16 %v1668, %v1667
        %v1700 = vpack.c.b16 %v1670, %v1669
        %v1701 = vpack.c.b16 %v1672, %v1671
        %v1702 = vpack.c.b16 %v1674, %v1673
        %v1703 = vpack.c.b16 %v1676, %v1675
        %v1704 = vpack.c.b16 %v1678, %v1677
        %v1705 = vpack.c.b16 %v1680, %v1679
        %v1706 = vpack.c.b16 %v1682, %v1681
        %v1707 = vpack.c.b16 %v1684, %v1683
        %v1708 = vpack.c.b16 %v1686, %v1685
        %v1709 = vpack.c.b16 %v1688, %v1687
        %v1710 = vpack.c.b16 %v1690, %v1689
        %v1711 = vpack.c.b16 %v1692, %v1691
        %v1712 = vpack.c.b16 %v1694, %v1693
        %v1713 = vpack.c.b16 %v1696, %v1695
        %v1714 = vpack.c.b16 %v1698, %v1697
        %v1763 = vunpack.c.l.b16 %v1581
        %v1764 = vunpack.c.h.b16 %v1581
        %v1765 = vunpack.c.l.b16 %v1582
        %v1766 = vunpack.c.h.b16 %v1582
        %v1767 = vunpack.c.l.b16 %v1583
        %v1768 = vunpack.c.h.b16 %v1583
        %v1769 = vunpack.c.l.b16 %v1584
        %v1770 = vunpack.c.h.b16 %v1584
        %v1771 = vunpack.c.l.b16 %v1585
        %v1772 = vunpack.c.h.b16 %v1585
        %v1773 = vunpack.c.l.b16 %v1586
        %v1774 = vunpack.c.h.b16 %v1586
        %v1775 = vunpack.c.l.b16 %v1587
        %v1776 = vunpack.c.h.b16 %v1587
        %v1777 = vunpack.c.l.b16 %v1588
        %v1778 = vunpack.c.h.b16 %v1588
        %v1779 = vunpack.c.l.b16 %v1589
        %v1780 = vunpack.c.h.b16 %v1589
        %v1781 = vunpack.c.l.b16 %v1590
        %v1782 = vunpack.c.h.b16 %v1590
        %v1783 = vunpack.c.l.b16 %v1591
        %v1784 = vunpack.c.h.b16 %v1591
        %v1785 = vunpack.c.l.b16 %v1592
        %v1786 = vunpack.c.h.b16 %v1592
        %v1787 = vunpack.c.l.b16 %v1593
        %v1788 = vunpack.c.h.b16 %v1593
        %v1789 = vunpack.c.l.b16 %v1594
        %v1790 = vunpack.c.h.b16 %v1594
        %v1791 = vunpack.c.l.b16 %v1595
        %v1792 = vunpack.c.h.b16 %v1595
        %v1793 = vunpack.c.l.b16 %v1596
        %v1794 = vunpack.c.h.b16 %v1596
        %v1795 = vunpack.c.l.b16 %v1597
        %v1796 = vunpack.c.h.b16 %v1597
        %v1797 = vunpack.c.l.b16 %v1598
        %v1798 = vunpack.c.h.b16 %v1598
        %v1799 = vunpack.c.l.b16 %v1599
        %v1800 = vunpack.c.h.b16 %v1599
        %v1801 = vunpack.c.l.b16 %v1600
        %v1802 = vunpack.c.h.b16 %v1600
        %v1803 = vunpack.c.l.b16 %v1601
        %v1804 = vunpack.c.h.b16 %v1601
        %v1805 = vunpack.c.l.b16 %v1602
        %v1806 = vunpack.c.h.b16 %v1602
        %v1807 = vunpack.c.l.b16 %v1603
        %v1808 = vunpack.c.h.b16 %v1603
        %v1809 = vunpack.c.l.b16 %v1604
        %v1810 = vunpack.c.h.b16 %v1604
        %v1811 = vunpack.c.l.b16 %v1605
        %v1812 = vunpack.c.h.b16 %v1605
        %v1813 = vunpack.c.l.b16 %v1606
        %v1814 = vunpack.c.h.b16 %v1606
        %v1815 = vunpack.c.l.b16 %v1607
        %v1816 = vunpack.c.h.b16 %v1607
        %v1817 = vunpack.c.l.b16 %v1608
        %v1818 = vunpack.c.h.b16 %v1608
        %v1819 = vunpack.c.l.b16 %v1609
        %v1820 = vunpack.c.h.b16 %v1609
        %v1821 = vunpack.c.l.b16 %v1610
        %v1822 = vunpack.c.h.b16 %v1610
        %v1823 = vunpack.c.l.b16 %v1611
        %v1824 = vunpack.c.h.b16 %v1611
        %v1825 = vunpack.c.l.b16 %v1612
        %v1826 = vunpack.c.h.b16 %v1612
        %v1827 = vpack.c.b16 %v1767, %v1763
        %v1828 = vpack.c.b16 %v1768, %v1764
        %v1829 = vpack.c.b16 %v1769, %v1765
        %v1830 = vpack.c.b16 %v1770, %v1766
        %v1831 = vpack.c.b16 %v1775, %v1771
        %v1832 = vpack.c.b16 %v1776, %v1772
        %v1833 = vpack.c.b16 %v1777, %v1773
        %v1834 = vpack.c.b16 %v1778, %v1774
        %v1835 = vpack.c.b16 %v1783, %v1779
        %v1836 = vpack.c.b16 %v1784, %v1780
        %v1837 = vpack.c.b16 %v1785, %v1781
        %v1838 = vpack.c.b16 %v1786, %v1782
        %v1839 = vpack.c.b16 %v1791, %v1787
        %v1840 = vpack.c.b16 %v1792, %v1788
        %v1841 = vpack.c.b16 %v1793, %v1789
        %v1842 = vpack.c.b16 %v1794, %v1790
        %v1843 = vpack.c.b16 %v1799, %v1795
        %v1844 = vpack.c.b16 %v1800, %v1796
        %v1845 = vpack.c.b16 %v1801, %v1797
        %v1846 = vpack.c.b16 %v1802, %v1798
        %v1847 = vpack.c.b16 %v1807, %v1803
        %v1848 = vpack.c.b16 %v1808, %v1804
        %v1849 = vpack.c.b16 %v1809, %v1805
        %v1850 = vpack.c.b16 %v1810, %v1806
        %v1851 = vpack.c.b16 %v1815, %v1811
        %v1852 = vpack.c.b16 %v1816, %v1812
        %v1853 = vpack.c.b16 %v1817, %v1813
        %v1854 = vpack.c.b16 %v1818, %v1814
        %v1855 = vpack.c.b16 %v1823, %v1819
        %v1856 = vpack.c.b16 %v1824, %v1820
        %v1857 = vpack.c.b16 %v1825, %v1821
        %v1858 = vpack.c.b16 %v1826, %v1822
        %1891 = vmatprep.subr.bf16.mxu0 %v1856
        %1892 = vmatpush1.bf16.msra.mxu0 %v1855
        %1893 = vmatprep.subr.bf16.mxu0 %v1852
        %1894 = vmatpush1.bf16.msra.mxu0 %v1851
        %1895 = vmatprep.subr.bf16.mxu0 %v1848
        %1896 = vmatpush1.bf16.msra.mxu0 %v1847
        %1897 = vmatprep.subr.bf16.mxu0 %v1844
        %1898 = vmatpush1.bf16.msra.mxu0 %v1843
        %1899 = vmatprep.subr.bf16.mxu0 %v1840
        %1900 = vmatpush1.bf16.msra.mxu0 %v1839
        %1901 = vmatprep.subr.bf16.mxu0 %v1836
        %1902 = vmatpush1.bf16.msra.mxu0 %v1835
        %1903 = vmatprep.subr.bf16.mxu0 %v1832
        %1904 = vmatpush1.bf16.msra.mxu0 %v1831
        %1905 = vmatprep.subr.bf16.mxu0 %v1828
        %1906 = vmatpush1.bf16.msra.mxu0 %v1827
        %1907 = vmatprep.subr.bf16.mxu0 0
        %1908 = vmatpush2.bf16.msra.mxu0 0
        %1909 = vmatprep.subr.bf16.mxu0 0
        %1910 = vmatpush2.bf16.msra.mxu0 0
        %1911 = vmatprep.subr.bf16.mxu0 0
        %1912 = vmatpush2.bf16.msra.mxu0 0
        %1913 = vmatprep.subr.bf16.mxu0 0
        %1914 = vmatpush2.bf16.msra.mxu0 0
        %1915 = vmatprep.subr.bf16.mxu0 0
        %1916 = vmatpush2.bf16.msra.mxu0 0
        %1917 = vmatprep.subr.bf16.mxu0 0
        %1918 = vmatpush2.bf16.msra.mxu0 0
        %1919 = vmatprep.subr.bf16.mxu0 0
        %1920 = vmatpush2.bf16.msra.mxu0 0
        %1921 = vmatprep.subr.bf16.mxu0 0
        %1922 = vmatpush2.bf16.msra.mxu0 0
        %1923 = vmatprep.mubr.bf16.mxu0 0
        %1924 = vmatmul.mubr.bf16.gmra.mxu0 %v1699
        %v1925 = vpop.f32.mrf.mxu0
        %v1926 = vadd.f32 %v1618, %v1925
        %v1927 = vpop.f32.mrf.mxu0
        %v1928 = vadd.f32 %v1622, %v1927
        %v1929 = vpop.f32.mrf.mxu0
        %v1930 = vadd.f32 %v1618, %v1929
        %v1931 = vpop.f32.mrf.mxu0
        %v1932 = vadd.f32 %v1622, %v1931
        %1933 = vmatprep.mubr.bf16.mxu0 0
        %1934 = vmatmul.mubr.bf16.gmra.mxu0 %v1700
        %v1935 = vpop.f32.mrf.mxu0
        %v1936 = vadd.f32 %v1618, %v1935
        %v1937 = vpop.f32.mrf.mxu0
        %v1938 = vadd.f32 %v1622, %v1937
        %v1939 = vpop.f32.mrf.mxu0
        %v1940 = vadd.f32 %v1618, %v1939
        %v1941 = vpop.f32.mrf.mxu0
        %v1942 = vadd.f32 %v1622, %v1941
        %1943 = vmatprep.mubr.bf16.mxu0 0
        %1944 = vmatmul.mubr.bf16.gmra.mxu0 %v1701
        %v1945 = vpop.f32.mrf.mxu0
        %v1946 = vadd.f32 %v1618, %v1945
        %v1947 = vpop.f32.mrf.mxu0
        %v1948 = vadd.f32 %v1622, %v1947
        %v1949 = vpop.f32.mrf.mxu0
        %v1950 = vadd.f32 %v1618, %v1949
        %v1951 = vpop.f32.mrf.mxu0
        %v1952 = vadd.f32 %v1622, %v1951
        %1953 = vmatprep.mubr.bf16.mxu0 0
        %1954 = vmatmul.mubr.bf16.gmra.mxu0 %v1702
        %v1955 = vpop.f32.mrf.mxu0
        %v1956 = vadd.f32 %v1618, %v1955
        %v1957 = vpop.f32.mrf.mxu0
        %v1958 = vadd.f32 %v1622, %v1957
        %v1959 = vpop.f32.mrf.mxu0
        %v1960 = vadd.f32 %v1618, %v1959
        %v1961 = vpop.f32.mrf.mxu0
        %v1962 = vadd.f32 %v1622, %v1961
        %1963 = vmatprep.mubr.bf16.mxu0 0
        %1964 = vmatmul.mubr.bf16.gmra.mxu0 %v1703
        %v1965 = vpop.f32.mrf.mxu0
        %v1966 = vadd.f32 %v1618, %v1965
        %v1967 = vpop.f32.mrf.mxu0
        %v1968 = vadd.f32 %v1622, %v1967
        %v1969 = vpop.f32.mrf.mxu0
        %v1970 = vadd.f32 %v1618, %v1969
        %v1971 = vpop.f32.mrf.mxu0
        %v1972 = vadd.f32 %v1622, %v1971
        %1973 = vmatprep.mubr.bf16.mxu0 0
        %1974 = vmatmul.mubr.bf16.gmra.mxu0 %v1704
        %v1975 = vpop.f32.mrf.mxu0
        %v1976 = vadd.f32 %v1618, %v1975
        %v1977 = vpop.f32.mrf.mxu0
        %v1978 = vadd.f32 %v1622, %v1977
        %v1979 = vpop.f32.mrf.mxu0
        %v1980 = vadd.f32 %v1618, %v1979
        %v1981 = vpop.f32.mrf.mxu0
        %v1982 = vadd.f32 %v1622, %v1981
        %1983 = vmatprep.mubr.bf16.mxu0 0
        %1984 = vmatmul.mubr.bf16.gmra.mxu0 %v1705
        %v1985 = vpop.f32.mrf.mxu0
        %v1986 = vadd.f32 %v1618, %v1985
        %v1987 = vpop.f32.mrf.mxu0
        %v1988 = vadd.f32 %v1622, %v1987
        %v1989 = vpop.f32.mrf.mxu0
        %v1990 = vadd.f32 %v1618, %v1989
        %v1991 = vpop.f32.mrf.mxu0
        %v1992 = vadd.f32 %v1622, %v1991
        %1993 = vmatprep.mubr.bf16.mxu0 0
        %1994 = vmatmul.mubr.bf16.gmra.mxu0 %v1706
        %v1995 = vpop.f32.mrf.mxu0
        %v1996 = vadd.f32 %v1618, %v1995
        %v1997 = vpop.f32.mrf.mxu0
        %v1998 = vadd.f32 %v1622, %v1997
        %v1999 = vpop.f32.mrf.mxu0
        %v2000 = vadd.f32 %v1618, %v1999
        %v2001 = vpop.f32.mrf.mxu0
        %v2002 = vadd.f32 %v1622, %v2001
        %2003 = vmatprep.mubr.bf16.mxu0 0
        %2004 = vmatmul.mubr.bf16.gmra.mxu0 %v1707
        %v2005 = vpop.f32.mrf.mxu0
        %v2006 = vadd.f32 %v1618, %v2005
        %v2007 = vpop.f32.mrf.mxu0
        %v2008 = vadd.f32 %v1622, %v2007
        %v2009 = vpop.f32.mrf.mxu0
        %v2010 = vadd.f32 %v1618, %v2009
        %v2011 = vpop.f32.mrf.mxu0
        %v2012 = vadd.f32 %v1622, %v2011
        %2013 = vmatprep.mubr.bf16.mxu0 0
        %2014 = vmatmul.mubr.bf16.gmra.mxu0 %v1708
        %v2015 = vpop.f32.mrf.mxu0
        %v2016 = vadd.f32 %v1618, %v2015
        %v2017 = vpop.f32.mrf.mxu0
        %v2018 = vadd.f32 %v1622, %v2017
        %v2019 = vpop.f32.mrf.mxu0
        %v2020 = vadd.f32 %v1618, %v2019
        %v2021 = vpop.f32.mrf.mxu0
        %v2022 = vadd.f32 %v1622, %v2021
        %2023 = vmatprep.mubr.bf16.mxu0 0
        %2024 = vmatmul.mubr.bf16.gmra.mxu0 %v1709
        %v2025 = vpop.f32.mrf.mxu0
        %v2026 = vadd.f32 %v1618, %v2025
        %v2027 = vpop.f32.mrf.mxu0
        %v2028 = vadd.f32 %v1622, %v2027
        %v2029 = vpop.f32.mrf.mxu0
        %v2030 = vadd.f32 %v1618, %v2029
        %v2031 = vpop.f32.mrf.mxu0
        %v2032 = vadd.f32 %v1622, %v2031
        %2033 = vmatprep.mubr.bf16.mxu0 0
        %2034 = vmatmul.mubr.bf16.gmra.mxu0 %v1710
        %v2035 = vpop.f32.mrf.mxu0
        %v2036 = vadd.f32 %v1618, %v2035
        %v2037 = vpop.f32.mrf.mxu0
        %v2038 = vadd.f32 %v1622, %v2037
        %v2039 = vpop.f32.mrf.mxu0
        %v2040 = vadd.f32 %v1618, %v2039
        %v2041 = vpop.f32.mrf.mxu0
        %v2042 = vadd.f32 %v1622, %v2041
        %2043 = vmatprep.mubr.bf16.mxu0 0
        %2044 = vmatmul.mubr.bf16.gmra.mxu0 %v1711
        %v2045 = vpop.f32.mrf.mxu0
        %v2046 = vadd.f32 %v1618, %v2045
        %v2047 = vpop.f32.mrf.mxu0
        %v2048 = vadd.f32 %v1622, %v2047
        %v2049 = vpop.f32.mrf.mxu0
        %v2050 = vadd.f32 %v1618, %v2049
        %v2051 = vpop.f32.mrf.mxu0
        %v2052 = vadd.f32 %v1622, %v2051
        %2053 = vmatprep.mubr.bf16.mxu0 0
        %2054 = vmatmul.mubr.bf16.gmra.mxu0 %v1712
        %v2055 = vpop.f32.mrf.mxu0
        %v2056 = vadd.f32 %v1618, %v2055
        %v2057 = vpop.f32.mrf.mxu0
        %v2058 = vadd.f32 %v1622, %v2057
        %v2059 = vpop.f32.mrf.mxu0
        %v2060 = vadd.f32 %v1618, %v2059
        %v2061 = vpop.f32.mrf.mxu0
        %v2062 = vadd.f32 %v1622, %v2061
        %2063 = vmatprep.mubr.bf16.mxu0 0
        %2064 = vmatmul.mubr.bf16.gmra.mxu0 %v1713
        %v2065 = vpop.f32.mrf.mxu0
        %v2066 = vadd.f32 %v1618, %v2065
        %v2067 = vpop.f32.mrf.mxu0
        %v2068 = vadd.f32 %v1622, %v2067
        %v2069 = vpop.f32.mrf.mxu0
        %v2070 = vadd.f32 %v1618, %v2069
        %v2071 = vpop.f32.mrf.mxu0
        %v2072 = vadd.f32 %v1622, %v2071
        %2073 = vmatprep.mubr.bf16.mxu0 0
        %2074 = vmatmul.mubr.bf16.gmra.mxu0 %v1714
        %v2075 = vpop.f32.mrf.mxu0
        %v2076 = vadd.f32 %v1618, %v2075
        %v2077 = vpop.f32.mrf.mxu0
        %v2078 = vadd.f32 %v1622, %v2077
        %v2079 = vpop.f32.mrf.mxu0
        %v2080 = vadd.f32 %v1618, %v2079
        %v2081 = vpop.f32.mrf.mxu0
        %v2082 = vadd.f32 %v1622, %v2081
        %2083 = vdwg.mxu0
        %2084 = vmatprep.subr.bf16.mxu0 %v1858
        %2085 = vmatpush1.bf16.msra.mxu0 %v1857
        %2086 = vmatprep.subr.bf16.mxu0 %v1854
        %2087 = vmatpush1.bf16.msra.mxu0 %v1853
        %2088 = vmatprep.subr.bf16.mxu0 %v1850
        %2089 = vmatpush1.bf16.msra.mxu0 %v1849
        %2090 = vmatprep.subr.bf16.mxu0 %v1846
        %2091 = vmatpush1.bf16.msra.mxu0 %v1845
        %2092 = vmatprep.subr.bf16.mxu0 %v1842
        %2093 = vmatpush1.bf16.msra.mxu0 %v1841
        %2094 = vmatprep.subr.bf16.mxu0 %v1838
        %2095 = vmatpush1.bf16.msra.mxu0 %v1837
        %2096 = vmatprep.subr.bf16.mxu0 %v1834
        %2097 = vmatpush1.bf16.msra.mxu0 %v1833
        %2098 = vmatprep.subr.bf16.mxu0 %v1830
        %2099 = vmatpush1.bf16.msra.mxu0 %v1829
        %2100 = vmatprep.subr.bf16.mxu0 0
        %2101 = vmatpush2.bf16.msra.mxu0 0
        %2102 = vmatprep.subr.bf16.mxu0 0
        %2103 = vmatpush2.bf16.msra.mxu0 0
        %2104 = vmatprep.subr.bf16.mxu0 0
        %2105 = vmatpush2.bf16.msra.mxu0 0
        %2106 = vmatprep.subr.bf16.mxu0 0
        %2107 = vmatpush2.bf16.msra.mxu0 0
        %2108 = vmatprep.subr.bf16.mxu0 0
        %2109 = vmatpush2.bf16.msra.mxu0 0
        %2110 = vmatprep.subr.bf16.mxu0 0
        %2111 = vmatpush2.bf16.msra.mxu0 0
        %2112 = vmatprep.subr.bf16.mxu0 0
        %2113 = vmatpush2.bf16.msra.mxu0 0
        %2114 = vmatprep.subr.bf16.mxu0 0
        %2115 = vmatpush2.bf16.msra.mxu0 0
        %2116 = vmatprep.mubr.bf16.mxu0 0
        %2117 = vmatmul.mubr.bf16.gmra.mxu0 %v1699
        %v2118 = vpop.f32.mrf.mxu0
        %v2119 = vadd.f32 %v1626, %v2118
        %v2120 = vpop.f32.mrf.mxu0
        %v2121 = vadd.f32 %v1630, %v2120
        %v2122 = vpop.f32.mrf.mxu0
        %v2123 = vadd.f32 %v1626, %v2122
        %v2124 = vpop.f32.mrf.mxu0
        %v2125 = vadd.f32 %v1630, %v2124
        %2126 = vmatprep.mubr.bf16.mxu0 0
        %2127 = vmatmul.mubr.bf16.gmra.mxu0 %v1700
        %v2128 = vpop.f32.mrf.mxu0
        %v2129 = vadd.f32 %v1626, %v2128
        %v2130 = vpop.f32.mrf.mxu0
        %v2131 = vadd.f32 %v1630, %v2130
        %v2132 = vpop.f32.mrf.mxu0
        %v2133 = vadd.f32 %v1626, %v2132
        %v2134 = vpop.f32.mrf.mxu0
        %v2135 = vadd.f32 %v1630, %v2134
        %2136 = vmatprep.mubr.bf16.mxu0 0
        %2137 = vmatmul.mubr.bf16.gmra.mxu0 %v1701
        %v2138 = vpop.f32.mrf.mxu0
        %v2139 = vadd.f32 %v1626, %v2138
        %v2140 = vpop.f32.mrf.mxu0
        %v2141 = vadd.f32 %v1630, %v2140
        %v2142 = vpop.f32.mrf.mxu0
        %v2143 = vadd.f32 %v1626, %v2142
        %v2144 = vpop.f32.mrf.mxu0
        %v2145 = vadd.f32 %v1630, %v2144
        %2146 = vmatprep.mubr.bf16.mxu0 0
        %2147 = vmatmul.mubr.bf16.gmra.mxu0 %v1702
        %v2148 = vpop.f32.mrf.mxu0
        %v2149 = vadd.f32 %v1626, %v2148
        %v2150 = vpop.f32.mrf.mxu0
        %v2151 = vadd.f32 %v1630, %v2150
        %v2152 = vpop.f32.mrf.mxu0
        %v2153 = vadd.f32 %v1626, %v2152
        %v2154 = vpop.f32.mrf.mxu0
        %v2155 = vadd.f32 %v1630, %v2154
        %2156 = vmatprep.mubr.bf16.mxu0 0
        %2157 = vmatmul.mubr.bf16.gmra.mxu0 %v1703
        %v2158 = vpop.f32.mrf.mxu0
        %v2159 = vadd.f32 %v1626, %v2158
        %v2160 = vpop.f32.mrf.mxu0
        %v2161 = vadd.f32 %v1630, %v2160
        %v2162 = vpop.f32.mrf.mxu0
        %v2163 = vadd.f32 %v1626, %v2162
        %v2164 = vpop.f32.mrf.mxu0
        %v2165 = vadd.f32 %v1630, %v2164
        %2166 = vmatprep.mubr.bf16.mxu0 0
        %2167 = vmatmul.mubr.bf16.gmra.mxu0 %v1704
        %v2168 = vpop.f32.mrf.mxu0
        %v2169 = vadd.f32 %v1626, %v2168
        %v2170 = vpop.f32.mrf.mxu0
        %v2171 = vadd.f32 %v1630, %v2170
        %v2172 = vpop.f32.mrf.mxu0
        %v2173 = vadd.f32 %v1626, %v2172
        %v2174 = vpop.f32.mrf.mxu0
        %v2175 = vadd.f32 %v1630, %v2174
        %2176 = vmatprep.mubr.bf16.mxu0 0
        %2177 = vmatmul.mubr.bf16.gmra.mxu0 %v1705
        %v2178 = vpop.f32.mrf.mxu0
        %v2179 = vadd.f32 %v1626, %v2178
        %v2180 = vpop.f32.mrf.mxu0
        %v2181 = vadd.f32 %v1630, %v2180
        %v2182 = vpop.f32.mrf.mxu0
        %v2183 = vadd.f32 %v1626, %v2182
        %v2184 = vpop.f32.mrf.mxu0
        %v2185 = vadd.f32 %v1630, %v2184
        %2186 = vmatprep.mubr.bf16.mxu0 0
        %2187 = vmatmul.mubr.bf16.gmra.mxu0 %v1706
        %v2188 = vpop.f32.mrf.mxu0
        %v2189 = vadd.f32 %v1626, %v2188
        %v2190 = vpop.f32.mrf.mxu0
        %v2191 = vadd.f32 %v1630, %v2190
        %v2192 = vpop.f32.mrf.mxu0
        %v2193 = vadd.f32 %v1626, %v2192
        %v2194 = vpop.f32.mrf.mxu0
        %v2195 = vadd.f32 %v1630, %v2194
        %2196 = vmatprep.mubr.bf16.mxu0 0
        %2197 = vmatmul.mubr.bf16.gmra.mxu0 %v1707
        %v2198 = vpop.f32.mrf.mxu0
        %v2199 = vadd.f32 %v1626, %v2198
        %v2200 = vpop.f32.mrf.mxu0
        %v2201 = vadd.f32 %v1630, %v2200
        %v2202 = vpop.f32.mrf.mxu0
        %v2203 = vadd.f32 %v1626, %v2202
        %v2204 = vpop.f32.mrf.mxu0
        %v2205 = vadd.f32 %v1630, %v2204
        %2206 = vmatprep.mubr.bf16.mxu0 0
        %2207 = vmatmul.mubr.bf16.gmra.mxu0 %v1708
        %v2208 = vpop.f32.mrf.mxu0
        %v2209 = vadd.f32 %v1626, %v2208
        %v2210 = vpop.f32.mrf.mxu0
        %v2211 = vadd.f32 %v1630, %v2210
        %v2212 = vpop.f32.mrf.mxu0
        %v2213 = vadd.f32 %v1626, %v2212
        %v2214 = vpop.f32.mrf.mxu0
        %v2215 = vadd.f32 %v1630, %v2214
        %2216 = vmatprep.mubr.bf16.mxu0 0
        %2217 = vmatmul.mubr.bf16.gmra.mxu0 %v1709
        %v2218 = vpop.f32.mrf.mxu0
        %v2219 = vadd.f32 %v1626, %v2218
        %v2220 = vpop.f32.mrf.mxu0
        %v2221 = vadd.f32 %v1630, %v2220
        %v2222 = vpop.f32.mrf.mxu0
        %v2223 = vadd.f32 %v1626, %v2222
        %v2224 = vpop.f32.mrf.mxu0
        %v2225 = vadd.f32 %v1630, %v2224
        %2226 = vmatprep.mubr.bf16.mxu0 0
        %2227 = vmatmul.mubr.bf16.gmra.mxu0 %v1710
        %v2228 = vpop.f32.mrf.mxu0
        %v2229 = vadd.f32 %v1626, %v2228
        %v2230 = vpop.f32.mrf.mxu0
        %v2231 = vadd.f32 %v1630, %v2230
        %v2232 = vpop.f32.mrf.mxu0
        %v2233 = vadd.f32 %v1626, %v2232
        %v2234 = vpop.f32.mrf.mxu0
        %v2235 = vadd.f32 %v1630, %v2234
        %2236 = vmatprep.mubr.bf16.mxu0 0
        %2237 = vmatmul.mubr.bf16.gmra.mxu0 %v1711
        %v2238 = vpop.f32.mrf.mxu0
        %v2239 = vadd.f32 %v1626, %v2238
        %v2240 = vpop.f32.mrf.mxu0
        %v2241 = vadd.f32 %v1630, %v2240
        %v2242 = vpop.f32.mrf.mxu0
        %v2243 = vadd.f32 %v1626, %v2242
        %v2244 = vpop.f32.mrf.mxu0
        %v2245 = vadd.f32 %v1630, %v2244
        %2246 = vmatprep.mubr.bf16.mxu0 0
        %2247 = vmatmul.mubr.bf16.gmra.mxu0 %v1712
        %v2248 = vpop.f32.mrf.mxu0
        %v2249 = vadd.f32 %v1626, %v2248
        %v2250 = vpop.f32.mrf.mxu0
        %v2251 = vadd.f32 %v1630, %v2250
        %v2252 = vpop.f32.mrf.mxu0
        %v2253 = vadd.f32 %v1626, %v2252
        %v2254 = vpop.f32.mrf.mxu0
        %v2255 = vadd.f32 %v1630, %v2254
        %2256 = vmatprep.mubr.bf16.mxu0 0
        %2257 = vmatmul.mubr.bf16.gmra.mxu0 %v1713
        %v2258 = vpop.f32.mrf.mxu0
        %v2259 = vadd.f32 %v1626, %v2258
        %v2260 = vpop.f32.mrf.mxu0
        %v2261 = vadd.f32 %v1630, %v2260
        %v2262 = vpop.f32.mrf.mxu0
        %v2263 = vadd.f32 %v1626, %v2262
        %v2264 = vpop.f32.mrf.mxu0
        %v2265 = vadd.f32 %v1630, %v2264
        %2266 = vmatprep.mubr.bf16.mxu0 0
        %2267 = vmatmul.mubr.bf16.gmra.mxu0 %v1714
        %v2268 = vpop.f32.mrf.mxu0
        %v2269 = vadd.f32 %v1626, %v2268
        %v2270 = vpop.f32.mrf.mxu0
        %v2271 = vadd.f32 %v1630, %v2270
        %v2272 = vpop.f32.mrf.mxu0
        %v2273 = vadd.f32 %v1626, %v2272
        %v2274 = vpop.f32.mrf.mxu0
        %v2275 = vadd.f32 %v1630, %v2274
        %2276 = vdwg.mxu0
        %2277 = vst [vmem:[%s424] sm:$0xff] %v1926
        %2278 = vst [vmem:[%s424 + $0x8] sm:$0xff] %v1928
        %2279 = vst [vmem:[%s424 + $0x10] sm:$0xff] %v2119
        %2280 = vst [vmem:[%s424 + $0x18] sm:$0xff] %v2121
        %2281 = vst [vmem:[%s424 + $0x20] sm:$0xff] %v1930
        %2282 = vst [vmem:[%s424 + $0x28] sm:$0xff] %v1932
        %2283 = vst [vmem:[%s424 + $0x30] sm:$0xff] %v2123
        %2284 = vst [vmem:[%s424 + $0x38] sm:$0xff] %v2125
        %2285 = vst [vmem:[%s424 + $0x40] sm:$0xff] %v1936
        %2286 = vst [vmem:[%s424 + $0x48] sm:$0xff] %v1938
        %2287 = vst [vmem:[%s424 + $0x50] sm:$0xff] %v2129
        %2288 = vst [vmem:[%s424 + $0x58] sm:$0xff] %v2131
        %2289 = vst [vmem:[%s424 + $0x60] sm:$0xff] %v1940
        %2290 = vst [vmem:[%s424 + $0x68] sm:$0xff] %v1942
        %2291 = vst [vmem:[%s424 + $0x70] sm:$0xff] %v2133
        %2292 = vst [vmem:[%s424 + $0x78] sm:$0xff] %v2135
        %2293 = vst [vmem:[%s424 + $0x80] sm:$0xff] %v1946
        %2294 = vst [vmem:[%s424 + $0x88] sm:$0xff] %v1948
        %2295 = vst [vmem:[%s424 + $0x90] sm:$0xff] %v2139
        %2296 = vst [vmem:[%s424 + $0x98] sm:$0xff] %v2141
        %2297 = vst [vmem:[%s424 + $0xa0] sm:$0xff] %v1950
        %2298 = vst [vmem:[%s424 + $0xa8] sm:$0xff] %v1952
        %2299 = vst [vmem:[%s424 + $0xb0] sm:$0xff] %v2143
        %2300 = vst [vmem:[%s424 + $0xb8] sm:$0xff] %v2145
        %2301 = vst [vmem:[%s424 + $0xc0] sm:$0xff] %v1956
        %2302 = vst [vmem:[%s424 + $0xc8] sm:$0xff] %v1958
        %2303 = vst [vmem:[%s424 + $0xd0] sm:$0xff] %v2149
        %2304 = vst [vmem:[%s424 + $0xd8] sm:$0xff] %v2151
        %2305 = vst [vmem:[%s424 + $0xe0] sm:$0xff] %v1960
        %2306 = vst [vmem:[%s424 + $0xe8] sm:$0xff] %v1962
        %2307 = vst [vmem:[%s424 + $0xf0] sm:$0xff] %v2153
        %2308 = vst [vmem:[%s424 + $0xf8] sm:$0xff] %v2155
        %2309 = vst [vmem:[%s424 + $0x100] sm:$0xff] %v1966
        %2310 = vst [vmem:[%s424 + $0x108] sm:$0xff] %v1968
        %2311 = vst [vmem:[%s424 + $0x110] sm:$0xff] %v2159
        %2312 = vst [vmem:[%s424 + $0x118] sm:$0xff] %v2161
        %2313 = vst [vmem:[%s424 + $0x120] sm:$0xff] %v1970
        %2314 = vst [vmem:[%s424 + $0x128] sm:$0xff] %v1972
        %2315 = vst [vmem:[%s424 + $0x130] sm:$0xff] %v2163
        %2316 = vst [vmem:[%s424 + $0x138] sm:$0xff] %v2165
        %2317 = vst [vmem:[%s424 + $0x140] sm:$0xff] %v1976
        %2318 = vst [vmem:[%s424 + $0x148] sm:$0xff] %v1978
        %2319 = vst [vmem:[%s424 + $0x150] sm:$0xff] %v2169
        %2320 = vst [vmem:[%s424 + $0x158] sm:$0xff] %v2171
        %2321 = vst [vmem:[%s424 + $0x160] sm:$0xff] %v1980
        %2322 = vst [vmem:[%s424 + $0x168] sm:$0xff] %v1982
        %2323 = vst [vmem:[%s424 + $0x170] sm:$0xff] %v2173
        %2324 = vst [vmem:[%s424 + $0x178] sm:$0xff] %v2175
        %2325 = vst [vmem:[%s424 + $0x180] sm:$0xff] %v1986
        %2326 = vst [vmem:[%s424 + $0x188] sm:$0xff] %v1988
        %2327 = vst [vmem:[%s424 + $0x190] sm:$0xff] %v2179
        %2328 = vst [vmem:[%s424 + $0x198] sm:$0xff] %v2181
        %2329 = vst [vmem:[%s424 + $0x1a0] sm:$0xff] %v1990
        %2330 = vst [vmem:[%s424 + $0x1a8] sm:$0xff] %v1992
        %2331 = vst [vmem:[%s424 + $0x1b0] sm:$0xff] %v2183
        %2332 = vst [vmem:[%s424 + $0x1b8] sm:$0xff] %v2185
        %2333 = vst [vmem:[%s424 + $0x1c0] sm:$0xff] %v1996
        %2334 = vst [vmem:[%s424 + $0x1c8] sm:$0xff] %v1998
        %2335 = vst [vmem:[%s424 + $0x1d0] sm:$0xff] %v2189
        %2336 = vst [vmem:[%s424 + $0x1d8] sm:$0xff] %v2191
        %2337 = vst [vmem:[%s424 + $0x1e0] sm:$0xff] %v2000
        %2338 = vst [vmem:[%s424 + $0x1e8] sm:$0xff] %v2002
        %2339 = vst [vmem:[%s424 + $0x1f0] sm:$0xff] %v2193
        %2340 = vst [vmem:[%s424 + $0x1f8] sm:$0xff] %v2195
        %2341 = vst [vmem:[%s424 + $0x200] sm:$0xff] %v2006
        %2342 = vst [vmem:[%s424 + $0x208] sm:$0xff] %v2008
        %2343 = vst [vmem:[%s424 + $0x210] sm:$0xff] %v2199
        %2344 = vst [vmem:[%s424 + $0x218] sm:$0xff] %v2201
        %2345 = vst [vmem:[%s424 + $0x220] sm:$0xff] %v2010
        %2346 = vst [vmem:[%s424 + $0x228] sm:$0xff] %v2012
        %2347 = vst [vmem:[%s424 + $0x230] sm:$0xff] %v2203
        %2348 = vst [vmem:[%s424 + $0x238] sm:$0xff] %v2205
        %2349 = vst [vmem:[%s424 + $0x240] sm:$0xff] %v2016
        %2350 = vst [vmem:[%s424 + $0x248] sm:$0xff] %v2018
        %2351 = vst [vmem:[%s424 + $0x250] sm:$0xff] %v2209
        %2352 = vst [vmem:[%s424 + $0x258] sm:$0xff] %v2211
        %2353 = vst [vmem:[%s424 + $0x260] sm:$0xff] %v2020
        %2354 = vst [vmem:[%s424 + $0x268] sm:$0xff] %v2022
        %2355 = vst [vmem:[%s424 + $0x270] sm:$0xff] %v2213
        %2356 = vst [vmem:[%s424 + $0x278] sm:$0xff] %v2215
        %2357 = vst [vmem:[%s424 + $0x280] sm:$0xff] %v2026
        %2358 = vst [vmem:[%s424 + $0x288] sm:$0xff] %v2028
        %2359 = vst [vmem:[%s424 + $0x290] sm:$0xff] %v2219
        %2360 = vst [vmem:[%s424 + $0x298] sm:$0xff] %v2221
        %2361 = vst [vmem:[%s424 + $0x2a0] sm:$0xff] %v2030
        %2362 = vst [vmem:[%s424 + $0x2a8] sm:$0xff] %v2032
        %2363 = vst [vmem:[%s424 + $0x2b0] sm:$0xff] %v2223
        %2364 = vst [vmem:[%s424 + $0x2b8] sm:$0xff] %v2225
        %2365 = vst [vmem:[%s424 + $0x2c0] sm:$0xff] %v2036
        %2366 = vst [vmem:[%s424 + $0x2c8] sm:$0xff] %v2038
        %2367 = vst [vmem:[%s424 + $0x2d0] sm:$0xff] %v2229
        %2368 = vst [vmem:[%s424 + $0x2d8] sm:$0xff] %v2231
        %2369 = vst [vmem:[%s424 + $0x2e0] sm:$0xff] %v2040
        %2370 = vst [vmem:[%s424 + $0x2e8] sm:$0xff] %v2042
        %2371 = vst [vmem:[%s424 + $0x2f0] sm:$0xff] %v2233
        %2372 = vst [vmem:[%s424 + $0x2f8] sm:$0xff] %v2235
        %2373 = vst [vmem:[%s424 + $0x300] sm:$0xff] %v2046
        %2374 = vst [vmem:[%s424 + $0x308] sm:$0xff] %v2048
        %2375 = vst [vmem:[%s424 + $0x310] sm:$0xff] %v2239
        %2376 = vst [vmem:[%s424 + $0x318] sm:$0xff] %v2241
        %2377 = vst [vmem:[%s424 + $0x320] sm:$0xff] %v2050
        %2378 = vst [vmem:[%s424 + $0x328] sm:$0xff] %v2052
        %2379 = vst [vmem:[%s424 + $0x330] sm:$0xff] %v2243
        %2380 = vst [vmem:[%s424 + $0x338] sm:$0xff] %v2245
        %2381 = vst [vmem:[%s424 + $0x340] sm:$0xff] %v2056
        %2382 = vst [vmem:[%s424 + $0x348] sm:$0xff] %v2058
        %2383 = vst [vmem:[%s424 + $0x350] sm:$0xff] %v2249
        %2384 = vst [vmem:[%s424 + $0x358] sm:$0xff] %v2251
        %2385 = vst [vmem:[%s424 + $0x360] sm:$0xff] %v2060
        %2386 = vst [vmem:[%s424 + $0x368] sm:$0xff] %v2062
        %2387 = vst [vmem:[%s424 + $0x370] sm:$0xff] %v2253
        %2388 = vst [vmem:[%s424 + $0x378] sm:$0xff] %v2255
        %2389 = vst [vmem:[%s424 + $0x380] sm:$0xff] %v2066
        %2390 = vst [vmem:[%s424 + $0x388] sm:$0xff] %v2068
        %2391 = vst [vmem:[%s424 + $0x390] sm:$0xff] %v2259
        %2392 = vst [vmem:[%s424 + $0x398] sm:$0xff] %v2261
        %2393 = vst [vmem:[%s424 + $0x3a0] sm:$0xff] %v2070
        %2394 = vst [vmem:[%s424 + $0x3a8] sm:$0xff] %v2072
        %2395 = vst [vmem:[%s424 + $0x3b0] sm:$0xff] %v2263
        %2396 = vst [vmem:[%s424 + $0x3b8] sm:$0xff] %v2265
        %2397 = vst [vmem:[%s424 + $0x3c0] sm:$0xff] %v2076
        %2398 = vst [vmem:[%s424 + $0x3c8] sm:$0xff] %v2078
        %2399 = vst [vmem:[%s424 + $0x3d0] sm:$0xff] %v2269
        %2400 = vst [vmem:[%s424 + $0x3d8] sm:$0xff] %v2271
        %2401 = vst [vmem:[%s424 + $0x3e0] sm:$0xff] %v2080
        %2402 = vst [vmem:[%s424 + $0x3e8] sm:$0xff] %v2082
        %2403 = vst [vmem:[%s424 + $0x3f0] sm:$0xff] %v2273
        %2404 = vst [vmem:[%s424 + $0x3f8] sm:$0xff] %v2275
        %s2405 = sand.u32 %s211, 1
        %s2406 = scalar_lea.sflag [#allocation5], %s2405
        %s2407 = sand.u32 %s211, 1
        %s2408 = smul.addr %s2407, 1024
        %s2409 = scalar_lea.vmem [#allocation15], %s2408
        // Predicated region
        $region81: #{tpu_custom_call.1} parent=47 // pred_check
          %p2410 = pneg %p221
        $region82: #{tpu_custom_call.1} parent=47 // pred_check_branch
          %2412 = sbr.rel (%p2410) target = $region84
        $region83: #{tpu_custom_call.1} parent=47 // pred_region
          %s2413 = smul.u32 32, %s31
          %s2414 = smul.u32 4, %s32
          %s2416 = ssub.s32 16384, 16384
          %2417 = vsyncadd %s2406, %s2416
          %s2418 = smul.addr %s2413, 8
          %s2419 = sadd.s32 %s2414, %s2418
          %s2420 = smul.addr %s2419, 128
          %s2421 = scalar_lea.hbm %s7, %s2420
          %s2422 = sshll.u32 %s2409, 4
          %s2423 = int_to_ptr.vmem [resolvable:$true] %s2422
          %2428 = dma.vmem_to_hbm [thread:$0]  %s2423, 16384, %s2421, %s2406, 512, 1024, 32
        $region84: #{tpu_custom_call.1} parent=47 // pred_fallthru
          _
      $region48: #{tpu_custom_call.1} parent=5 // pred_fallthru
        _
      %p2429 = scmp.le.s32.totalorder 2, %s22
      // Predicated region
      $region85: #{tpu_custom_call.1} parent=5 // pred_check
        %p2430 = pneg %p2429
      $region86: #{tpu_custom_call.1} parent=5 // pred_check_branch
        %2432 = sbr.rel (%p2430) target = $region88
      $region87: #{tpu_custom_call.1} parent=5 // pred_region
        %s2433 = ssub.s32 %s22, 2
        // Predicated region
        $region89: #{tpu_custom_call.1} parent=87 // pred_check
          %p2434 = pneg %p227
        $region90: #{tpu_custom_call.1} parent=87 // pred_check_branch
          %2436 = sbr.rel (%p2434) target = $region92
        $region91: #{tpu_custom_call.1} parent=87 // pred_region
          %s2437 = sand.u32 %s212, 1
          %s2438 = scalar_lea.sflag [#allocation5], %s2437
          %s2439 = sand.u32 %s212, 1
          %s2440 = smul.addr %s2439, 1024
          %s2441 = scalar_lea.vmem [#allocation15], %s2440
          %2442 = dma.done %s2438, 16384
        $region92: #{tpu_custom_call.1} parent=87 // pred_fallthru
          _
      $region88: #{tpu_custom_call.1} parent=5 // pred_fallthru
        _
    $region6: #{tpu_custom_call.1} parent=1 // loop_footer
      %s26 = sadd.s32 1, %s22
    $region7: #{tpu_custom_call.1} parent=1 // loop_footer_branch
      %21 = sbr.rel target = $region3
    $region8: #{tpu_custom_call.1} parent=1 // loop_exit
      _
    %2443 = vsyncpa [#allocation4], 1
    %s2444 = scalar_lea.sflag [#allocation4], 1
    %2445 = vsyncpa %s2444, 1
    %2446 = vsyncpa [#allocation7], 1
    %2447 = vsyncpa [#allocation10], 1
    %2448 = vsyncpa [#allocation13], 1
    %s2449 = scalar_lea.sflag [#allocation13], 1
    %2450 = vsyncpa %s2449, 1
    %2451 = vsyncpa [#allocation5], 1
    %s2452 = scalar_lea.sflag [#allocation5], 1
    %2453 = vsyncpa %s2452, 1

// kernel: tpu_custom_call.1
$region0: #{tpu_custom_call.1}
  #allocation0 [shape = 'u32[]', space=smem, size = 0x4, offset = 0x4, fixed_abs, tag = 'smem constant byte address 0x4 - core index']
  #allocation1 [shape = 'u32[144,128]{1,0:T(1,128)}', space=vmem, size = 0x12000, scoped, tag = 'internal scratch']
  #allocation2 [shape = 'bf16[256,128]{1,0:T(8,128)(2,1)}', space=vmem, size = 0x10000, scoped, tag = 'scratch operand']
  %s0 = inlined_call_operand.hbm [shape: bf16[512,128], index: 0, kind: input, shape index: {}]
  %s1 = inlined_call_operand.hbm [shape: bf16[128,128], index: 1, kind: input, shape index: {}]
  %s2 = inlined_call_operand.hbm [shape: f32[1,128], index: 2, kind: input, shape index: {}]
  %s3 = inlined_call_operand.hbm [shape: bf16[2,128,128], index: 3, kind: input, shape index: {}]
  %s4 = inlined_call_operand.hbm [shape: f32[2,1,128], index: 4, kind: input, shape index: {}]
  %s5 = inlined_call_operand.hbm [shape: bf16[128,1024], index: 5, kind: input, shape index: {}]
  %s6 = inlined_call_operand.hbm [shape: f32[1,1024], index: 6, kind: input, shape index: {}]
  %s7 = inlined_call_operand.hbm [shape: f32[512,1024], index: 7, kind: output, shape index: {}]
  %s8 = sld [smem:[#allocation0]]
  $region93: #{tpu_custom_call.1} parent=0
    _
  %s10 = ssub.s32 1, %s8
  %s11 = scalar_select 0, %s10, %s8
  $region1: #{tpu_custom_call.1} parent=0
    #allocation3 [shape = 'u8[131072]{0}', space=vmem, size = 0x20000, scoped, tag = 'input window, operand 0']
    #allocation4 [shape = 's32[2]{0}', space=sflag, size = 0x8, scoped, tag = 'scoped memory for tpu_custom_call.1']
    #allocation5 [shape = 's32[2]{0}', space=sflag, size = 0x8, scoped, tag = 'scoped memory for tpu_custom_call.1']
    #allocation6 [shape = 'u8[32768]{0}', space=vmem, size = 0x8000, scoped, tag = 'input window, operand 1, single buffered']
    #allocation7 [shape = 's32[1]{0}', space=sflag, size = 0x4, scoped, tag = 'scoped memory for tpu_custom_call.1']
    #allocation8 [shape = 'u8[512]{0}', space=vmem, size = 0x400, scoped, tag = 'input window, operand 2, single buffered']
    #allocation9 [shape = 'u8[65536]{0}', space=vmem, size = 0x10000, scoped, tag = 'input window, operand 3, single buffered']
    #allocation10 [shape = 's32[1]{0}', space=sflag, size = 0x4, scoped, tag = 'scoped memory for tpu_custom_call.1']
    #allocation11 [shape = 'u8[1024]{0}', space=vmem, size = 0x400, scoped, tag = 'input window, operand 4, single buffered']
    #allocation12 [shape = 'u8[262144]{0}', space=vmem, size = 0x40000, scoped, tag = 'input window, operand 5']
    #allocation13 [shape = 's32[2]{0}', space=sflag, size = 0x8, scoped, tag = 'scoped memory for tpu_custom_call.1']
    #allocation14 [shape = 'u8[4096]{0}', space=vmem, size = 0x1000, scoped, tag = 'input window, operand 6']
    #allocation15 [shape = 'u8[1048576]{0}', space=vmem, size = 0x100000, scoped, tag = 'output window, operand 0']
    %12 = vsyncpa [#allocation4], 0
    %s13 = scalar_lea.sflag [#allocation4], 1
    %14 = vsyncpa %s13, 0
    %15 = vsyncpa [#allocation7], 0
    %16 = vsyncpa [#allocation10], 0
    %17 = vsyncpa [#allocation13], 0
    %s18 = scalar_lea.sflag [#allocation13], 1
    %19 = vsyncpa %s18, 0
    %20 = vsyncpa [#allocation5], 0
    %s21 = scalar_lea.sflag [#allocation5], 1
    %22 = vsyncpa %s21, 0
    loop: start=0, step=1, limit=6
    $region2: #{tpu_custom_call.1} parent=1 // loop_pre_header
      _
    $region3: #{tpu_custom_call.1} parent=1 // loop_header
      %s24 = sphi 0, %s28
      %p25 = scmp.ge.s32.totalorder %s24, 6
      %s31 = sphi 0, %s43
      %s32 = sphi 0, %s39
      %s33 = sphi 0, %s31
      %s34 = sphi 0, %s32
      %s35 = sphi 0, %s33
      %s36 = sphi 0, %s34
      %s46 = sphi 0, %s48
      %s49 = sphi 0, %s46
      %s50 = sphi 0, %s49
      %s66 = sphi 0, %s50
      %s70 = sphi 0, %s70
      %s72 = sphi 0, %s70
      %s73 = sphi 0, %s72
      %s87 = sphi 0, %s73
      %s91 = sphi 0, %s91
      %s93 = sphi 0, %s91
      %s94 = sphi 0, %s93
      %s108 = sphi 0, %s94
      %s112 = sphi 0, %s112
      %s114 = sphi 0, %s112
      %s115 = sphi 0, %s114
      %s129 = sphi 0, %s115
      %s133 = sphi 0, %s133
      %s135 = sphi 0, %s133
      %s136 = sphi 0, %s135
      %s150 = sphi 0, %s136
      %s156 = sphi 0, %s158
      %s159 = sphi 0, %s156
      %s160 = sphi 0, %s159
      %s176 = sphi 0, %s160
      %s182 = sphi 0, %s184
      %s185 = sphi 0, %s182
      %s186 = sphi 0, %s185
      %s202 = sphi 0, %s186
      %s210 = sphi 0, %s212
      %s213 = sphi 0, %s210
      %s214 = sphi 0, %s213
      %s230 = sphi 0, %s214
    $region4: #{tpu_custom_call.1} parent=1 // loop_header_branch
      %27 = sbr.rel (%p25) target = $region8
    $region5: #{tpu_custom_call.1} parent=1 // loop_body
      %s29 = ssub.s32 %s24, 1
      %s30 = ssub.s32 %s24, 2
      %s37 = sadd.s32 1, %s32
      %p38 = scmp.ge.s32.totalorder %s37, 2
      %s39 = scalar_select %p38, 0, %s37
      %s40 = sadd.s32 1, %s31
      %s41 = scalar_select %p38, %s40, %s31
      %p42 = scmp.ge.s32.totalorder %s41, 2
      %s43 = scalar_select %p42, 0, %s41
      %s44 = ssub.s32 %s31, %s43
      %p45 = scmp.eq.s32.totalorder %s44, 0
      %s47 = sadd.s32 %s46, 1
      %s48 = scalar_select %p45, %s46, %s47
      %p51 = pneg %p45
      %p52 = scmp.eq.s32.totalorder %s24, 3
      %p53 = por %p51, %p52
      %p54 = scmp.ne.s32.totalorder %s46, %s49
      %p55 = scmp.eq.s32.totalorder %s24, 0
      %p56 = por %p54, %p55
      %p57 = scmp.ne.s32.totalorder %s46, %s49
      %p58 = scmp.eq.s32.totalorder %s29, 3
      %p59 = por %p57, %p58
      %p60 = scmp.ne.s32.totalorder %s49, %s50
      %p61 = scmp.eq.s32.totalorder %s29, 0
      %p62 = por %p60, %p61
      %p63 = scmp.ne.s32.totalorder %s49, %s50
      %p64 = scmp.eq.s32.totalorder %s30, 3
      %p65 = por %p63, %p64
      %p67 = scmp.ne.s32.totalorder %s50, %s66
      %p68 = scmp.eq.s32.totalorder %s30, 0
      %p69 = por %p67, %p68
      %s71 = sadd.s32 %s70, 1
      %p74 = scmp.eq.s32.totalorder %s24, 3
      %p75 = scmp.ne.s32.totalorder %s70, %s72
      %p76 = scmp.eq.s32.totalorder %s24, 0
      %p77 = por %p75, %p76
      %p78 = scmp.ne.s32.totalorder %s70, %s72
      %p79 = scmp.eq.s32.totalorder %s29, 3
      %p80 = por %p78, %p79
      %p81 = scmp.ne.s32.totalorder %s72, %s73
      %p82 = scmp.eq.s32.totalorder %s29, 0
      %p83 = por %p81, %p82
      %p84 = scmp.ne.s32.totalorder %s72, %s73
      %p85 = scmp.eq.s32.totalorder %s30, 3
      %p86 = por %p84, %p85
      %p88 = scmp.ne.s32.totalorder %s73, %s87
      %p89 = scmp.eq.s32.totalorder %s30, 0
      %p90 = por %p88, %p89
      %s92 = sadd.s32 %s91, 1
      %p95 = scmp.eq.s32.totalorder %s24, 3
      %p96 = scmp.ne.s32.totalorder %s91, %s93
      %p97 = scmp.eq.s32.totalorder %s24, 0
      %p98 = por %p96, %p97
      %p99 = scmp.ne.s32.totalorder %s91, %s93
      %p100 = scmp.eq.s32.totalorder %s29, 3
      %p101 = por %p99, %p100
      %p102 = scmp.ne.s32.totalorder %s93, %s94
      %p103 = scmp.eq.s32.totalorder %s29, 0
      %p104 = por %p102, %p103
      %p105 = scmp.ne.s32.totalorder %s93, %s94
      %p106 = scmp.eq.s32.totalorder %s30, 3
      %p107 = por %p105, %p106
      %p109 = scmp.ne.s32.totalorder %s94, %s108
      %p110 = scmp.eq.s32.totalorder %s30, 0
      %p111 = por %p109, %p110
      %s113 = sadd.s32 %s112, 1
      %p116 = scmp.eq.s32.totalorder %s24, 3
      %p117 = scmp.ne.s32.totalorder %s112, %s114
      %p118 = scmp.eq.s32.totalorder %s24, 0
      %p119 = por %p117, %p118
      %p120 = scmp.ne.s32.totalorder %s112, %s114
      %p121 = scmp.eq.s32.totalorder %s29, 3
      %p122 = por %p120, %p121
      %p123 = scmp.ne.s32.totalorder %s114, %s115
      %p124 = scmp.eq.s32.totalorder %s29, 0
      %p125 = por %p123, %p124
      %p126 = scmp.ne.s32.totalorder %s114, %s115
      %p127 = scmp.eq.s32.totalorder %s30, 3
      %p128 = por %p126, %p127
      %p130 = scmp.ne.s32.totalorder %s115, %s129
      %p131 = scmp.eq.s32.totalorder %s30, 0
      %p132 = por %p130, %p131
      %s134 = sadd.s32 %s133, 1
      %p137 = scmp.eq.s32.totalorder %s24, 3
      %p138 = scmp.ne.s32.totalorder %s133, %s135
      %p139 = scmp.eq.s32.totalorder %s24, 0
      %p140 = por %p138, %p139
      %p141 = scmp.ne.s32.totalorder %s133, %s135
      %p142 = scmp.eq.s32.totalorder %s29, 3
      %p143 = por %p141, %p142
      %p144 = scmp.ne.s32.totalorder %s135, %s136
      %p145 = scmp.eq.s32.totalorder %s29, 0
      %p146 = por %p144, %p145
      %p147 = scmp.ne.s32.totalorder %s135, %s136
      %p148 = scmp.eq.s32.totalorder %s30, 3
      %p149 = por %p147, %p148
      %p151 = scmp.ne.s32.totalorder %s136, %s150
      %p152 = scmp.eq.s32.totalorder %s30, 0
      %p153 = por %p151, %p152
      %s154 = ssub.s32 %s32, %s39
      %p155 = scmp.eq.s32.totalorder %s154, 0
      %s157 = sadd.s32 %s156, 1
      %s158 = scalar_select %p155, %s156, %s157
      %p161 = pneg %p155
      %p162 = scmp.eq.s32.totalorder %s24, 3
      %p163 = por %p161, %p162
      %p164 = scmp.ne.s32.totalorder %s156, %s159
      %p165 = scmp.eq.s32.totalorder %s24, 0
      %p166 = por %p164, %p165
      %p167 = scmp.ne.s32.totalorder %s156, %s159
      %p168 = scmp.eq.s32.totalorder %s29, 3
      %p169 = por %p167, %p168
      %p170 = scmp.ne.s32.totalorder %s159, %s160
      %p171 = scmp.eq.s32.totalorder %s29, 0
      %p172 = por %p170, %p171
      %p173 = scmp.ne.s32.totalorder %s159, %s160
      %p174 = scmp.eq.s32.totalorder %s30, 3
      %p175 = por %p173, %p174
      %p177 = scmp.ne.s32.totalorder %s160, %s176
      %p178 = scmp.eq.s32.totalorder %s30, 0
      %p179 = por %p177, %p178
      %s180 = ssub.s32 %s32, %s39
      %p181 = scmp.eq.s32.totalorder %s180, 0
      %s183 = sadd.s32 %s182, 1
      %s184 = scalar_select %p181, %s182, %s183
      %p187 = pneg %p181
      %p188 = scmp.eq.s32.totalorder %s24, 3
      %p189 = por %p187, %p188
      %p190 = scmp.ne.s32.totalorder %s182, %s185
      %p191 = scmp.eq.s32.totalorder %s24, 0
      %p192 = por %p190, %p191
      %p193 = scmp.ne.s32.totalorder %s182, %s185
      %p194 = scmp.eq.s32.totalorder %s29, 3
      %p195 = por %p193, %p194
      %p196 = scmp.ne.s32.totalorder %s185, %s186
      %p197 = scmp.eq.s32.totalorder %s29, 0
      %p198 = por %p196, %p197
      %p199 = scmp.ne.s32.totalorder %s185, %s186
      %p200 = scmp.eq.s32.totalorder %s30, 3
      %p201 = por %p199, %p200
      %p203 = scmp.ne.s32.totalorder %s186, %s202
      %p204 = scmp.eq.s32.totalorder %s30, 0
      %p205 = por %p203, %p204
      %s206 = ssub.s32 %s31, %s43
      %s207 = ssub.s32 %s32, %s39
      %s208 = sor.u32 %s206, %s207
      %p209 = scmp.eq.s32.totalorder %s208, 0
      %s211 = sadd.s32 %s210, 1
      %s212 = scalar_select %p209, %s210, %s211
      %p215 = pneg %p209
      %p216 = scmp.eq.s32.totalorder %s24, 3
      %p217 = por %p215, %p216
      %p218 = scmp.ne.s32.totalorder %s210, %s213
      %p219 = scmp.eq.s32.totalorder %s24, 0
      %p220 = por %p218, %p219
      %p221 = scmp.ne.s32.totalorder %s210, %s213
      %p222 = scmp.eq.s32.totalorder %s29, 3
      %p223 = por %p221, %p222
      %p224 = scmp.ne.s32.totalorder %s213, %s214
      %p225 = scmp.eq.s32.totalorder %s29, 0
      %p226 = por %p224, %p225
      %p227 = scmp.ne.s32.totalorder %s213, %s214
      %p228 = scmp.eq.s32.totalorder %s30, 3
      %p229 = por %p227, %p228
      %p231 = scmp.ne.s32.totalorder %s214, %s230
      %p232 = scmp.eq.s32.totalorder %s30, 0
      %p233 = por %p231, %p232
      %p234 = scmp.le.s32.totalorder 1, %s24
      %p235 = scmp.lt.s32.totalorder %s24, 5
      %p236 = pnand %p234, %p235
      %p237 = pneg %p236
      // Predicated region
      $region9: #{tpu_custom_call.1} parent=5 // pred_check
        _
      $region10: #{tpu_custom_call.1} parent=5 // pred_check_branch
        %239 = sbr.rel (%p236) target = $region12
      $region11: #{tpu_custom_call.1} parent=5 // pred_region
        %s240 = ssub.s32 %s24, 1
        // Predicated region
        $region13: #{tpu_custom_call.1} parent=11 // pred_check
          %p241 = pneg %p83
        $region14: #{tpu_custom_call.1} parent=11 // pred_check_branch
          %243 = sbr.rel (%p241) target = $region16
        $region15: #{tpu_custom_call.1} parent=11 // pred_region
          %s245 = ssub.s32 1024, 1024
          %246 = vsyncadd [#allocation7], %s245
          %s247 = sshll.u32 [#allocation6], 4
          %s248 = int_to_ptr.vmem [resolvable:$true] %s247
          %253 = dma.hbm_to_vmem [thread:$0]  %s1, 1024, %s248, [#allocation7], 64, 64, 4
        $region16: #{tpu_custom_call.1} parent=11 // pred_fallthru
          _
        // Predicated region
        $region17: #{tpu_custom_call.1} parent=11 // pred_check
          %p254 = pneg %p104
        $region18: #{tpu_custom_call.1} parent=11 // pred_check_branch
          %256 = sbr.rel (%p254) target = $region20
        $region19: #{tpu_custom_call.1} parent=11 // pred_region
          %s258 = ssub.s32 16, 16
          %259 = vsyncadd [#allocation7], %s258
          %s261 = sshll.u32 [#allocation8], 4
          %s262 = int_to_ptr.vmem [resolvable:$true] %s261
          %264 = dma.hbm_to_vmem [thread:$0]  %s2, 16, %s262, [#allocation7]
        $region20: #{tpu_custom_call.1} parent=11 // pred_fallthru
          _
        // Predicated region
        $region21: #{tpu_custom_call.1} parent=11 // pred_check
          %p265 = pneg %p125
        $region22: #{tpu_custom_call.1} parent=11 // pred_check_branch
          %267 = sbr.rel (%p265) target = $region24
        $region23: #{tpu_custom_call.1} parent=11 // pred_region
          %s269 = ssub.s32 2048, 2048
          %270 = vsyncadd [#allocation10], %s269
          %s271 = sshll.u32 [#allocation9], 4
          %s272 = int_to_ptr.vmem [resolvable:$true] %s271
          %277 = dma.hbm_to_vmem [thread:$0]  %s3, 2048, %s272, [#allocation10], 64, 64, 4
        $region24: #{tpu_custom_call.1} parent=11 // pred_fallthru
          _
        // Predicated region
        $region25: #{tpu_custom_call.1} parent=11 // pred_check
          %p278 = pneg %p146
        $region26: #{tpu_custom_call.1} parent=11 // pred_check_branch
          %280 = sbr.rel (%p278) target = $region28
        $region27: #{tpu_custom_call.1} parent=11 // pred_region
          %s282 = ssub.s32 32, 32
          %283 = vsyncadd [#allocation10], %s282
          %s284 = sshll.u32 [#allocation11], 4
          %s285 = int_to_ptr.vmem [resolvable:$true] %s284
          %290 = dma.hbm_to_vmem [thread:$0]  %s4, 32, %s285, [#allocation10], 16, 16, 1
        $region28: #{tpu_custom_call.1} parent=11 // pred_fallthru
          _
      $region12: #{tpu_custom_call.1} parent=5 // pred_fallthru
        _
      %p291 = scmp.lt.s32.totalorder %s24, 4
      // Predicated region
      $region29: #{tpu_custom_call.1} parent=5 // pred_check
        %p292 = pneg %p291
      $region30: #{tpu_custom_call.1} parent=5 // pred_check_branch
        %294 = sbr.rel (%p292) target = $region32
      $region31: #{tpu_custom_call.1} parent=5 // pred_region
        // Predicated region
        $region33: #{tpu_custom_call.1} parent=31 // pred_check
          %p295 = pneg %p56
        $region34: #{tpu_custom_call.1} parent=31 // pred_check_branch
          %297 = sbr.rel (%p295) target = $region36
        $region35: #{tpu_custom_call.1} parent=31 // pred_region
          %s298 = sand.u32 %s46, 1
          %s299 = scalar_lea.sflag [#allocation4], %s298
          %s300 = sand.u32 %s46, 1
          %s301 = smul.addr %s300, 128
          %s302 = scalar_lea.vmem [#allocation3], %s301
          %s303 = smul.u32 32, %s31
          %s305 = ssub.s32 2048, 2048
          %306 = vsyncadd %s299, %s305
          %s307 = smul.addr %s303, 64
          %s308 = scalar_lea.hbm %s0, %s307
          %s309 = sshll.u32 %s302, 4
          %s310 = int_to_ptr.vmem [resolvable:$true] %s309
          %315 = dma.hbm_to_vmem [thread:$0]  %s308, 2048, %s310, %s299, 64, 64, 4
        $region36: #{tpu_custom_call.1} parent=31 // pred_fallthru
          _
        // Predicated region
        $region37: #{tpu_custom_call.1} parent=31 // pred_check
          %p316 = pneg %p166
        $region38: #{tpu_custom_call.1} parent=31 // pred_check_branch
          %318 = sbr.rel (%p316) target = $region40
        $region39: #{tpu_custom_call.1} parent=31 // pred_region
          %s319 = sand.u32 %s24, 1
          %s320 = scalar_lea.sflag [#allocation13], %s319
          %s321 = sand.u32 %s156, 1
          %s322 = smul.addr %s321, 256
          %s323 = scalar_lea.vmem [#allocation12], %s322
          %s324 = smul.u32 4, %s32
          %s326 = ssub.s32 4096, 4096
          %327 = vsyncadd %s320, %s326
          %s328 = smul.addr %s324, 64
          %s329 = scalar_lea.hbm %s5, %s328
          %s330 = sshll.u32 %s323, 4
          %s331 = int_to_ptr.vmem [resolvable:$true] %s330
          %336 = dma.hbm_to_vmem [thread:$0]  %s329, 4096, %s331, %s320, 512, 256, 16
        $region40: #{tpu_custom_call.1} parent=31 // pred_fallthru
          _
        // Predicated region
        $region41: #{tpu_custom_call.1} parent=31 // pred_check
          %p337 = pneg %p192
        $region42: #{tpu_custom_call.1} parent=31 // pred_check_branch
          %339 = sbr.rel (%p337) target = $region44
        $region43: #{tpu_custom_call.1} parent=31 // pred_region
          %s340 = sand.u32 %s24, 1
          %s341 = scalar_lea.sflag [#allocation13], %s340
          %s342 = sand.u32 %s182, 1
          %s343 = smul.addr %s342, 4
          %s344 = scalar_lea.vmem [#allocation14], %s343
          %s345 = smul.u32 4, %s32
          %s347 = ssub.s32 64, 64
          %348 = vsyncadd %s341, %s347
          %s349 = smul.addr %s345, 16
          %s350 = scalar_lea.hbm %s6, %s349
          %s352 = sshll.u32 %s344, 4
          %s353 = int_to_ptr.vmem [resolvable:$true] %s352
          %355 = dma.hbm_to_vmem [thread:$0]  %s350, 64, %s353, %s341
        $region44: #{tpu_custom_call.1} parent=31 // pred_fallthru
          _
      $region32: #{tpu_custom_call.1} parent=5 // pred_fallthru
        _
      %p356 = scmp.le.s32.totalorder 1, %s24
      %p357 = scmp.lt.s32.totalorder %s24, 5
      %p358 = pnand %p356, %p357
      %p359 = pneg %p358
      // Predicated region
      $region45: #{tpu_custom_call.1} parent=5 // pred_check
        _
      $region46: #{tpu_custom_call.1} parent=5 // pred_check_branch
        %361 = sbr.rel (%p358) target = $region48
      $region47: #{tpu_custom_call.1} parent=5 // pred_region
        %s362 = ssub.s32 %s24, 1
        %s363 = sand.u32 %s49, 1
        %s364 = scalar_lea.sflag [#allocation4], %s363
        %s365 = sand.u32 %s49, 1
        %s366 = smul.addr %s365, 128
        %s367 = scalar_lea.vmem [#allocation3], %s366
        // Predicated region
        $region49: #{tpu_custom_call.1} parent=47 // pred_check
          %p368 = pneg %p62
        $region50: #{tpu_custom_call.1} parent=47 // pred_check_branch
          %370 = sbr.rel (%p368) target = $region52
        $region51: #{tpu_custom_call.1} parent=47 // pred_region
          %371 = dma.done %s364, 2048
        $region52: #{tpu_custom_call.1} parent=47 // pred_fallthru
          _
        // Predicated region
        $region53: #{tpu_custom_call.1} parent=47 // pred_check
          %p372 = pneg %p83
        $region54: #{tpu_custom_call.1} parent=47 // pred_check_branch
          %374 = sbr.rel (%p372) target = $region56
        $region55: #{tpu_custom_call.1} parent=47 // pred_region
          %375 = dma.done [#allocation7], 1024
        $region56: #{tpu_custom_call.1} parent=47 // pred_fallthru
          _
        // Predicated region
        $region57: #{tpu_custom_call.1} parent=47 // pred_check
          %p376 = pneg %p104
        $region58: #{tpu_custom_call.1} parent=47 // pred_check_branch
          %378 = sbr.rel (%p376) target = $region60
        $region59: #{tpu_custom_call.1} parent=47 // pred_region
          %379 = dma.done [#allocation7], 16
        $region60: #{tpu_custom_call.1} parent=47 // pred_fallthru
          _
        // Predicated region
        $region61: #{tpu_custom_call.1} parent=47 // pred_check
          %p380 = pneg %p125
        $region62: #{tpu_custom_call.1} parent=47 // pred_check_branch
          %382 = sbr.rel (%p380) target = $region64
        $region63: #{tpu_custom_call.1} parent=47 // pred_region
          %383 = dma.done [#allocation10], 2048
        $region64: #{tpu_custom_call.1} parent=47 // pred_fallthru
          _
        // Predicated region
        $region65: #{tpu_custom_call.1} parent=47 // pred_check
          %p384 = pneg %p146
        $region66: #{tpu_custom_call.1} parent=47 // pred_check_branch
          %386 = sbr.rel (%p384) target = $region68
        $region67: #{tpu_custom_call.1} parent=47 // pred_region
          %387 = dma.done [#allocation10], 32
        $region68: #{tpu_custom_call.1} parent=47 // pred_fallthru
          _
        %s388 = sand.u32 %s29, 1
        %s389 = scalar_lea.sflag [#allocation13], %s388
        %s390 = sand.u32 %s159, 1
        %s391 = smul.addr %s390, 256
        %s392 = scalar_lea.vmem [#allocation12], %s391
        // Predicated region
        $region69: #{tpu_custom_call.1} parent=47 // pred_check
          %p393 = pneg %p172
        $region70: #{tpu_custom_call.1} parent=47 // pred_check_branch
          %395 = sbr.rel (%p393) target = $region72
        $region71: #{tpu_custom_call.1} parent=47 // pred_region
          %396 = dma.done %s389, 4096
        $region72: #{tpu_custom_call.1} parent=47 // pred_fallthru
          _
        %s397 = sand.u32 %s29, 1
        %s398 = scalar_lea.sflag [#allocation13], %s397
        %s399 = sand.u32 %s185, 1
        %s400 = smul.addr %s399, 4
        %s401 = scalar_lea.vmem [#allocation14], %s400
        // Predicated region
        $region73: #{tpu_custom_call.1} parent=47 // pred_check
          %p402 = pneg %p198
        $region74: #{tpu_custom_call.1} parent=47 // pred_check_branch
          %404 = sbr.rel (%p402) target = $region76
        $region75: #{tpu_custom_call.1} parent=47 // pred_region
          %405 = dma.done %s398, 64
        $region76: #{tpu_custom_call.1} parent=47 // pred_fallthru
          _
        %s406 = sand.u32 %s49, 1
        %s407 = scalar_lea.sflag [#allocation4], %s406
        %s408 = sand.u32 %s49, 1
        %s409 = smul.addr %s408, 128
        %s410 = scalar_lea.vmem [#allocation3], %s409
        %p411 = pneg %p62
        %p412 = pneg %p59
        %p413 = pneg %p83
        %p414 = pneg %p80
        %p415 = pneg %p104
        %p416 = pneg %p101
        %p417 = pneg %p125
        %p418 = pneg %p122
        %p419 = pneg %p146
        %p420 = pneg %p143
        %s421 = sand.u32 %s29, 1
        %s422 = scalar_lea.sflag [#allocation13], %s421
        %s423 = sand.u32 %s159, 1
        %s424 = smul.addr %s423, 256
        %s425 = scalar_lea.vmem [#allocation12], %s424
        %p426 = pneg %p172
        %p427 = pneg %p169
        %s428 = sand.u32 %s29, 1
        %s429 = scalar_lea.sflag [#allocation13], %s428
        %s430 = sand.u32 %s185, 1
        %s431 = smul.addr %s430, 4
        %s432 = scalar_lea.vmem [#allocation14], %s431
        %p433 = pneg %p198
        %p434 = pneg %p195
        %p435 = pneg %p226
        %p436 = pneg %p223
        %s437 = sand.u32 %s213, 1
        %s438 = scalar_lea.sflag [#allocation5], %s437
        %s439 = sand.u32 %s213, 1
        %s440 = smul.addr %s439, 1024
        %s441 = scalar_lea.vmem [#allocation15], %s440
        %s442 = smul.u32 32, %s33
        %s443 = smul.u32 4, %s34
        %s444 = smul.u32 4, %s34
        %s445 = smul.u32 32, %s33
        %s446 = smul.u32 4, %s34
        %p448 = scmp.eq.s32.totalorder %s34, 0
        // Predicated region
        $region77: #{tpu_custom_call.1} parent=47 // pred_check
          %p449 = pneg %p448
        $region78: #{tpu_custom_call.1} parent=47 // pred_check_branch
          %451 = sbr.rel (%p449) target = $region80
        $region79: #{tpu_custom_call.1} parent=47 // pred_region
          %v452 = vld [vmem:[%s367] sm:$0xf]
          %v453 = vld [vmem:[%s367 + $0x4] sm:$0xf]
          %v454 = vld [vmem:[%s367 + $0x8] sm:$0xf]
          %v455 = vld [vmem:[%s367 + $0xc] sm:$0xf]
          %v456 = vld [vmem:[%s367 + $0x10] sm:$0xf]
          %v457 = vld [vmem:[%s367 + $0x14] sm:$0xf]
          %v458 = vld [vmem:[%s367 + $0x18] sm:$0xf]
          %v459 = vld [vmem:[%s367 + $0x1c] sm:$0xf]
          %v460 = vld [vmem:[%s367 + $0x20] sm:$0xf]
          %v461 = vld [vmem:[%s367 + $0x24] sm:$0xf]
          %v462 = vld [vmem:[%s367 + $0x28] sm:$0xf]
          %v463 = vld [vmem:[%s367 + $0x2c] sm:$0xf]
          %v464 = vld [vmem:[%s367 + $0x30] sm:$0xf]
          %v465 = vld [vmem:[%s367 + $0x34] sm:$0xf]
          %v466 = vld [vmem:[%s367 + $0x38] sm:$0xf]
          %v467 = vld [vmem:[%s367 + $0x3c] sm:$0xf]
          %v468 = vld [vmem:[%s367 + $0x40] sm:$0xf]
          %v469 = vld [vmem:[%s367 + $0x44] sm:$0xf]
          %v470 = vld [vmem:[%s367 + $0x48] sm:$0xf]
          %v471 = vld [vmem:[%s367 + $0x4c] sm:$0xf]
          %v472 = vld [vmem:[%s367 + $0x50] sm:$0xf]
          %v473 = vld [vmem:[%s367 + $0x54] sm:$0xf]
          %v474 = vld [vmem:[%s367 + $0x58] sm:$0xf]
          %v475 = vld [vmem:[%s367 + $0x5c] sm:$0xf]
          %v476 = vld [vmem:[%s367 + $0x60] sm:$0xf]
          %v477 = vld [vmem:[%s367 + $0x64] sm:$0xf]
          %v478 = vld [vmem:[%s367 + $0x68] sm:$0xf]
          %v479 = vld [vmem:[%s367 + $0x6c] sm:$0xf]
          %v480 = vld [vmem:[%s367 + $0x70] sm:$0xf]
          %v481 = vld [vmem:[%s367 + $0x74] sm:$0xf]
          %v482 = vld [vmem:[%s367 + $0x78] sm:$0xf]
          %v483 = vld [vmem:[%s367 + $0x7c] sm:$0xf]
          %v484 = vld [vmem:[#allocation6] sm:$0xf]
          %v485 = vld [vmem:[#allocation6 + $0x4] sm:$0xf]
          %v486 = vld [vmem:[#allocation6 + $0x8] sm:$0xf]
          %v487 = vld [vmem:[#allocation6 + $0xc] sm:$0xf]
          %v488 = vld [vmem:[#allocation6 + $0x10] sm:$0xf]
          %v489 = vld [vmem:[#allocation6 + $0x14] sm:$0xf]
          %v490 = vld [vmem:[#allocation6 + $0x18] sm:$0xf]
          %v491 = vld [vmem:[#allocation6 + $0x1c] sm:$0xf]
          %v492 = vld [vmem:[#allocation6 + $0x20] sm:$0xf]
          %v493 = vld [vmem:[#allocation6 + $0x24] sm:$0xf]
          %v494 = vld [vmem:[#allocation6 + $0x28] sm:$0xf]
          %v495 = vld [vmem:[#allocation6 + $0x2c] sm:$0xf]
          %v496 = vld [vmem:[#allocation6 + $0x30] sm:$0xf]
          %v497 = vld [vmem:[#allocation6 + $0x34] sm:$0xf]
          %v498 = vld [vmem:[#allocation6 + $0x38] sm:$0xf]
          %v499 = vld [vmem:[#allocation6 + $0x3c] sm:$0xf]
          %v500 = vld [vmem:[#allocation8] sm:$0x1]
          %v502 = vlaneseq
          %v503 = vshrl.u32 %v502, 7
          %v504 = vsub.s32 0, %v503
          %v505 = vrot.slane %v500, %v504
          %v539 = vunpack.c.l.b16 %v452
          %v540 = vunpack.c.l.b16 %v453
          %v541 = vunpack.c.l.b16 %v454
          %v542 = vunpack.c.l.b16 %v455
          %v543 = vunpack.c.l.b16 %v456
          %v544 = vunpack.c.l.b16 %v457
          %v545 = vunpack.c.l.b16 %v458
          %v546 = vunpack.c.l.b16 %v459
          %v547 = vunpack.c.l.b16 %v460
          %v548 = vunpack.c.l.b16 %v461
          %v549 = vunpack.c.l.b16 %v462
          %v550 = vunpack.c.l.b16 %v463
          %v551 = vunpack.c.l.b16 %v464
          %v552 = vunpack.c.l.b16 %v465
          %v553 = vunpack.c.l.b16 %v466
          %v554 = vunpack.c.l.b16 %v467
          %v555 = vunpack.c.l.b16 %v468
          %v556 = vunpack.c.l.b16 %v469
          %v557 = vunpack.c.l.b16 %v470
          %v558 = vunpack.c.l.b16 %v471
          %v559 = vunpack.c.l.b16 %v472
          %v560 = vunpack.c.l.b16 %v473
          %v561 = vunpack.c.l.b16 %v474
          %v562 = vunpack.c.l.b16 %v475
          %v563 = vunpack.c.l.b16 %v476
          %v564 = vunpack.c.l.b16 %v477
          %v565 = vunpack.c.l.b16 %v478
          %v566 = vunpack.c.l.b16 %v479
          %v567 = vunpack.c.l.b16 %v480
          %v568 = vunpack.c.l.b16 %v481
          %v569 = vunpack.c.l.b16 %v482
          %v570 = vunpack.c.l.b16 %v483
          %v571 = vpack.c.b16 %v540, %v539
          %v572 = vpack.c.b16 %v542, %v541
          %v573 = vpack.c.b16 %v544, %v543
          %v574 = vpack.c.b16 %v546, %v545
          %v575 = vpack.c.b16 %v548, %v547
          %v576 = vpack.c.b16 %v550, %v549
          %v577 = vpack.c.b16 %v552, %v551
          %v578 = vpack.c.b16 %v554, %v553
          %v579 = vpack.c.b16 %v556, %v555
          %v580 = vpack.c.b16 %v558, %v557
          %v581 = vpack.c.b16 %v560, %v559
          %v582 = vpack.c.b16 %v562, %v561
          %v583 = vpack.c.b16 %v564, %v563
          %v584 = vpack.c.b16 %v566, %v565
          %v585 = vpack.c.b16 %v568, %v567
          %v586 = vpack.c.b16 %v570, %v569
          %v619 = vunpack.c.l.b16 %v484
          %v620 = vunpack.c.l.b16 %v485
          %v621 = vunpack.c.l.b16 %v486
          %v622 = vunpack.c.l.b16 %v487
          %v623 = vunpack.c.l.b16 %v488
          %v624 = vunpack.c.l.b16 %v489
          %v625 = vunpack.c.l.b16 %v490
          %v626 = vunpack.c.l.b16 %v491
          %v627 = vunpack.c.l.b16 %v492
          %v628 = vunpack.c.l.b16 %v493
          %v629 = vunpack.c.l.b16 %v494
          %v630 = vunpack.c.l.b16 %v495
          %v631 = vunpack.c.l.b16 %v496
          %v632 = vunpack.c.l.b16 %v497
          %v633 = vunpack.c.l.b16 %v498
          %v634 = vunpack.c.l.b16 %v499
          %v635 = vpack.c.b16 %v620, %v619
          %v636 = vpack.c.b16 %v622, %v621
          %v637 = vpack.c.b16 %v624, %v623
          %v638 = vpack.c.b16 %v626, %v625
          %v639 = vpack.c.b16 %v628, %v627
          %v640 = vpack.c.b16 %v630, %v629
          %v641 = vpack.c.b16 %v632, %v631
          %v642 = vpack.c.b16 %v634, %v633
          %651 = vmatprep.subr.bf16.mxu0 0
          %652 = vmatpush1.bf16.msra.mxu0 %v642
          %653 = vmatprep.subr.bf16.mxu0 0
          %654 = vmatpush1.bf16.msra.mxu0 %v641
          %655 = vmatprep.subr.bf16.mxu0 0
          %656 = vmatpush1.bf16.msra.mxu0 %v640
          %657 = vmatprep.subr.bf16.mxu0 0
          %658 = vmatpush1.bf16.msra.mxu0 %v639
          %659 = vmatprep.subr.bf16.mxu0 0
          %660 = vmatpush1.bf16.msra.mxu0 %v638
          %661 = vmatprep.subr.bf16.mxu0 0
          %662 = vmatpush1.bf16.msra.mxu0 %v637
          %663 = vmatprep.subr.bf16.mxu0 0
          %664 = vmatpush1.bf16.msra.mxu0 %v636
          %665 = vmatprep.subr.bf16.mxu0 0
          %666 = vmatpush1.bf16.msra.mxu0 %v635
          %667 = vmatprep.subr.bf16.mxu0 0
          %668 = vmatpush2.bf16.msra.mxu0 0
          %669 = vmatprep.subr.bf16.mxu0 0
          %670 = vmatpush2.bf16.msra.mxu0 0
          %671 = vmatprep.subr.bf16.mxu0 0
          %672 = vmatpush2.bf16.msra.mxu0 0
          %673 = vmatprep.subr.bf16.mxu0 0
          %674 = vmatpush2.bf16.msra.mxu0 0
          %675 = vmatprep.subr.bf16.mxu0 0
          %676 = vmatpush2.bf16.msra.mxu0 0
          %677 = vmatprep.subr.bf16.mxu0 0
          %678 = vmatpush2.bf16.msra.mxu0 0
          %679 = vmatprep.subr.bf16.mxu0 0
          %680 = vmatpush2.bf16.msra.mxu0 0
          %681 = vmatprep.subr.bf16.mxu0 0
          %682 = vmatpush2.bf16.msra.mxu0 0
          %683 = vmatprep.mubr.bf16.mxu0 0
          %684 = vmatmul.mubr.bf16.gmra.mxu0 %v571
          %v685 = vpop.f32.mrf.mxu0
          %v686 = vadd.f32 %v505, %v685
          %v687 = vpop.f32.mrf.mxu0
          %v688 = vpop.f32.mrf.mxu0
          %v689 = vadd.f32 %v505, %v688
          %v690 = vpop.f32.mrf.mxu0
          %691 = vmatprep.mubr.bf16.mxu0 0
          %692 = vmatmul.mubr.bf16.gmra.mxu0 %v572
          %v693 = vpop.f32.mrf.mxu0
          %v694 = vadd.f32 %v505, %v693
          %v695 = vpop.f32.mrf.mxu0
          %v696 = vpop.f32.mrf.mxu0
          %v697 = vadd.f32 %v505, %v696
          %v698 = vpop.f32.mrf.mxu0
          %699 = vmatprep.mubr.bf16.mxu0 0
          %700 = vmatmul.mubr.bf16.gmra.mxu0 %v573
          %v701 = vpop.f32.mrf.mxu0
          %v702 = vadd.f32 %v505, %v701
          %v703 = vpop.f32.mrf.mxu0
          %v704 = vpop.f32.mrf.mxu0
          %v705 = vadd.f32 %v505, %v704
          %v706 = vpop.f32.mrf.mxu0
          %707 = vmatprep.mubr.bf16.mxu0 0
          %708 = vmatmul.mubr.bf16.gmra.mxu0 %v574
          %v709 = vpop.f32.mrf.mxu0
          %v710 = vadd.f32 %v505, %v709
          %v711 = vpop.f32.mrf.mxu0
          %v712 = vpop.f32.mrf.mxu0
          %v713 = vadd.f32 %v505, %v712
          %v714 = vpop.f32.mrf.mxu0
          %715 = vmatprep.mubr.bf16.mxu0 0
          %716 = vmatmul.mubr.bf16.gmra.mxu0 %v575
          %v717 = vpop.f32.mrf.mxu0
          %v718 = vadd.f32 %v505, %v717
          %v719 = vpop.f32.mrf.mxu0
          %v720 = vpop.f32.mrf.mxu0
          %v721 = vadd.f32 %v505, %v720
          %v722 = vpop.f32.mrf.mxu0
          %723 = vmatprep.mubr.bf16.mxu0 0
          %724 = vmatmul.mubr.bf16.gmra.mxu0 %v576
          %v725 = vpop.f32.mrf.mxu0
          %v726 = vadd.f32 %v505, %v725
          %v727 = vpop.f32.mrf.mxu0
          %v728 = vpop.f32.mrf.mxu0
          %v729 = vadd.f32 %v505, %v728
          %v730 = vpop.f32.mrf.mxu0
          %731 = vmatprep.mubr.bf16.mxu0 0
          %732 = vmatmul.mubr.bf16.gmra.mxu0 %v577
          %v733 = vpop.f32.mrf.mxu0
          %v734 = vadd.f32 %v505, %v733
          %v735 = vpop.f32.mrf.mxu0
          %v736 = vpop.f32.mrf.mxu0
          %v737 = vadd.f32 %v505, %v736
          %v738 = vpop.f32.mrf.mxu0
          %739 = vmatprep.mubr.bf16.mxu0 0
          %740 = vmatmul.mubr.bf16.gmra.mxu0 %v578
          %v741 = vpop.f32.mrf.mxu0
          %v742 = vadd.f32 %v505, %v741
          %v743 = vpop.f32.mrf.mxu0
          %v744 = vpop.f32.mrf.mxu0
          %v745 = vadd.f32 %v505, %v744
          %v746 = vpop.f32.mrf.mxu0
          %747 = vmatprep.mubr.bf16.mxu0 0
          %748 = vmatmul.mubr.bf16.gmra.mxu0 %v579
          %v749 = vpop.f32.mrf.mxu0
          %v750 = vadd.f32 %v505, %v749
          %v751 = vpop.f32.mrf.mxu0
          %v752 = vpop.f32.mrf.mxu0
          %v753 = vadd.f32 %v505, %v752
          %v754 = vpop.f32.mrf.mxu0
          %755 = vmatprep.mubr.bf16.mxu0 0
          %756 = vmatmul.mubr.bf16.gmra.mxu0 %v580
          %v757 = vpop.f32.mrf.mxu0
          %v758 = vadd.f32 %v505, %v757
          %v759 = vpop.f32.mrf.mxu0
          %v760 = vpop.f32.mrf.mxu0
          %v761 = vadd.f32 %v505, %v760
          %v762 = vpop.f32.mrf.mxu0
          %763 = vmatprep.mubr.bf16.mxu0 0
          %764 = vmatmul.mubr.bf16.gmra.mxu0 %v581
          %v765 = vpop.f32.mrf.mxu0
          %v766 = vadd.f32 %v505, %v765
          %v767 = vpop.f32.mrf.mxu0
          %v768 = vpop.f32.mrf.mxu0
          %v769 = vadd.f32 %v505, %v768
          %v770 = vpop.f32.mrf.mxu0
          %771 = vmatprep.mubr.bf16.mxu0 0
          %772 = vmatmul.mubr.bf16.gmra.mxu0 %v582
          %v773 = vpop.f32.mrf.mxu0
          %v774 = vadd.f32 %v505, %v773
          %v775 = vpop.f32.mrf.mxu0
          %v776 = vpop.f32.mrf.mxu0
          %v777 = vadd.f32 %v505, %v776
          %v778 = vpop.f32.mrf.mxu0
          %779 = vmatprep.mubr.bf16.mxu0 0
          %780 = vmatmul.mubr.bf16.gmra.mxu0 %v583
          %v781 = vpop.f32.mrf.mxu0
          %v782 = vadd.f32 %v505, %v781
          %v783 = vpop.f32.mrf.mxu0
          %v784 = vpop.f32.mrf.mxu0
          %v785 = vadd.f32 %v505, %v784
          %v786 = vpop.f32.mrf.mxu0
          %787 = vmatprep.mubr.bf16.mxu0 0
          %788 = vmatmul.mubr.bf16.gmra.mxu0 %v584
          %v789 = vpop.f32.mrf.mxu0
          %v790 = vadd.f32 %v505, %v789
          %v791 = vpop.f32.mrf.mxu0
          %v792 = vpop.f32.mrf.mxu0
          %v793 = vadd.f32 %v505, %v792
          %v794 = vpop.f32.mrf.mxu0
          %795 = vmatprep.mubr.bf16.mxu0 0
          %796 = vmatmul.mubr.bf16.gmra.mxu0 %v585
          %v797 = vpop.f32.mrf.mxu0
          %v798 = vadd.f32 %v505, %v797
          %v799 = vpop.f32.mrf.mxu0
          %v800 = vpop.f32.mrf.mxu0
          %v801 = vadd.f32 %v505, %v800
          %v802 = vpop.f32.mrf.mxu0
          %803 = vmatprep.mubr.bf16.mxu0 0
          %804 = vmatmul.mubr.bf16.gmra.mxu0 %v586
          %v805 = vpop.f32.mrf.mxu0
          %v806 = vadd.f32 %v505, %v805
          %v807 = vpop.f32.mrf.mxu0
          %v808 = vpop.f32.mrf.mxu0
          %v809 = vadd.f32 %v505, %v808
          %v810 = vpop.f32.mrf.mxu0
          %811 = vdwg.mxu0
          %v812 = vtanh.pop %v686
          %v813 = vtanh.pop %v689
          %v814 = vtanh.pop %v694
          %v815 = vtanh.pop %v697
          %v816 = vtanh.pop %v702
          %v817 = vtanh.pop %v705
          %v818 = vtanh.pop %v710
          %v819 = vtanh.pop %v713
          %v820 = vtanh.pop %v718
          %v821 = vtanh.pop %v721
          %v822 = vtanh.pop %v726
          %v823 = vtanh.pop %v729
          %v824 = vtanh.pop %v734
          %v825 = vtanh.pop %v737
          %v826 = vtanh.pop %v742
          %v827 = vtanh.pop %v745
          %v828 = vtanh.pop %v750
          %v829 = vtanh.pop %v753
          %v830 = vtanh.pop %v758
          %v831 = vtanh.pop %v761
          %v832 = vtanh.pop %v766
          %v833 = vtanh.pop %v769
          %v834 = vtanh.pop %v774
          %v835 = vtanh.pop %v777
          %v836 = vtanh.pop %v782
          %v837 = vtanh.pop %v785
          %v838 = vtanh.pop %v790
          %v839 = vtanh.pop %v793
          %v840 = vtanh.pop %v798
          %v841 = vtanh.pop %v801
          %v842 = vtanh.pop %v806
          %v843 = vtanh.pop %v809
          %v844 = vpack.c.bf16 %v813, %v812
          %v845 = vpack.c.bf16 %v815, %v814
          %v846 = vpack.c.bf16 %v817, %v816
          %v847 = vpack.c.bf16 %v819, %v818
          %v848 = vpack.c.bf16 %v821, %v820
          %v849 = vpack.c.bf16 %v823, %v822
          %v850 = vpack.c.bf16 %v825, %v824
          %v851 = vpack.c.bf16 %v827, %v826
          %v852 = vpack.c.bf16 %v829, %v828
          %v853 = vpack.c.bf16 %v831, %v830
          %v854 = vpack.c.bf16 %v833, %v832
          %v855 = vpack.c.bf16 %v835, %v834
          %v856 = vpack.c.bf16 %v837, %v836
          %v857 = vpack.c.bf16 %v839, %v838
          %v858 = vpack.c.bf16 %v841, %v840
          %v859 = vpack.c.bf16 %v843, %v842
          %v860 = vld [vmem:[#allocation9] sm:$0xf]
          %v861 = vld [vmem:[#allocation9 + $0x4] sm:$0xf]
          %v862 = vld [vmem:[#allocation9 + $0x8] sm:$0xf]
          %v863 = vld [vmem:[#allocation9 + $0xc] sm:$0xf]
          %v864 = vld [vmem:[#allocation9 + $0x10] sm:$0xf]
          %v865 = vld [vmem:[#allocation9 + $0x14] sm:$0xf]
          %v866 = vld [vmem:[#allocation9 + $0x18] sm:$0xf]
          %v867 = vld [vmem:[#allocation9 + $0x1c] sm:$0xf]
          %v868 = vld [vmem:[#allocation9 + $0x20] sm:$0xf]
          %v869 = vld [vmem:[#allocation9 + $0x24] sm:$0xf]
          %v870 = vld [vmem:[#allocation9 + $0x28] sm:$0xf]
          %v871 = vld [vmem:[#allocation9 + $0x2c] sm:$0xf]
          %v872 = vld [vmem:[#allocation9 + $0x30] sm:$0xf]
          %v873 = vld [vmem:[#allocation9 + $0x34] sm:$0xf]
          %v874 = vld [vmem:[#allocation9 + $0x38] sm:$0xf]
          %v875 = vld [vmem:[#allocation9 + $0x3c] sm:$0xf]
          %v876 = vld [vmem:[#allocation11] sm:$0x1]
          %v878 = vlaneseq
          %v879 = vshrl.u32 %v878, 7
          %v880 = vsub.s32 0, %v879
          %v881 = vrot.slane %v876, %v880
          %v899 = vunpack.c.l.b16 %v860
          %v900 = vunpack.c.l.b16 %v861
          %v901 = vunpack.c.l.b16 %v862
          %v902 = vunpack.c.l.b16 %v863
          %v903 = vunpack.c.l.b16 %v864
          %v904 = vunpack.c.l.b16 %v865
          %v905 = vunpack.c.l.b16 %v866
          %v906 = vunpack.c.l.b16 %v867
          %v907 = vunpack.c.l.b16 %v868
          %v908 = vunpack.c.l.b16 %v869
          %v909 = vunpack.c.l.b16 %v870
          %v910 = vunpack.c.l.b16 %v871
          %v911 = vunpack.c.l.b16 %v872
          %v912 = vunpack.c.l.b16 %v873
          %v913 = vunpack.c.l.b16 %v874
          %v914 = vunpack.c.l.b16 %v875
          %v915 = vpack.c.b16 %v900, %v899
          %v916 = vpack.c.b16 %v902, %v901
          %v917 = vpack.c.b16 %v904, %v903
          %v918 = vpack.c.b16 %v906, %v905
          %v919 = vpack.c.b16 %v908, %v907
          %v920 = vpack.c.b16 %v910, %v909
          %v921 = vpack.c.b16 %v912, %v911
          %v922 = vpack.c.b16 %v914, %v913
          %931 = vmatprep.subr.bf16.mxu0 0
          %932 = vmatpush1.bf16.msra.mxu0 %v922
          %933 = vmatprep.subr.bf16.mxu0 0
          %934 = vmatpush1.bf16.msra.mxu0 %v921
          %935 = vmatprep.subr.bf16.mxu0 0
          %936 = vmatpush1.bf16.msra.mxu0 %v920
          %937 = vmatprep.subr.bf16.mxu0 0
          %938 = vmatpush1.bf16.msra.mxu0 %v919
          %939 = vmatprep.subr.bf16.mxu0 0
          %940 = vmatpush1.bf16.msra.mxu0 %v918
          %941 = vmatprep.subr.bf16.mxu0 0
          %942 = vmatpush1.bf16.msra.mxu0 %v917
          %943 = vmatprep.subr.bf16.mxu0 0
          %944 = vmatpush1.bf16.msra.mxu0 %v916
          %945 = vmatprep.subr.bf16.mxu0 0
          %946 = vmatpush1.bf16.msra.mxu0 %v915
          %947 = vmatprep.subr.bf16.mxu0 0
          %948 = vmatpush2.bf16.msra.mxu0 0
          %949 = vmatprep.subr.bf16.mxu0 0
          %950 = vmatpush2.bf16.msra.mxu0 0
          %951 = vmatprep.subr.bf16.mxu0 0
          %952 = vmatpush2.bf16.msra.mxu0 0
          %953 = vmatprep.subr.bf16.mxu0 0
          %954 = vmatpush2.bf16.msra.mxu0 0
          %955 = vmatprep.subr.bf16.mxu0 0
          %956 = vmatpush2.bf16.msra.mxu0 0
          %957 = vmatprep.subr.bf16.mxu0 0
          %958 = vmatpush2.bf16.msra.mxu0 0
          %959 = vmatprep.subr.bf16.mxu0 0
          %960 = vmatpush2.bf16.msra.mxu0 0
          %961 = vmatprep.subr.bf16.mxu0 0
          %962 = vmatpush2.bf16.msra.mxu0 0
          %963 = vmatprep.mubr.bf16.mxu0 0
          %964 = vmatmul.mubr.bf16.gmra.mxu0 %v844
          %v965 = vpop.f32.mrf.mxu0
          %v966 = vadd.f32 %v881, %v965
          %v967 = vpop.f32.mrf.mxu0
          %v968 = vpop.f32.mrf.mxu0
          %v969 = vadd.f32 %v881, %v968
          %v970 = vpop.f32.mrf.mxu0
          %971 = vmatprep.mubr.bf16.mxu0 0
          %972 = vmatmul.mubr.bf16.gmra.mxu0 %v845
          %v973 = vpop.f32.mrf.mxu0
          %v974 = vadd.f32 %v881, %v973
          %v975 = vpop.f32.mrf.mxu0
          %v976 = vpop.f32.mrf.mxu0
          %v977 = vadd.f32 %v881, %v976
          %v978 = vpop.f32.mrf.mxu0
          %979 = vmatprep.mubr.bf16.mxu0 0
          %980 = vmatmul.mubr.bf16.gmra.mxu0 %v846
          %v981 = vpop.f32.mrf.mxu0
          %v982 = vadd.f32 %v881, %v981
          %v983 = vpop.f32.mrf.mxu0
          %v984 = vpop.f32.mrf.mxu0
          %v985 = vadd.f32 %v881, %v984
          %v986 = vpop.f32.mrf.mxu0
          %987 = vmatprep.mubr.bf16.mxu0 0
          %988 = vmatmul.mubr.bf16.gmra.mxu0 %v847
          %v989 = vpop.f32.mrf.mxu0
          %v990 = vadd.f32 %v881, %v989
          %v991 = vpop.f32.mrf.mxu0
          %v992 = vpop.f32.mrf.mxu0
          %v993 = vadd.f32 %v881, %v992
          %v994 = vpop.f32.mrf.mxu0
          %995 = vmatprep.mubr.bf16.mxu0 0
          %996 = vmatmul.mubr.bf16.gmra.mxu0 %v848
          %v997 = vpop.f32.mrf.mxu0
          %v998 = vadd.f32 %v881, %v997
          %v999 = vpop.f32.mrf.mxu0
          %v1000 = vpop.f32.mrf.mxu0
          %v1001 = vadd.f32 %v881, %v1000
          %v1002 = vpop.f32.mrf.mxu0
          %1003 = vmatprep.mubr.bf16.mxu0 0
          %1004 = vmatmul.mubr.bf16.gmra.mxu0 %v849
          %v1005 = vpop.f32.mrf.mxu0
          %v1006 = vadd.f32 %v881, %v1005
          %v1007 = vpop.f32.mrf.mxu0
          %v1008 = vpop.f32.mrf.mxu0
          %v1009 = vadd.f32 %v881, %v1008
          %v1010 = vpop.f32.mrf.mxu0
          %1011 = vmatprep.mubr.bf16.mxu0 0
          %1012 = vmatmul.mubr.bf16.gmra.mxu0 %v850
          %v1013 = vpop.f32.mrf.mxu0
          %v1014 = vadd.f32 %v881, %v1013
          %v1015 = vpop.f32.mrf.mxu0
          %v1016 = vpop.f32.mrf.mxu0
          %v1017 = vadd.f32 %v881, %v1016
          %v1018 = vpop.f32.mrf.mxu0
          %1019 = vmatprep.mubr.bf16.mxu0 0
          %1020 = vmatmul.mubr.bf16.gmra.mxu0 %v851
          %v1021 = vpop.f32.mrf.mxu0
          %v1022 = vadd.f32 %v881, %v1021
          %v1023 = vpop.f32.mrf.mxu0
          %v1024 = vpop.f32.mrf.mxu0
          %v1025 = vadd.f32 %v881, %v1024
          %v1026 = vpop.f32.mrf.mxu0
          %1027 = vmatprep.mubr.bf16.mxu0 0
          %1028 = vmatmul.mubr.bf16.gmra.mxu0 %v852
          %v1029 = vpop.f32.mrf.mxu0
          %v1030 = vadd.f32 %v881, %v1029
          %v1031 = vpop.f32.mrf.mxu0
          %v1032 = vpop.f32.mrf.mxu0
          %v1033 = vadd.f32 %v881, %v1032
          %v1034 = vpop.f32.mrf.mxu0
          %1035 = vmatprep.mubr.bf16.mxu0 0
          %1036 = vmatmul.mubr.bf16.gmra.mxu0 %v853
          %v1037 = vpop.f32.mrf.mxu0
          %v1038 = vadd.f32 %v881, %v1037
          %v1039 = vpop.f32.mrf.mxu0
          %v1040 = vpop.f32.mrf.mxu0
          %v1041 = vadd.f32 %v881, %v1040
          %v1042 = vpop.f32.mrf.mxu0
          %1043 = vmatprep.mubr.bf16.mxu0 0
          %1044 = vmatmul.mubr.bf16.gmra.mxu0 %v854
          %v1045 = vpop.f32.mrf.mxu0
          %v1046 = vadd.f32 %v881, %v1045
          %v1047 = vpop.f32.mrf.mxu0
          %v1048 = vpop.f32.mrf.mxu0
          %v1049 = vadd.f32 %v881, %v1048
          %v1050 = vpop.f32.mrf.mxu0
          %1051 = vmatprep.mubr.bf16.mxu0 0
          %1052 = vmatmul.mubr.bf16.gmra.mxu0 %v855
          %v1053 = vpop.f32.mrf.mxu0
          %v1054 = vadd.f32 %v881, %v1053
          %v1055 = vpop.f32.mrf.mxu0
          %v1056 = vpop.f32.mrf.mxu0
          %v1057 = vadd.f32 %v881, %v1056
          %v1058 = vpop.f32.mrf.mxu0
          %1059 = vmatprep.mubr.bf16.mxu0 0
          %1060 = vmatmul.mubr.bf16.gmra.mxu0 %v856
          %v1061 = vpop.f32.mrf.mxu0
          %v1062 = vadd.f32 %v881, %v1061
          %v1063 = vpop.f32.mrf.mxu0
          %v1064 = vpop.f32.mrf.mxu0
          %v1065 = vadd.f32 %v881, %v1064
          %v1066 = vpop.f32.mrf.mxu0
          %1067 = vmatprep.mubr.bf16.mxu0 0
          %1068 = vmatmul.mubr.bf16.gmra.mxu0 %v857
          %v1069 = vpop.f32.mrf.mxu0
          %v1070 = vadd.f32 %v881, %v1069
          %v1071 = vpop.f32.mrf.mxu0
          %v1072 = vpop.f32.mrf.mxu0
          %v1073 = vadd.f32 %v881, %v1072
          %v1074 = vpop.f32.mrf.mxu0
          %1075 = vmatprep.mubr.bf16.mxu0 0
          %1076 = vmatmul.mubr.bf16.gmra.mxu0 %v858
          %v1077 = vpop.f32.mrf.mxu0
          %v1078 = vadd.f32 %v881, %v1077
          %v1079 = vpop.f32.mrf.mxu0
          %v1080 = vpop.f32.mrf.mxu0
          %v1081 = vadd.f32 %v881, %v1080
          %v1082 = vpop.f32.mrf.mxu0
          %1083 = vmatprep.mubr.bf16.mxu0 0
          %1084 = vmatmul.mubr.bf16.gmra.mxu0 %v859
          %v1085 = vpop.f32.mrf.mxu0
          %v1086 = vadd.f32 %v881, %v1085
          %v1087 = vpop.f32.mrf.mxu0
          %v1088 = vpop.f32.mrf.mxu0
          %v1089 = vadd.f32 %v881, %v1088
          %v1090 = vpop.f32.mrf.mxu0
          %1091 = vdwg.mxu0
          %v1092 = vtanh.pop %v966
          %v1093 = vtanh.pop %v969
          %v1094 = vtanh.pop %v974
          %v1095 = vtanh.pop %v977
          %v1096 = vtanh.pop %v982
          %v1097 = vtanh.pop %v985
          %v1098 = vtanh.pop %v990
          %v1099 = vtanh.pop %v993
          %v1100 = vtanh.pop %v998
          %v1101 = vtanh.pop %v1001
          %v1102 = vtanh.pop %v1006
          %v1103 = vtanh.pop %v1009
          %v1104 = vtanh.pop %v1014
          %v1105 = vtanh.pop %v1017
          %v1106 = vtanh.pop %v1022
          %v1107 = vtanh.pop %v1025
          %v1108 = vtanh.pop %v1030
          %v1109 = vtanh.pop %v1033
          %v1110 = vtanh.pop %v1038
          %v1111 = vtanh.pop %v1041
          %v1112 = vtanh.pop %v1046
          %v1113 = vtanh.pop %v1049
          %v1114 = vtanh.pop %v1054
          %v1115 = vtanh.pop %v1057
          %v1116 = vtanh.pop %v1062
          %v1117 = vtanh.pop %v1065
          %v1118 = vtanh.pop %v1070
          %v1119 = vtanh.pop %v1073
          %v1120 = vtanh.pop %v1078
          %v1121 = vtanh.pop %v1081
          %v1122 = vtanh.pop %v1086
          %v1123 = vtanh.pop %v1089
          %v1124 = vpack.c.bf16 %v1093, %v1092
          %v1125 = vpack.c.bf16 %v1095, %v1094
          %v1126 = vpack.c.bf16 %v1097, %v1096
          %v1127 = vpack.c.bf16 %v1099, %v1098
          %v1128 = vpack.c.bf16 %v1101, %v1100
          %v1129 = vpack.c.bf16 %v1103, %v1102
          %v1130 = vpack.c.bf16 %v1105, %v1104
          %v1131 = vpack.c.bf16 %v1107, %v1106
          %v1132 = vpack.c.bf16 %v1109, %v1108
          %v1133 = vpack.c.bf16 %v1111, %v1110
          %v1134 = vpack.c.bf16 %v1113, %v1112
          %v1135 = vpack.c.bf16 %v1115, %v1114
          %v1136 = vpack.c.bf16 %v1117, %v1116
          %v1137 = vpack.c.bf16 %v1119, %v1118
          %v1138 = vpack.c.bf16 %v1121, %v1120
          %v1139 = vpack.c.bf16 %v1123, %v1122
          %s1140 = scalar_lea.vmem [#allocation9], 64
          %v1141 = vld [vmem:[%s1140] sm:$0xf]
          %v1142 = vld [vmem:[%s1140 + $0x4] sm:$0xf]
          %v1143 = vld [vmem:[%s1140 + $0x8] sm:$0xf]
          %v1144 = vld [vmem:[%s1140 + $0xc] sm:$0xf]
          %v1145 = vld [vmem:[%s1140 + $0x10] sm:$0xf]
          %v1146 = vld [vmem:[%s1140 + $0x14] sm:$0xf]
          %v1147 = vld [vmem:[%s1140 + $0x18] sm:$0xf]
          %v1148 = vld [vmem:[%s1140 + $0x1c] sm:$0xf]
          %v1149 = vld [vmem:[%s1140 + $0x20] sm:$0xf]
          %v1150 = vld [vmem:[%s1140 + $0x24] sm:$0xf]
          %v1151 = vld [vmem:[%s1140 + $0x28] sm:$0xf]
          %v1152 = vld [vmem:[%s1140 + $0x2c] sm:$0xf]
          %v1153 = vld [vmem:[%s1140 + $0x30] sm:$0xf]
          %v1154 = vld [vmem:[%s1140 + $0x34] sm:$0xf]
          %v1155 = vld [vmem:[%s1140 + $0x38] sm:$0xf]
          %v1156 = vld [vmem:[%s1140 + $0x3c] sm:$0xf]
          %s1157 = scalar_lea.vmem [#allocation11], 1
          %v1158 = vld [vmem:[%s1157] sm:$0x1]
          %v1160 = vlaneseq
          %v1161 = vshrl.u32 %v1160, 7
          %v1162 = vsub.s32 0, %v1161
          %v1163 = vrot.slane %v1158, %v1162
          %v1181 = vunpack.c.l.b16 %v1141
          %v1182 = vunpack.c.l.b16 %v1142
          %v1183 = vunpack.c.l.b16 %v1143
          %v1184 = vunpack.c.l.b16 %v1144
          %v1185 = vunpack.c.l.b16 %v1145
          %v1186 = vunpack.c.l.b16 %v1146
          %v1187 = vunpack.c.l.b16 %v1147
          %v1188 = vunpack.c.l.b16 %v1148
          %v1189 = vunpack.c.l.b16 %v1149
          %v1190 = vunpack.c.l.b16 %v1150
          %v1191 = vunpack.c.l.b16 %v1151
          %v1192 = vunpack.c.l.b16 %v1152
          %v1193 = vunpack.c.l.b16 %v1153
          %v1194 = vunpack.c.l.b16 %v1154
          %v1195 = vunpack.c.l.b16 %v1155
          %v1196 = vunpack.c.l.b16 %v1156
          %v1197 = vpack.c.b16 %v1182, %v1181
          %v1198 = vpack.c.b16 %v1184, %v1183
          %v1199 = vpack.c.b16 %v1186, %v1185
          %v1200 = vpack.c.b16 %v1188, %v1187
          %v1201 = vpack.c.b16 %v1190, %v1189
          %v1202 = vpack.c.b16 %v1192, %v1191
          %v1203 = vpack.c.b16 %v1194, %v1193
          %v1204 = vpack.c.b16 %v1196, %v1195
          %1213 = vmatprep.subr.bf16.mxu0 0
          %1214 = vmatpush1.bf16.msra.mxu0 %v1204
          %1215 = vmatprep.subr.bf16.mxu0 0
          %1216 = vmatpush1.bf16.msra.mxu0 %v1203
          %1217 = vmatprep.subr.bf16.mxu0 0
          %1218 = vmatpush1.bf16.msra.mxu0 %v1202
          %1219 = vmatprep.subr.bf16.mxu0 0
          %1220 = vmatpush1.bf16.msra.mxu0 %v1201
          %1221 = vmatprep.subr.bf16.mxu0 0
          %1222 = vmatpush1.bf16.msra.mxu0 %v1200
          %1223 = vmatprep.subr.bf16.mxu0 0
          %1224 = vmatpush1.bf16.msra.mxu0 %v1199
          %1225 = vmatprep.subr.bf16.mxu0 0
          %1226 = vmatpush1.bf16.msra.mxu0 %v1198
          %1227 = vmatprep.subr.bf16.mxu0 0
          %1228 = vmatpush1.bf16.msra.mxu0 %v1197
          %1229 = vmatprep.subr.bf16.mxu0 0
          %1230 = vmatpush2.bf16.msra.mxu0 0
          %1231 = vmatprep.subr.bf16.mxu0 0
          %1232 = vmatpush2.bf16.msra.mxu0 0
          %1233 = vmatprep.subr.bf16.mxu0 0
          %1234 = vmatpush2.bf16.msra.mxu0 0
          %1235 = vmatprep.subr.bf16.mxu0 0
          %1236 = vmatpush2.bf16.msra.mxu0 0
          %1237 = vmatprep.subr.bf16.mxu0 0
          %1238 = vmatpush2.bf16.msra.mxu0 0
          %1239 = vmatprep.subr.bf16.mxu0 0
          %1240 = vmatpush2.bf16.msra.mxu0 0
          %1241 = vmatprep.subr.bf16.mxu0 0
          %1242 = vmatpush2.bf16.msra.mxu0 0
          %1243 = vmatprep.subr.bf16.mxu0 0
          %1244 = vmatpush2.bf16.msra.mxu0 0
          %1245 = vmatprep.mubr.bf16.mxu0 0
          %1246 = vmatmul.mubr.bf16.gmra.mxu0 %v1124
          %v1247 = vpop.f32.mrf.mxu0
          %v1248 = vadd.f32 %v1163, %v1247
          %v1249 = vpop.f32.mrf.mxu0
          %v1250 = vpop.f32.mrf.mxu0
          %v1251 = vadd.f32 %v1163, %v1250
          %v1252 = vpop.f32.mrf.mxu0
          %1253 = vmatprep.mubr.bf16.mxu0 0
          %1254 = vmatmul.mubr.bf16.gmra.mxu0 %v1125
          %v1255 = vpop.f32.mrf.mxu0
          %v1256 = vadd.f32 %v1163, %v1255
          %v1257 = vpop.f32.mrf.mxu0
          %v1258 = vpop.f32.mrf.mxu0
          %v1259 = vadd.f32 %v1163, %v1258
          %v1260 = vpop.f32.mrf.mxu0
          %1261 = vmatprep.mubr.bf16.mxu0 0
          %1262 = vmatmul.mubr.bf16.gmra.mxu0 %v1126
          %v1263 = vpop.f32.mrf.mxu0
          %v1264 = vadd.f32 %v1163, %v1263
          %v1265 = vpop.f32.mrf.mxu0
          %v1266 = vpop.f32.mrf.mxu0
          %v1267 = vadd.f32 %v1163, %v1266
          %v1268 = vpop.f32.mrf.mxu0
          %1269 = vmatprep.mubr.bf16.mxu0 0
          %1270 = vmatmul.mubr.bf16.gmra.mxu0 %v1127
          %v1271 = vpop.f32.mrf.mxu0
          %v1272 = vadd.f32 %v1163, %v1271
          %v1273 = vpop.f32.mrf.mxu0
          %v1274 = vpop.f32.mrf.mxu0
          %v1275 = vadd.f32 %v1163, %v1274
          %v1276 = vpop.f32.mrf.mxu0
          %1277 = vmatprep.mubr.bf16.mxu0 0
          %1278 = vmatmul.mubr.bf16.gmra.mxu0 %v1128
          %v1279 = vpop.f32.mrf.mxu0
          %v1280 = vadd.f32 %v1163, %v1279
          %v1281 = vpop.f32.mrf.mxu0
          %v1282 = vpop.f32.mrf.mxu0
          %v1283 = vadd.f32 %v1163, %v1282
          %v1284 = vpop.f32.mrf.mxu0
          %1285 = vmatprep.mubr.bf16.mxu0 0
          %1286 = vmatmul.mubr.bf16.gmra.mxu0 %v1129
          %v1287 = vpop.f32.mrf.mxu0
          %v1288 = vadd.f32 %v1163, %v1287
          %v1289 = vpop.f32.mrf.mxu0
          %v1290 = vpop.f32.mrf.mxu0
          %v1291 = vadd.f32 %v1163, %v1290
          %v1292 = vpop.f32.mrf.mxu0
          %1293 = vmatprep.mubr.bf16.mxu0 0
          %1294 = vmatmul.mubr.bf16.gmra.mxu0 %v1130
          %v1295 = vpop.f32.mrf.mxu0
          %v1296 = vadd.f32 %v1163, %v1295
          %v1297 = vpop.f32.mrf.mxu0
          %v1298 = vpop.f32.mrf.mxu0
          %v1299 = vadd.f32 %v1163, %v1298
          %v1300 = vpop.f32.mrf.mxu0
          %1301 = vmatprep.mubr.bf16.mxu0 0
          %1302 = vmatmul.mubr.bf16.gmra.mxu0 %v1131
          %v1303 = vpop.f32.mrf.mxu0
          %v1304 = vadd.f32 %v1163, %v1303
          %v1305 = vpop.f32.mrf.mxu0
          %v1306 = vpop.f32.mrf.mxu0
          %v1307 = vadd.f32 %v1163, %v1306
          %v1308 = vpop.f32.mrf.mxu0
          %1309 = vmatprep.mubr.bf16.mxu0 0
          %1310 = vmatmul.mubr.bf16.gmra.mxu0 %v1132
          %v1311 = vpop.f32.mrf.mxu0
          %v1312 = vadd.f32 %v1163, %v1311
          %v1313 = vpop.f32.mrf.mxu0
          %v1314 = vpop.f32.mrf.mxu0
          %v1315 = vadd.f32 %v1163, %v1314
          %v1316 = vpop.f32.mrf.mxu0
          %1317 = vmatprep.mubr.bf16.mxu0 0
          %1318 = vmatmul.mubr.bf16.gmra.mxu0 %v1133
          %v1319 = vpop.f32.mrf.mxu0
          %v1320 = vadd.f32 %v1163, %v1319
          %v1321 = vpop.f32.mrf.mxu0
          %v1322 = vpop.f32.mrf.mxu0
          %v1323 = vadd.f32 %v1163, %v1322
          %v1324 = vpop.f32.mrf.mxu0
          %1325 = vmatprep.mubr.bf16.mxu0 0
          %1326 = vmatmul.mubr.bf16.gmra.mxu0 %v1134
          %v1327 = vpop.f32.mrf.mxu0
          %v1328 = vadd.f32 %v1163, %v1327
          %v1329 = vpop.f32.mrf.mxu0
          %v1330 = vpop.f32.mrf.mxu0
          %v1331 = vadd.f32 %v1163, %v1330
          %v1332 = vpop.f32.mrf.mxu0
          %1333 = vmatprep.mubr.bf16.mxu0 0
          %1334 = vmatmul.mubr.bf16.gmra.mxu0 %v1135
          %v1335 = vpop.f32.mrf.mxu0
          %v1336 = vadd.f32 %v1163, %v1335
          %v1337 = vpop.f32.mrf.mxu0
          %v1338 = vpop.f32.mrf.mxu0
          %v1339 = vadd.f32 %v1163, %v1338
          %v1340 = vpop.f32.mrf.mxu0
          %1341 = vmatprep.mubr.bf16.mxu0 0
          %1342 = vmatmul.mubr.bf16.gmra.mxu0 %v1136
          %v1343 = vpop.f32.mrf.mxu0
          %v1344 = vadd.f32 %v1163, %v1343
          %v1345 = vpop.f32.mrf.mxu0
          %v1346 = vpop.f32.mrf.mxu0
          %v1347 = vadd.f32 %v1163, %v1346
          %v1348 = vpop.f32.mrf.mxu0
          %1349 = vmatprep.mubr.bf16.mxu0 0
          %1350 = vmatmul.mubr.bf16.gmra.mxu0 %v1137
          %v1351 = vpop.f32.mrf.mxu0
          %v1352 = vadd.f32 %v1163, %v1351
          %v1353 = vpop.f32.mrf.mxu0
          %v1354 = vpop.f32.mrf.mxu0
          %v1355 = vadd.f32 %v1163, %v1354
          %v1356 = vpop.f32.mrf.mxu0
          %1357 = vmatprep.mubr.bf16.mxu0 0
          %1358 = vmatmul.mubr.bf16.gmra.mxu0 %v1138
          %v1359 = vpop.f32.mrf.mxu0
          %v1360 = vadd.f32 %v1163, %v1359
          %v1361 = vpop.f32.mrf.mxu0
          %v1362 = vpop.f32.mrf.mxu0
          %v1363 = vadd.f32 %v1163, %v1362
          %v1364 = vpop.f32.mrf.mxu0
          %1365 = vmatprep.mubr.bf16.mxu0 0
          %1366 = vmatmul.mubr.bf16.gmra.mxu0 %v1139
          %v1367 = vpop.f32.mrf.mxu0
          %v1368 = vadd.f32 %v1163, %v1367
          %v1369 = vpop.f32.mrf.mxu0
          %v1370 = vpop.f32.mrf.mxu0
          %v1371 = vadd.f32 %v1163, %v1370
          %v1372 = vpop.f32.mrf.mxu0
          %1373 = vdwg.mxu0
          %v1374 = vtanh.pop %v1248
          %v1375 = vtanh.pop %v1251
          %v1376 = vtanh.pop %v1256
          %v1377 = vtanh.pop %v1259
          %v1378 = vtanh.pop %v1264
          %v1379 = vtanh.pop %v1267
          %v1380 = vtanh.pop %v1272
          %v1381 = vtanh.pop %v1275
          %v1382 = vtanh.pop %v1280
          %v1383 = vtanh.pop %v1283
          %v1384 = vtanh.pop %v1288
          %v1385 = vtanh.pop %v1291
          %v1386 = vtanh.pop %v1296
          %v1387 = vtanh.pop %v1299
          %v1388 = vtanh.pop %v1304
          %v1389 = vtanh.pop %v1307
          %v1390 = vtanh.pop %v1312
          %v1391 = vtanh.pop %v1315
          %v1392 = vtanh.pop %v1320
          %v1393 = vtanh.pop %v1323
          %v1394 = vtanh.pop %v1328
          %v1395 = vtanh.pop %v1331
          %v1396 = vtanh.pop %v1336
          %v1397 = vtanh.pop %v1339
          %v1398 = vtanh.pop %v1344
          %v1399 = vtanh.pop %v1347
          %v1400 = vtanh.pop %v1352
          %v1401 = vtanh.pop %v1355
          %v1402 = vtanh.pop %v1360
          %v1403 = vtanh.pop %v1363
          %v1404 = vtanh.pop %v1368
          %v1405 = vtanh.pop %v1371
          %v1406 = vpack.c.bf16 %v1375, %v1374
          %v1407 = vpack.c.bf16 %v1377, %v1376
          %v1408 = vpack.c.bf16 %v1379, %v1378
          %v1409 = vpack.c.bf16 %v1381, %v1380
          %v1410 = vpack.c.bf16 %v1383, %v1382
          %v1411 = vpack.c.bf16 %v1385, %v1384
          %v1412 = vpack.c.bf16 %v1387, %v1386
          %v1413 = vpack.c.bf16 %v1389, %v1388
          %v1414 = vpack.c.bf16 %v1391, %v1390
          %v1415 = vpack.c.bf16 %v1393, %v1392
          %v1416 = vpack.c.bf16 %v1395, %v1394
          %v1417 = vpack.c.bf16 %v1397, %v1396
          %v1418 = vpack.c.bf16 %v1399, %v1398
          %v1419 = vpack.c.bf16 %v1401, %v1400
          %v1420 = vpack.c.bf16 %v1403, %v1402
          %v1421 = vpack.c.bf16 %v1405, %v1404
          %v1438 = vunpack.c.l.b16 %v1406
          %v1439 = vunpack.c.h.b16 %v1406
          %v1440 = vunpack.c.l.b16 %v1407
          %v1441 = vunpack.c.h.b16 %v1407
          %v1442 = vunpack.c.l.b16 %v1408
          %v1443 = vunpack.c.h.b16 %v1408
          %v1444 = vunpack.c.l.b16 %v1409
          %v1445 = vunpack.c.h.b16 %v1409
          %v1446 = vunpack.c.l.b16 %v1410
          %v1447 = vunpack.c.h.b16 %v1410
          %v1448 = vunpack.c.l.b16 %v1411
          %v1449 = vunpack.c.h.b16 %v1411
          %v1450 = vunpack.c.l.b16 %v1412
          %v1451 = vunpack.c.h.b16 %v1412
          %v1452 = vunpack.c.l.b16 %v1413
          %v1453 = vunpack.c.h.b16 %v1413
          %v1454 = vunpack.c.l.b16 %v1414
          %v1455 = vunpack.c.h.b16 %v1414
          %v1456 = vunpack.c.l.b16 %v1415
          %v1457 = vunpack.c.h.b16 %v1415
          %v1458 = vunpack.c.l.b16 %v1416
          %v1459 = vunpack.c.h.b16 %v1416
          %v1460 = vunpack.c.l.b16 %v1417
          %v1461 = vunpack.c.h.b16 %v1417
          %v1462 = vunpack.c.l.b16 %v1418
          %v1463 = vunpack.c.h.b16 %v1418
          %v1464 = vunpack.c.l.b16 %v1419
          %v1465 = vunpack.c.h.b16 %v1419
          %v1466 = vunpack.c.l.b16 %v1420
          %v1467 = vunpack.c.h.b16 %v1420
          %v1468 = vunpack.c.l.b16 %v1421
          %v1469 = vunpack.c.h.b16 %v1421
          %v1470 = vpack.c.b16 %v1438, %v1438
          %v1471 = vpack.c.b16 %v1439, %v1439
          %v1472 = vpack.c.b16 %v1440, %v1440
          %v1473 = vpack.c.b16 %v1441, %v1441
          %v1474 = vpack.c.b16 %v1442, %v1442
          %v1475 = vpack.c.b16 %v1443, %v1443
          %v1476 = vpack.c.b16 %v1444, %v1444
          %v1477 = vpack.c.b16 %v1445, %v1445
          %v1478 = vpack.c.b16 %v1446, %v1446
          %v1479 = vpack.c.b16 %v1447, %v1447
          %v1480 = vpack.c.b16 %v1448, %v1448
          %v1481 = vpack.c.b16 %v1449, %v1449
          %v1482 = vpack.c.b16 %v1450, %v1450
          %v1483 = vpack.c.b16 %v1451, %v1451
          %v1484 = vpack.c.b16 %v1452, %v1452
          %v1485 = vpack.c.b16 %v1453, %v1453
          %v1486 = vpack.c.b16 %v1454, %v1454
          %v1487 = vpack.c.b16 %v1455, %v1455
          %v1488 = vpack.c.b16 %v1456, %v1456
          %v1489 = vpack.c.b16 %v1457, %v1457
          %v1490 = vpack.c.b16 %v1458, %v1458
          %v1491 = vpack.c.b16 %v1459, %v1459
          %v1492 = vpack.c.b16 %v1460, %v1460
          %v1493 = vpack.c.b16 %v1461, %v1461
          %v1494 = vpack.c.b16 %v1462, %v1462
          %v1495 = vpack.c.b16 %v1463, %v1463
          %v1496 = vpack.c.b16 %v1464, %v1464
          %v1497 = vpack.c.b16 %v1465, %v1465
          %v1498 = vpack.c.b16 %v1466, %v1466
          %v1499 = vpack.c.b16 %v1467, %v1467
          %v1500 = vpack.c.b16 %v1468, %v1468
          %v1501 = vpack.c.b16 %v1469, %v1469
          %1534 = vst [vmem:[#allocation2] sm:$0xf] %v1470
          %1535 = vst [vmem:[#allocation2 + $0x4] sm:$0xf] %v1471
          %1536 = vst [vmem:[#allocation2 + $0x8] sm:$0xf] %v1472
          %1537 = vst [vmem:[#allocation2 + $0xc] sm:$0xf] %v1473
          %1538 = vst [vmem:[#allocation2 + $0x10] sm:$0xf] %v1474
          %1539 = vst [vmem:[#allocation2 + $0x14] sm:$0xf] %v1475
          %1540 = vst [vmem:[#allocation2 + $0x18] sm:$0xf] %v1476
          %1541 = vst [vmem:[#allocation2 + $0x1c] sm:$0xf] %v1477
          %1542 = vst [vmem:[#allocation2 + $0x20] sm:$0xf] %v1478
          %1543 = vst [vmem:[#allocation2 + $0x24] sm:$0xf] %v1479
          %1544 = vst [vmem:[#allocation2 + $0x28] sm:$0xf] %v1480
          %1545 = vst [vmem:[#allocation2 + $0x2c] sm:$0xf] %v1481
          %1546 = vst [vmem:[#allocation2 + $0x30] sm:$0xf] %v1482
          %1547 = vst [vmem:[#allocation2 + $0x34] sm:$0xf] %v1483
          %1548 = vst [vmem:[#allocation2 + $0x38] sm:$0xf] %v1484
          %1549 = vst [vmem:[#allocation2 + $0x3c] sm:$0xf] %v1485
          %1550 = vst [vmem:[#allocation2 + $0x40] sm:$0xf] %v1486
          %1551 = vst [vmem:[#allocation2 + $0x44] sm:$0xf] %v1487
          %1552 = vst [vmem:[#allocation2 + $0x48] sm:$0xf] %v1488
          %1553 = vst [vmem:[#allocation2 + $0x4c] sm:$0xf] %v1489
          %1554 = vst [vmem:[#allocation2 + $0x50] sm:$0xf] %v1490
          %1555 = vst [vmem:[#allocation2 + $0x54] sm:$0xf] %v1491
          %1556 = vst [vmem:[#allocation2 + $0x58] sm:$0xf] %v1492
          %1557 = vst [vmem:[#allocation2 + $0x5c] sm:$0xf] %v1493
          %1558 = vst [vmem:[#allocation2 + $0x60] sm:$0xf] %v1494
          %1559 = vst [vmem:[#allocation2 + $0x64] sm:$0xf] %v1495
          %1560 = vst [vmem:[#allocation2 + $0x68] sm:$0xf] %v1496
          %1561 = vst [vmem:[#allocation2 + $0x6c] sm:$0xf] %v1497
          %1562 = vst [vmem:[#allocation2 + $0x70] sm:$0xf] %v1498
          %1563 = vst [vmem:[#allocation2 + $0x74] sm:$0xf] %v1499
          %1564 = vst [vmem:[#allocation2 + $0x78] sm:$0xf] %v1500
          %1565 = vst [vmem:[#allocation2 + $0x7c] sm:$0xf] %v1501
        $region80: #{tpu_custom_call.1} parent=47 // pred_fallthru
          _
        %v1566 = vld [vmem:[#allocation2] sm:$0xf]
        %v1567 = vld [vmem:[#allocation2 + $0x4] sm:$0xf]
        %v1568 = vld [vmem:[#allocation2 + $0x8] sm:$0xf]
        %v1569 = vld [vmem:[#allocation2 + $0xc] sm:$0xf]
        %v1570 = vld [vmem:[#allocation2 + $0x10] sm:$0xf]
        %v1571 = vld [vmem:[#allocation2 + $0x14] sm:$0xf]
        %v1572 = vld [vmem:[#allocation2 + $0x18] sm:$0xf]
        %v1573 = vld [vmem:[#allocation2 + $0x1c] sm:$0xf]
        %v1574 = vld [vmem:[#allocation2 + $0x20] sm:$0xf]
        %v1575 = vld [vmem:[#allocation2 + $0x24] sm:$0xf]
        %v1576 = vld [vmem:[#allocation2 + $0x28] sm:$0xf]
        %v1577 = vld [vmem:[#allocation2 + $0x2c] sm:$0xf]
        %v1578 = vld [vmem:[#allocation2 + $0x30] sm:$0xf]
        %v1579 = vld [vmem:[#allocation2 + $0x34] sm:$0xf]
        %v1580 = vld [vmem:[#allocation2 + $0x38] sm:$0xf]
        %v1581 = vld [vmem:[#allocation2 + $0x3c] sm:$0xf]
        %v1582 = vld [vmem:[#allocation2 + $0x40] sm:$0xf]
        %v1583 = vld [vmem:[#allocation2 + $0x44] sm:$0xf]
        %v1584 = vld [vmem:[#allocation2 + $0x48] sm:$0xf]
        %v1585 = vld [vmem:[#allocation2 + $0x4c] sm:$0xf]
        %v1586 = vld [vmem:[#allocation2 + $0x50] sm:$0xf]
        %v1587 = vld [vmem:[#allocation2 + $0x54] sm:$0xf]
        %v1588 = vld [vmem:[#allocation2 + $0x58] sm:$0xf]
        %v1589 = vld [vmem:[#allocation2 + $0x5c] sm:$0xf]
        %v1590 = vld [vmem:[#allocation2 + $0x60] sm:$0xf]
        %v1591 = vld [vmem:[#allocation2 + $0x64] sm:$0xf]
        %v1592 = vld [vmem:[#allocation2 + $0x68] sm:$0xf]
        %v1593 = vld [vmem:[#allocation2 + $0x6c] sm:$0xf]
        %v1594 = vld [vmem:[#allocation2 + $0x70] sm:$0xf]
        %v1595 = vld [vmem:[#allocation2 + $0x74] sm:$0xf]
        %v1596 = vld [vmem:[#allocation2 + $0x78] sm:$0xf]
        %v1597 = vld [vmem:[#allocation2 + $0x7c] sm:$0xf]
        %v1598 = vld [vmem:[%s392] sm:$0xff]
        %v1599 = vld [vmem:[%s392 + $0x8] sm:$0xff]
        %v1600 = vld [vmem:[%s392 + $0x10] sm:$0xff]
        %v1601 = vld [vmem:[%s392 + $0x18] sm:$0xff]
        %v1602 = vld [vmem:[%s392 + $0x20] sm:$0xff]
        %v1603 = vld [vmem:[%s392 + $0x28] sm:$0xff]
        %v1604 = vld [vmem:[%s392 + $0x30] sm:$0xff]
        %v1605 = vld [vmem:[%s392 + $0x38] sm:$0xff]
        %v1606 = vld [vmem:[%s392 + $0x40] sm:$0xff]
        %v1607 = vld [vmem:[%s392 + $0x48] sm:$0xff]
        %v1608 = vld [vmem:[%s392 + $0x50] sm:$0xff]
        %v1609 = vld [vmem:[%s392 + $0x58] sm:$0xff]
        %v1610 = vld [vmem:[%s392 + $0x60] sm:$0xff]
        %v1611 = vld [vmem:[%s392 + $0x68] sm:$0xff]
        %v1612 = vld [vmem:[%s392 + $0x70] sm:$0xff]
        %v1613 = vld [vmem:[%s392 + $0x78] sm:$0xff]
        %v1614 = vld [vmem:[%s392 + $0x80] sm:$0xff]
        %v1615 = vld [vmem:[%s392 + $0x88] sm:$0xff]
        %v1616 = vld [vmem:[%s392 + $0x90] sm:$0xff]
        %v1617 = vld [vmem:[%s392 + $0x98] sm:$0xff]
        %v1618 = vld [vmem:[%s392 + $0xa0] sm:$0xff]
        %v1619 = vld [vmem:[%s392 + $0xa8] sm:$0xff]
        %v1620 = vld [vmem:[%s392 + $0xb0] sm:$0xff]
        %v1621 = vld [vmem:[%s392 + $0xb8] sm:$0xff]
        %v1622 = vld [vmem:[%s392 + $0xc0] sm:$0xff]
        %v1623 = vld [vmem:[%s392 + $0xc8] sm:$0xff]
        %v1624 = vld [vmem:[%s392 + $0xd0] sm:$0xff]
        %v1625 = vld [vmem:[%s392 + $0xd8] sm:$0xff]
        %v1626 = vld [vmem:[%s392 + $0xe0] sm:$0xff]
        %v1627 = vld [vmem:[%s392 + $0xe8] sm:$0xff]
        %v1628 = vld [vmem:[%s392 + $0xf0] sm:$0xff]
        %v1629 = vld [vmem:[%s392 + $0xf8] sm:$0xff]
        %v1630 = vld [vmem:[%s401] sm:$0xf]
        %v1632 = vlaneseq
        %v1633 = vshrl.u32 %v1632, 7
        %v1634 = vsub.s32 0, %v1633
        %v1635 = vrot.slane %v1630, %v1634
        %v1636 = vlaneseq
        %v1637 = vshrl.u32 %v1636, 7
        %v1638 = vsub.s32 1, %v1637
        %v1639 = vrot.slane %v1630, %v1638
        %v1640 = vlaneseq
        %v1641 = vshrl.u32 %v1640, 7
        %v1642 = vsub.s32 2, %v1641
        %v1643 = vrot.slane %v1630, %v1642
        %v1644 = vlaneseq
        %v1645 = vshrl.u32 %v1644, 7
        %v1646 = vsub.s32 3, %v1645
        %v1647 = vrot.slane %v1630, %v1646
        %v1684 = vunpack.c.l.b16 %v1566
        %v1685 = vunpack.c.l.b16 %v1567
        %v1686 = vunpack.c.l.b16 %v1568
        %v1687 = vunpack.c.l.b16 %v1569
        %v1688 = vunpack.c.l.b16 %v1570
        %v1689 = vunpack.c.l.b16 %v1571
        %v1690 = vunpack.c.l.b16 %v1572
        %v1691 = vunpack.c.l.b16 %v1573
        %v1692 = vunpack.c.l.b16 %v1574
        %v1693 = vunpack.c.l.b16 %v1575
        %v1694 = vunpack.c.l.b16 %v1576
        %v1695 = vunpack.c.l.b16 %v1577
        %v1696 = vunpack.c.l.b16 %v1578
        %v1697 = vunpack.c.l.b16 %v1579
        %v1698 = vunpack.c.l.b16 %v1580
        %v1699 = vunpack.c.l.b16 %v1581
        %v1700 = vunpack.c.l.b16 %v1582
        %v1701 = vunpack.c.l.b16 %v1583
        %v1702 = vunpack.c.l.b16 %v1584
        %v1703 = vunpack.c.l.b16 %v1585
        %v1704 = vunpack.c.l.b16 %v1586
        %v1705 = vunpack.c.l.b16 %v1587
        %v1706 = vunpack.c.l.b16 %v1588
        %v1707 = vunpack.c.l.b16 %v1589
        %v1708 = vunpack.c.l.b16 %v1590
        %v1709 = vunpack.c.l.b16 %v1591
        %v1710 = vunpack.c.l.b16 %v1592
        %v1711 = vunpack.c.l.b16 %v1593
        %v1712 = vunpack.c.l.b16 %v1594
        %v1713 = vunpack.c.l.b16 %v1595
        %v1714 = vunpack.c.l.b16 %v1596
        %v1715 = vunpack.c.l.b16 %v1597
        %v1716 = vpack.c.b16 %v1685, %v1684
        %v1717 = vpack.c.b16 %v1687, %v1686
        %v1718 = vpack.c.b16 %v1689, %v1688
        %v1719 = vpack.c.b16 %v1691, %v1690
        %v1720 = vpack.c.b16 %v1693, %v1692
        %v1721 = vpack.c.b16 %v1695, %v1694
        %v1722 = vpack.c.b16 %v1697, %v1696
        %v1723 = vpack.c.b16 %v1699, %v1698
        %v1724 = vpack.c.b16 %v1701, %v1700
        %v1725 = vpack.c.b16 %v1703, %v1702
        %v1726 = vpack.c.b16 %v1705, %v1704
        %v1727 = vpack.c.b16 %v1707, %v1706
        %v1728 = vpack.c.b16 %v1709, %v1708
        %v1729 = vpack.c.b16 %v1711, %v1710
        %v1730 = vpack.c.b16 %v1713, %v1712
        %v1731 = vpack.c.b16 %v1715, %v1714
        %v1780 = vunpack.c.l.b16 %v1598
        %v1781 = vunpack.c.h.b16 %v1598
        %v1782 = vunpack.c.l.b16 %v1599
        %v1783 = vunpack.c.h.b16 %v1599
        %v1784 = vunpack.c.l.b16 %v1600
        %v1785 = vunpack.c.h.b16 %v1600
        %v1786 = vunpack.c.l.b16 %v1601
        %v1787 = vunpack.c.h.b16 %v1601
        %v1788 = vunpack.c.l.b16 %v1602
        %v1789 = vunpack.c.h.b16 %v1602
        %v1790 = vunpack.c.l.b16 %v1603
        %v1791 = vunpack.c.h.b16 %v1603
        %v1792 = vunpack.c.l.b16 %v1604
        %v1793 = vunpack.c.h.b16 %v1604
        %v1794 = vunpack.c.l.b16 %v1605
        %v1795 = vunpack.c.h.b16 %v1605
        %v1796 = vunpack.c.l.b16 %v1606
        %v1797 = vunpack.c.h.b16 %v1606
        %v1798 = vunpack.c.l.b16 %v1607
        %v1799 = vunpack.c.h.b16 %v1607
        %v1800 = vunpack.c.l.b16 %v1608
        %v1801 = vunpack.c.h.b16 %v1608
        %v1802 = vunpack.c.l.b16 %v1609
        %v1803 = vunpack.c.h.b16 %v1609
        %v1804 = vunpack.c.l.b16 %v1610
        %v1805 = vunpack.c.h.b16 %v1610
        %v1806 = vunpack.c.l.b16 %v1611
        %v1807 = vunpack.c.h.b16 %v1611
        %v1808 = vunpack.c.l.b16 %v1612
        %v1809 = vunpack.c.h.b16 %v1612
        %v1810 = vunpack.c.l.b16 %v1613
        %v1811 = vunpack.c.h.b16 %v1613
        %v1812 = vunpack.c.l.b16 %v1614
        %v1813 = vunpack.c.h.b16 %v1614
        %v1814 = vunpack.c.l.b16 %v1615
        %v1815 = vunpack.c.h.b16 %v1615
        %v1816 = vunpack.c.l.b16 %v1616
        %v1817 = vunpack.c.h.b16 %v1616
        %v1818 = vunpack.c.l.b16 %v1617
        %v1819 = vunpack.c.h.b16 %v1617
        %v1820 = vunpack.c.l.b16 %v1618
        %v1821 = vunpack.c.h.b16 %v1618
        %v1822 = vunpack.c.l.b16 %v1619
        %v1823 = vunpack.c.h.b16 %v1619
        %v1824 = vunpack.c.l.b16 %v1620
        %v1825 = vunpack.c.h.b16 %v1620
        %v1826 = vunpack.c.l.b16 %v1621
        %v1827 = vunpack.c.h.b16 %v1621
        %v1828 = vunpack.c.l.b16 %v1622
        %v1829 = vunpack.c.h.b16 %v1622
        %v1830 = vunpack.c.l.b16 %v1623
        %v1831 = vunpack.c.h.b16 %v1623
        %v1832 = vunpack.c.l.b16 %v1624
        %v1833 = vunpack.c.h.b16 %v1624
        %v1834 = vunpack.c.l.b16 %v1625
        %v1835 = vunpack.c.h.b16 %v1625
        %v1836 = vunpack.c.l.b16 %v1626
        %v1837 = vunpack.c.h.b16 %v1626
        %v1838 = vunpack.c.l.b16 %v1627
        %v1839 = vunpack.c.h.b16 %v1627
        %v1840 = vunpack.c.l.b16 %v1628
        %v1841 = vunpack.c.h.b16 %v1628
        %v1842 = vunpack.c.l.b16 %v1629
        %v1843 = vunpack.c.h.b16 %v1629
        %v1844 = vpack.c.b16 %v1784, %v1780
        %v1845 = vpack.c.b16 %v1785, %v1781
        %v1846 = vpack.c.b16 %v1786, %v1782
        %v1847 = vpack.c.b16 %v1787, %v1783
        %v1848 = vpack.c.b16 %v1792, %v1788
        %v1849 = vpack.c.b16 %v1793, %v1789
        %v1850 = vpack.c.b16 %v1794, %v1790
        %v1851 = vpack.c.b16 %v1795, %v1791
        %v1852 = vpack.c.b16 %v1800, %v1796
        %v1853 = vpack.c.b16 %v1801, %v1797
        %v1854 = vpack.c.b16 %v1802, %v1798
        %v1855 = vpack.c.b16 %v1803, %v1799
        %v1856 = vpack.c.b16 %v1808, %v1804
        %v1857 = vpack.c.b16 %v1809, %v1805
        %v1858 = vpack.c.b16 %v1810, %v1806
        %v1859 = vpack.c.b16 %v1811, %v1807
        %v1860 = vpack.c.b16 %v1816, %v1812
        %v1861 = vpack.c.b16 %v1817, %v1813
        %v1862 = vpack.c.b16 %v1818, %v1814
        %v1863 = vpack.c.b16 %v1819, %v1815
        %v1864 = vpack.c.b16 %v1824, %v1820
        %v1865 = vpack.c.b16 %v1825, %v1821
        %v1866 = vpack.c.b16 %v1826, %v1822
        %v1867 = vpack.c.b16 %v1827, %v1823
        %v1868 = vpack.c.b16 %v1832, %v1828
        %v1869 = vpack.c.b16 %v1833, %v1829
        %v1870 = vpack.c.b16 %v1834, %v1830
        %v1871 = vpack.c.b16 %v1835, %v1831
        %v1872 = vpack.c.b16 %v1840, %v1836
        %v1873 = vpack.c.b16 %v1841, %v1837
        %v1874 = vpack.c.b16 %v1842, %v1838
        %v1875 = vpack.c.b16 %v1843, %v1839
        %1908 = vmatprep.subr.bf16.mxu0 %v1873
        %1909 = vmatpush1.bf16.msra.mxu0 %v1872
        %1910 = vmatprep.subr.bf16.mxu0 %v1869
        %1911 = vmatpush1.bf16.msra.mxu0 %v1868
        %1912 = vmatprep.subr.bf16.mxu0 %v1865
        %1913 = vmatpush1.bf16.msra.mxu0 %v1864
        %1914 = vmatprep.subr.bf16.mxu0 %v1861
        %1915 = vmatpush1.bf16.msra.mxu0 %v1860
        %1916 = vmatprep.subr.bf16.mxu0 %v1857
        %1917 = vmatpush1.bf16.msra.mxu0 %v1856
        %1918 = vmatprep.subr.bf16.mxu0 %v1853
        %1919 = vmatpush1.bf16.msra.mxu0 %v1852
        %1920 = vmatprep.subr.bf16.mxu0 %v1849
        %1921 = vmatpush1.bf16.msra.mxu0 %v1848
        %1922 = vmatprep.subr.bf16.mxu0 %v1845
        %1923 = vmatpush1.bf16.msra.mxu0 %v1844
        %1924 = vmatprep.subr.bf16.mxu0 0
        %1925 = vmatpush2.bf16.msra.mxu0 0
        %1926 = vmatprep.subr.bf16.mxu0 0
        %1927 = vmatpush2.bf16.msra.mxu0 0
        %1928 = vmatprep.subr.bf16.mxu0 0
        %1929 = vmatpush2.bf16.msra.mxu0 0
        %1930 = vmatprep.subr.bf16.mxu0 0
        %1931 = vmatpush2.bf16.msra.mxu0 0
        %1932 = vmatprep.subr.bf16.mxu0 0
        %1933 = vmatpush2.bf16.msra.mxu0 0
        %1934 = vmatprep.subr.bf16.mxu0 0
        %1935 = vmatpush2.bf16.msra.mxu0 0
        %1936 = vmatprep.subr.bf16.mxu0 0
        %1937 = vmatpush2.bf16.msra.mxu0 0
        %1938 = vmatprep.subr.bf16.mxu0 0
        %1939 = vmatpush2.bf16.msra.mxu0 0
        %1940 = vmatprep.mubr.bf16.mxu0 0
        %1941 = vmatmul.mubr.bf16.gmra.mxu0 %v1716
        %v1942 = vpop.f32.mrf.mxu0
        %v1943 = vadd.f32 %v1635, %v1942
        %v1944 = vpop.f32.mrf.mxu0
        %v1945 = vadd.f32 %v1639, %v1944
        %v1946 = vpop.f32.mrf.mxu0
        %v1947 = vadd.f32 %v1635, %v1946
        %v1948 = vpop.f32.mrf.mxu0
        %v1949 = vadd.f32 %v1639, %v1948
        %1950 = vmatprep.mubr.bf16.mxu0 0
        %1951 = vmatmul.mubr.bf16.gmra.mxu0 %v1717
        %v1952 = vpop.f32.mrf.mxu0
        %v1953 = vadd.f32 %v1635, %v1952
        %v1954 = vpop.f32.mrf.mxu0
        %v1955 = vadd.f32 %v1639, %v1954
        %v1956 = vpop.f32.mrf.mxu0
        %v1957 = vadd.f32 %v1635, %v1956
        %v1958 = vpop.f32.mrf.mxu0
        %v1959 = vadd.f32 %v1639, %v1958
        %1960 = vmatprep.mubr.bf16.mxu0 0
        %1961 = vmatmul.mubr.bf16.gmra.mxu0 %v1718
        %v1962 = vpop.f32.mrf.mxu0
        %v1963 = vadd.f32 %v1635, %v1962
        %v1964 = vpop.f32.mrf.mxu0
        %v1965 = vadd.f32 %v1639, %v1964
        %v1966 = vpop.f32.mrf.mxu0
        %v1967 = vadd.f32 %v1635, %v1966
        %v1968 = vpop.f32.mrf.mxu0
        %v1969 = vadd.f32 %v1639, %v1968
        %1970 = vmatprep.mubr.bf16.mxu0 0
        %1971 = vmatmul.mubr.bf16.gmra.mxu0 %v1719
        %v1972 = vpop.f32.mrf.mxu0
        %v1973 = vadd.f32 %v1635, %v1972
        %v1974 = vpop.f32.mrf.mxu0
        %v1975 = vadd.f32 %v1639, %v1974
        %v1976 = vpop.f32.mrf.mxu0
        %v1977 = vadd.f32 %v1635, %v1976
        %v1978 = vpop.f32.mrf.mxu0
        %v1979 = vadd.f32 %v1639, %v1978
        %1980 = vmatprep.mubr.bf16.mxu0 0
        %1981 = vmatmul.mubr.bf16.gmra.mxu0 %v1720
        %v1982 = vpop.f32.mrf.mxu0
        %v1983 = vadd.f32 %v1635, %v1982
        %v1984 = vpop.f32.mrf.mxu0
        %v1985 = vadd.f32 %v1639, %v1984
        %v1986 = vpop.f32.mrf.mxu0
        %v1987 = vadd.f32 %v1635, %v1986
        %v1988 = vpop.f32.mrf.mxu0
        %v1989 = vadd.f32 %v1639, %v1988
        %1990 = vmatprep.mubr.bf16.mxu0 0
        %1991 = vmatmul.mubr.bf16.gmra.mxu0 %v1721
        %v1992 = vpop.f32.mrf.mxu0
        %v1993 = vadd.f32 %v1635, %v1992
        %v1994 = vpop.f32.mrf.mxu0
        %v1995 = vadd.f32 %v1639, %v1994
        %v1996 = vpop.f32.mrf.mxu0
        %v1997 = vadd.f32 %v1635, %v1996
        %v1998 = vpop.f32.mrf.mxu0
        %v1999 = vadd.f32 %v1639, %v1998
        %2000 = vmatprep.mubr.bf16.mxu0 0
        %2001 = vmatmul.mubr.bf16.gmra.mxu0 %v1722
        %v2002 = vpop.f32.mrf.mxu0
        %v2003 = vadd.f32 %v1635, %v2002
        %v2004 = vpop.f32.mrf.mxu0
        %v2005 = vadd.f32 %v1639, %v2004
        %v2006 = vpop.f32.mrf.mxu0
        %v2007 = vadd.f32 %v1635, %v2006
        %v2008 = vpop.f32.mrf.mxu0
        %v2009 = vadd.f32 %v1639, %v2008
        %2010 = vmatprep.mubr.bf16.mxu0 0
        %2011 = vmatmul.mubr.bf16.gmra.mxu0 %v1723
        %v2012 = vpop.f32.mrf.mxu0
        %v2013 = vadd.f32 %v1635, %v2012
        %v2014 = vpop.f32.mrf.mxu0
        %v2015 = vadd.f32 %v1639, %v2014
        %v2016 = vpop.f32.mrf.mxu0
        %v2017 = vadd.f32 %v1635, %v2016
        %v2018 = vpop.f32.mrf.mxu0
        %v2019 = vadd.f32 %v1639, %v2018
        %2020 = vmatprep.mubr.bf16.mxu0 0
        %2021 = vmatmul.mubr.bf16.gmra.mxu0 %v1724
        %v2022 = vpop.f32.mrf.mxu0
        %v2023 = vadd.f32 %v1635, %v2022
        %v2024 = vpop.f32.mrf.mxu0
        %v2025 = vadd.f32 %v1639, %v2024
        %v2026 = vpop.f32.mrf.mxu0
        %v2027 = vadd.f32 %v1635, %v2026
        %v2028 = vpop.f32.mrf.mxu0
        %v2029 = vadd.f32 %v1639, %v2028
        %2030 = vmatprep.mubr.bf16.mxu0 0
        %2031 = vmatmul.mubr.bf16.gmra.mxu0 %v1725
        %v2032 = vpop.f32.mrf.mxu0
        %v2033 = vadd.f32 %v1635, %v2032
        %v2034 = vpop.f32.mrf.mxu0
        %v2035 = vadd.f32 %v1639, %v2034
        %v2036 = vpop.f32.mrf.mxu0
        %v2037 = vadd.f32 %v1635, %v2036
        %v2038 = vpop.f32.mrf.mxu0
        %v2039 = vadd.f32 %v1639, %v2038
        %2040 = vmatprep.mubr.bf16.mxu0 0
        %2041 = vmatmul.mubr.bf16.gmra.mxu0 %v1726
        %v2042 = vpop.f32.mrf.mxu0
        %v2043 = vadd.f32 %v1635, %v2042
        %v2044 = vpop.f32.mrf.mxu0
        %v2045 = vadd.f32 %v1639, %v2044
        %v2046 = vpop.f32.mrf.mxu0
        %v2047 = vadd.f32 %v1635, %v2046
        %v2048 = vpop.f32.mrf.mxu0
        %v2049 = vadd.f32 %v1639, %v2048
        %2050 = vmatprep.mubr.bf16.mxu0 0
        %2051 = vmatmul.mubr.bf16.gmra.mxu0 %v1727
        %v2052 = vpop.f32.mrf.mxu0
        %v2053 = vadd.f32 %v1635, %v2052
        %v2054 = vpop.f32.mrf.mxu0
        %v2055 = vadd.f32 %v1639, %v2054
        %v2056 = vpop.f32.mrf.mxu0
        %v2057 = vadd.f32 %v1635, %v2056
        %v2058 = vpop.f32.mrf.mxu0
        %v2059 = vadd.f32 %v1639, %v2058
        %2060 = vmatprep.mubr.bf16.mxu0 0
        %2061 = vmatmul.mubr.bf16.gmra.mxu0 %v1728
        %v2062 = vpop.f32.mrf.mxu0
        %v2063 = vadd.f32 %v1635, %v2062
        %v2064 = vpop.f32.mrf.mxu0
        %v2065 = vadd.f32 %v1639, %v2064
        %v2066 = vpop.f32.mrf.mxu0
        %v2067 = vadd.f32 %v1635, %v2066
        %v2068 = vpop.f32.mrf.mxu0
        %v2069 = vadd.f32 %v1639, %v2068
        %2070 = vmatprep.mubr.bf16.mxu0 0
        %2071 = vmatmul.mubr.bf16.gmra.mxu0 %v1729
        %v2072 = vpop.f32.mrf.mxu0
        %v2073 = vadd.f32 %v1635, %v2072
        %v2074 = vpop.f32.mrf.mxu0
        %v2075 = vadd.f32 %v1639, %v2074
        %v2076 = vpop.f32.mrf.mxu0
        %v2077 = vadd.f32 %v1635, %v2076
        %v2078 = vpop.f32.mrf.mxu0
        %v2079 = vadd.f32 %v1639, %v2078
        %2080 = vmatprep.mubr.bf16.mxu0 0
        %2081 = vmatmul.mubr.bf16.gmra.mxu0 %v1730
        %v2082 = vpop.f32.mrf.mxu0
        %v2083 = vadd.f32 %v1635, %v2082
        %v2084 = vpop.f32.mrf.mxu0
        %v2085 = vadd.f32 %v1639, %v2084
        %v2086 = vpop.f32.mrf.mxu0
        %v2087 = vadd.f32 %v1635, %v2086
        %v2088 = vpop.f32.mrf.mxu0
        %v2089 = vadd.f32 %v1639, %v2088
        %2090 = vmatprep.mubr.bf16.mxu0 0
        %2091 = vmatmul.mubr.bf16.gmra.mxu0 %v1731
        %v2092 = vpop.f32.mrf.mxu0
        %v2093 = vadd.f32 %v1635, %v2092
        %v2094 = vpop.f32.mrf.mxu0
        %v2095 = vadd.f32 %v1639, %v2094
        %v2096 = vpop.f32.mrf.mxu0
        %v2097 = vadd.f32 %v1635, %v2096
        %v2098 = vpop.f32.mrf.mxu0
        %v2099 = vadd.f32 %v1639, %v2098
        %2100 = vdwg.mxu0
        %2101 = vmatprep.subr.bf16.mxu0 %v1875
        %2102 = vmatpush1.bf16.msra.mxu0 %v1874
        %2103 = vmatprep.subr.bf16.mxu0 %v1871
        %2104 = vmatpush1.bf16.msra.mxu0 %v1870
        %2105 = vmatprep.subr.bf16.mxu0 %v1867
        %2106 = vmatpush1.bf16.msra.mxu0 %v1866
        %2107 = vmatprep.subr.bf16.mxu0 %v1863
        %2108 = vmatpush1.bf16.msra.mxu0 %v1862
        %2109 = vmatprep.subr.bf16.mxu0 %v1859
        %2110 = vmatpush1.bf16.msra.mxu0 %v1858
        %2111 = vmatprep.subr.bf16.mxu0 %v1855
        %2112 = vmatpush1.bf16.msra.mxu0 %v1854
        %2113 = vmatprep.subr.bf16.mxu0 %v1851
        %2114 = vmatpush1.bf16.msra.mxu0 %v1850
        %2115 = vmatprep.subr.bf16.mxu0 %v1847
        %2116 = vmatpush1.bf16.msra.mxu0 %v1846
        %2117 = vmatprep.subr.bf16.mxu0 0
        %2118 = vmatpush2.bf16.msra.mxu0 0
        %2119 = vmatprep.subr.bf16.mxu0 0
        %2120 = vmatpush2.bf16.msra.mxu0 0
        %2121 = vmatprep.subr.bf16.mxu0 0
        %2122 = vmatpush2.bf16.msra.mxu0 0
        %2123 = vmatprep.subr.bf16.mxu0 0
        %2124 = vmatpush2.bf16.msra.mxu0 0
        %2125 = vmatprep.subr.bf16.mxu0 0
        %2126 = vmatpush2.bf16.msra.mxu0 0
        %2127 = vmatprep.subr.bf16.mxu0 0
        %2128 = vmatpush2.bf16.msra.mxu0 0
        %2129 = vmatprep.subr.bf16.mxu0 0
        %2130 = vmatpush2.bf16.msra.mxu0 0
        %2131 = vmatprep.subr.bf16.mxu0 0
        %2132 = vmatpush2.bf16.msra.mxu0 0
        %2133 = vmatprep.mubr.bf16.mxu0 0
        %2134 = vmatmul.mubr.bf16.gmra.mxu0 %v1716
        %v2135 = vpop.f32.mrf.mxu0
        %v2136 = vadd.f32 %v1643, %v2135
        %v2137 = vpop.f32.mrf.mxu0
        %v2138 = vadd.f32 %v1647, %v2137
        %v2139 = vpop.f32.mrf.mxu0
        %v2140 = vadd.f32 %v1643, %v2139
        %v2141 = vpop.f32.mrf.mxu0
        %v2142 = vadd.f32 %v1647, %v2141
        %2143 = vmatprep.mubr.bf16.mxu0 0
        %2144 = vmatmul.mubr.bf16.gmra.mxu0 %v1717
        %v2145 = vpop.f32.mrf.mxu0
        %v2146 = vadd.f32 %v1643, %v2145
        %v2147 = vpop.f32.mrf.mxu0
        %v2148 = vadd.f32 %v1647, %v2147
        %v2149 = vpop.f32.mrf.mxu0
        %v2150 = vadd.f32 %v1643, %v2149
        %v2151 = vpop.f32.mrf.mxu0
        %v2152 = vadd.f32 %v1647, %v2151
        %2153 = vmatprep.mubr.bf16.mxu0 0
        %2154 = vmatmul.mubr.bf16.gmra.mxu0 %v1718
        %v2155 = vpop.f32.mrf.mxu0
        %v2156 = vadd.f32 %v1643, %v2155
        %v2157 = vpop.f32.mrf.mxu0
        %v2158 = vadd.f32 %v1647, %v2157
        %v2159 = vpop.f32.mrf.mxu0
        %v2160 = vadd.f32 %v1643, %v2159
        %v2161 = vpop.f32.mrf.mxu0
        %v2162 = vadd.f32 %v1647, %v2161
        %2163 = vmatprep.mubr.bf16.mxu0 0
        %2164 = vmatmul.mubr.bf16.gmra.mxu0 %v1719
        %v2165 = vpop.f32.mrf.mxu0
        %v2166 = vadd.f32 %v1643, %v2165
        %v2167 = vpop.f32.mrf.mxu0
        %v2168 = vadd.f32 %v1647, %v2167
        %v2169 = vpop.f32.mrf.mxu0
        %v2170 = vadd.f32 %v1643, %v2169
        %v2171 = vpop.f32.mrf.mxu0
        %v2172 = vadd.f32 %v1647, %v2171
        %2173 = vmatprep.mubr.bf16.mxu0 0
        %2174 = vmatmul.mubr.bf16.gmra.mxu0 %v1720
        %v2175 = vpop.f32.mrf.mxu0
        %v2176 = vadd.f32 %v1643, %v2175
        %v2177 = vpop.f32.mrf.mxu0
        %v2178 = vadd.f32 %v1647, %v2177
        %v2179 = vpop.f32.mrf.mxu0
        %v2180 = vadd.f32 %v1643, %v2179
        %v2181 = vpop.f32.mrf.mxu0
        %v2182 = vadd.f32 %v1647, %v2181
        %2183 = vmatprep.mubr.bf16.mxu0 0
        %2184 = vmatmul.mubr.bf16.gmra.mxu0 %v1721
        %v2185 = vpop.f32.mrf.mxu0
        %v2186 = vadd.f32 %v1643, %v2185
        %v2187 = vpop.f32.mrf.mxu0
        %v2188 = vadd.f32 %v1647, %v2187
        %v2189 = vpop.f32.mrf.mxu0
        %v2190 = vadd.f32 %v1643, %v2189
        %v2191 = vpop.f32.mrf.mxu0
        %v2192 = vadd.f32 %v1647, %v2191
        %2193 = vmatprep.mubr.bf16.mxu0 0
        %2194 = vmatmul.mubr.bf16.gmra.mxu0 %v1722
        %v2195 = vpop.f32.mrf.mxu0
        %v2196 = vadd.f32 %v1643, %v2195
        %v2197 = vpop.f32.mrf.mxu0
        %v2198 = vadd.f32 %v1647, %v2197
        %v2199 = vpop.f32.mrf.mxu0
        %v2200 = vadd.f32 %v1643, %v2199
        %v2201 = vpop.f32.mrf.mxu0
        %v2202 = vadd.f32 %v1647, %v2201
        %2203 = vmatprep.mubr.bf16.mxu0 0
        %2204 = vmatmul.mubr.bf16.gmra.mxu0 %v1723
        %v2205 = vpop.f32.mrf.mxu0
        %v2206 = vadd.f32 %v1643, %v2205
        %v2207 = vpop.f32.mrf.mxu0
        %v2208 = vadd.f32 %v1647, %v2207
        %v2209 = vpop.f32.mrf.mxu0
        %v2210 = vadd.f32 %v1643, %v2209
        %v2211 = vpop.f32.mrf.mxu0
        %v2212 = vadd.f32 %v1647, %v2211
        %2213 = vmatprep.mubr.bf16.mxu0 0
        %2214 = vmatmul.mubr.bf16.gmra.mxu0 %v1724
        %v2215 = vpop.f32.mrf.mxu0
        %v2216 = vadd.f32 %v1643, %v2215
        %v2217 = vpop.f32.mrf.mxu0
        %v2218 = vadd.f32 %v1647, %v2217
        %v2219 = vpop.f32.mrf.mxu0
        %v2220 = vadd.f32 %v1643, %v2219
        %v2221 = vpop.f32.mrf.mxu0
        %v2222 = vadd.f32 %v1647, %v2221
        %2223 = vmatprep.mubr.bf16.mxu0 0
        %2224 = vmatmul.mubr.bf16.gmra.mxu0 %v1725
        %v2225 = vpop.f32.mrf.mxu0
        %v2226 = vadd.f32 %v1643, %v2225
        %v2227 = vpop.f32.mrf.mxu0
        %v2228 = vadd.f32 %v1647, %v2227
        %v2229 = vpop.f32.mrf.mxu0
        %v2230 = vadd.f32 %v1643, %v2229
        %v2231 = vpop.f32.mrf.mxu0
        %v2232 = vadd.f32 %v1647, %v2231
        %2233 = vmatprep.mubr.bf16.mxu0 0
        %2234 = vmatmul.mubr.bf16.gmra.mxu0 %v1726
        %v2235 = vpop.f32.mrf.mxu0
        %v2236 = vadd.f32 %v1643, %v2235
        %v2237 = vpop.f32.mrf.mxu0
        %v2238 = vadd.f32 %v1647, %v2237
        %v2239 = vpop.f32.mrf.mxu0
        %v2240 = vadd.f32 %v1643, %v2239
        %v2241 = vpop.f32.mrf.mxu0
        %v2242 = vadd.f32 %v1647, %v2241
        %2243 = vmatprep.mubr.bf16.mxu0 0
        %2244 = vmatmul.mubr.bf16.gmra.mxu0 %v1727
        %v2245 = vpop.f32.mrf.mxu0
        %v2246 = vadd.f32 %v1643, %v2245
        %v2247 = vpop.f32.mrf.mxu0
        %v2248 = vadd.f32 %v1647, %v2247
        %v2249 = vpop.f32.mrf.mxu0
        %v2250 = vadd.f32 %v1643, %v2249
        %v2251 = vpop.f32.mrf.mxu0
        %v2252 = vadd.f32 %v1647, %v2251
        %2253 = vmatprep.mubr.bf16.mxu0 0
        %2254 = vmatmul.mubr.bf16.gmra.mxu0 %v1728
        %v2255 = vpop.f32.mrf.mxu0
        %v2256 = vadd.f32 %v1643, %v2255
        %v2257 = vpop.f32.mrf.mxu0
        %v2258 = vadd.f32 %v1647, %v2257
        %v2259 = vpop.f32.mrf.mxu0
        %v2260 = vadd.f32 %v1643, %v2259
        %v2261 = vpop.f32.mrf.mxu0
        %v2262 = vadd.f32 %v1647, %v2261
        %2263 = vmatprep.mubr.bf16.mxu0 0
        %2264 = vmatmul.mubr.bf16.gmra.mxu0 %v1729
        %v2265 = vpop.f32.mrf.mxu0
        %v2266 = vadd.f32 %v1643, %v2265
        %v2267 = vpop.f32.mrf.mxu0
        %v2268 = vadd.f32 %v1647, %v2267
        %v2269 = vpop.f32.mrf.mxu0
        %v2270 = vadd.f32 %v1643, %v2269
        %v2271 = vpop.f32.mrf.mxu0
        %v2272 = vadd.f32 %v1647, %v2271
        %2273 = vmatprep.mubr.bf16.mxu0 0
        %2274 = vmatmul.mubr.bf16.gmra.mxu0 %v1730
        %v2275 = vpop.f32.mrf.mxu0
        %v2276 = vadd.f32 %v1643, %v2275
        %v2277 = vpop.f32.mrf.mxu0
        %v2278 = vadd.f32 %v1647, %v2277
        %v2279 = vpop.f32.mrf.mxu0
        %v2280 = vadd.f32 %v1643, %v2279
        %v2281 = vpop.f32.mrf.mxu0
        %v2282 = vadd.f32 %v1647, %v2281
        %2283 = vmatprep.mubr.bf16.mxu0 0
        %2284 = vmatmul.mubr.bf16.gmra.mxu0 %v1731
        %v2285 = vpop.f32.mrf.mxu0
        %v2286 = vadd.f32 %v1643, %v2285
        %v2287 = vpop.f32.mrf.mxu0
        %v2288 = vadd.f32 %v1647, %v2287
        %v2289 = vpop.f32.mrf.mxu0
        %v2290 = vadd.f32 %v1643, %v2289
        %v2291 = vpop.f32.mrf.mxu0
        %v2292 = vadd.f32 %v1647, %v2291
        %2293 = vdwg.mxu0
        %2294 = vst [vmem:[%s441] sm:$0xff] %v1943
        %2295 = vst [vmem:[%s441 + $0x8] sm:$0xff] %v1945
        %2296 = vst [vmem:[%s441 + $0x10] sm:$0xff] %v2136
        %2297 = vst [vmem:[%s441 + $0x18] sm:$0xff] %v2138
        %2298 = vst [vmem:[%s441 + $0x20] sm:$0xff] %v1947
        %2299 = vst [vmem:[%s441 + $0x28] sm:$0xff] %v1949
        %2300 = vst [vmem:[%s441 + $0x30] sm:$0xff] %v2140
        %2301 = vst [vmem:[%s441 + $0x38] sm:$0xff] %v2142
        %2302 = vst [vmem:[%s441 + $0x40] sm:$0xff] %v1953
        %2303 = vst [vmem:[%s441 + $0x48] sm:$0xff] %v1955
        %2304 = vst [vmem:[%s441 + $0x50] sm:$0xff] %v2146
        %2305 = vst [vmem:[%s441 + $0x58] sm:$0xff] %v2148
        %2306 = vst [vmem:[%s441 + $0x60] sm:$0xff] %v1957
        %2307 = vst [vmem:[%s441 + $0x68] sm:$0xff] %v1959
        %2308 = vst [vmem:[%s441 + $0x70] sm:$0xff] %v2150
        %2309 = vst [vmem:[%s441 + $0x78] sm:$0xff] %v2152
        %2310 = vst [vmem:[%s441 + $0x80] sm:$0xff] %v1963
        %2311 = vst [vmem:[%s441 + $0x88] sm:$0xff] %v1965
        %2312 = vst [vmem:[%s441 + $0x90] sm:$0xff] %v2156
        %2313 = vst [vmem:[%s441 + $0x98] sm:$0xff] %v2158
        %2314 = vst [vmem:[%s441 + $0xa0] sm:$0xff] %v1967
        %2315 = vst [vmem:[%s441 + $0xa8] sm:$0xff] %v1969
        %2316 = vst [vmem:[%s441 + $0xb0] sm:$0xff] %v2160
        %2317 = vst [vmem:[%s441 + $0xb8] sm:$0xff] %v2162
        %2318 = vst [vmem:[%s441 + $0xc0] sm:$0xff] %v1973
        %2319 = vst [vmem:[%s441 + $0xc8] sm:$0xff] %v1975
        %2320 = vst [vmem:[%s441 + $0xd0] sm:$0xff] %v2166
        %2321 = vst [vmem:[%s441 + $0xd8] sm:$0xff] %v2168
        %2322 = vst [vmem:[%s441 + $0xe0] sm:$0xff] %v1977
        %2323 = vst [vmem:[%s441 + $0xe8] sm:$0xff] %v1979
        %2324 = vst [vmem:[%s441 + $0xf0] sm:$0xff] %v2170
        %2325 = vst [vmem:[%s441 + $0xf8] sm:$0xff] %v2172
        %2326 = vst [vmem:[%s441 + $0x100] sm:$0xff] %v1983
        %2327 = vst [vmem:[%s441 + $0x108] sm:$0xff] %v1985
        %2328 = vst [vmem:[%s441 + $0x110] sm:$0xff] %v2176
        %2329 = vst [vmem:[%s441 + $0x118] sm:$0xff] %v2178
        %2330 = vst [vmem:[%s441 + $0x120] sm:$0xff] %v1987
        %2331 = vst [vmem:[%s441 + $0x128] sm:$0xff] %v1989
        %2332 = vst [vmem:[%s441 + $0x130] sm:$0xff] %v2180
        %2333 = vst [vmem:[%s441 + $0x138] sm:$0xff] %v2182
        %2334 = vst [vmem:[%s441 + $0x140] sm:$0xff] %v1993
        %2335 = vst [vmem:[%s441 + $0x148] sm:$0xff] %v1995
        %2336 = vst [vmem:[%s441 + $0x150] sm:$0xff] %v2186
        %2337 = vst [vmem:[%s441 + $0x158] sm:$0xff] %v2188
        %2338 = vst [vmem:[%s441 + $0x160] sm:$0xff] %v1997
        %2339 = vst [vmem:[%s441 + $0x168] sm:$0xff] %v1999
        %2340 = vst [vmem:[%s441 + $0x170] sm:$0xff] %v2190
        %2341 = vst [vmem:[%s441 + $0x178] sm:$0xff] %v2192
        %2342 = vst [vmem:[%s441 + $0x180] sm:$0xff] %v2003
        %2343 = vst [vmem:[%s441 + $0x188] sm:$0xff] %v2005
        %2344 = vst [vmem:[%s441 + $0x190] sm:$0xff] %v2196
        %2345 = vst [vmem:[%s441 + $0x198] sm:$0xff] %v2198
        %2346 = vst [vmem:[%s441 + $0x1a0] sm:$0xff] %v2007
        %2347 = vst [vmem:[%s441 + $0x1a8] sm:$0xff] %v2009
        %2348 = vst [vmem:[%s441 + $0x1b0] sm:$0xff] %v2200
        %2349 = vst [vmem:[%s441 + $0x1b8] sm:$0xff] %v2202
        %2350 = vst [vmem:[%s441 + $0x1c0] sm:$0xff] %v2013
        %2351 = vst [vmem:[%s441 + $0x1c8] sm:$0xff] %v2015
        %2352 = vst [vmem:[%s441 + $0x1d0] sm:$0xff] %v2206
        %2353 = vst [vmem:[%s441 + $0x1d8] sm:$0xff] %v2208
        %2354 = vst [vmem:[%s441 + $0x1e0] sm:$0xff] %v2017
        %2355 = vst [vmem:[%s441 + $0x1e8] sm:$0xff] %v2019
        %2356 = vst [vmem:[%s441 + $0x1f0] sm:$0xff] %v2210
        %2357 = vst [vmem:[%s441 + $0x1f8] sm:$0xff] %v2212
        %2358 = vst [vmem:[%s441 + $0x200] sm:$0xff] %v2023
        %2359 = vst [vmem:[%s441 + $0x208] sm:$0xff] %v2025
        %2360 = vst [vmem:[%s441 + $0x210] sm:$0xff] %v2216
        %2361 = vst [vmem:[%s441 + $0x218] sm:$0xff] %v2218
        %2362 = vst [vmem:[%s441 + $0x220] sm:$0xff] %v2027
        %2363 = vst [vmem:[%s441 + $0x228] sm:$0xff] %v2029
        %2364 = vst [vmem:[%s441 + $0x230] sm:$0xff] %v2220
        %2365 = vst [vmem:[%s441 + $0x238] sm:$0xff] %v2222
        %2366 = vst [vmem:[%s441 + $0x240] sm:$0xff] %v2033
        %2367 = vst [vmem:[%s441 + $0x248] sm:$0xff] %v2035
        %2368 = vst [vmem:[%s441 + $0x250] sm:$0xff] %v2226
        %2369 = vst [vmem:[%s441 + $0x258] sm:$0xff] %v2228
        %2370 = vst [vmem:[%s441 + $0x260] sm:$0xff] %v2037
        %2371 = vst [vmem:[%s441 + $0x268] sm:$0xff] %v2039
        %2372 = vst [vmem:[%s441 + $0x270] sm:$0xff] %v2230
        %2373 = vst [vmem:[%s441 + $0x278] sm:$0xff] %v2232
        %2374 = vst [vmem:[%s441 + $0x280] sm:$0xff] %v2043
        %2375 = vst [vmem:[%s441 + $0x288] sm:$0xff] %v2045
        %2376 = vst [vmem:[%s441 + $0x290] sm:$0xff] %v2236
        %2377 = vst [vmem:[%s441 + $0x298] sm:$0xff] %v2238
        %2378 = vst [vmem:[%s441 + $0x2a0] sm:$0xff] %v2047
        %2379 = vst [vmem:[%s441 + $0x2a8] sm:$0xff] %v2049
        %2380 = vst [vmem:[%s441 + $0x2b0] sm:$0xff] %v2240
        %2381 = vst [vmem:[%s441 + $0x2b8] sm:$0xff] %v2242
        %2382 = vst [vmem:[%s441 + $0x2c0] sm:$0xff] %v2053
        %2383 = vst [vmem:[%s441 + $0x2c8] sm:$0xff] %v2055
        %2384 = vst [vmem:[%s441 + $0x2d0] sm:$0xff] %v2246
        %2385 = vst [vmem:[%s441 + $0x2d8] sm:$0xff] %v2248
        %2386 = vst [vmem:[%s441 + $0x2e0] sm:$0xff] %v2057
        %2387 = vst [vmem:[%s441 + $0x2e8] sm:$0xff] %v2059
        %2388 = vst [vmem:[%s441 + $0x2f0] sm:$0xff] %v2250
        %2389 = vst [vmem:[%s441 + $0x2f8] sm:$0xff] %v2252
        %2390 = vst [vmem:[%s441 + $0x300] sm:$0xff] %v2063
        %2391 = vst [vmem:[%s441 + $0x308] sm:$0xff] %v2065
        %2392 = vst [vmem:[%s441 + $0x310] sm:$0xff] %v2256
        %2393 = vst [vmem:[%s441 + $0x318] sm:$0xff] %v2258
        %2394 = vst [vmem:[%s441 + $0x320] sm:$0xff] %v2067
        %2395 = vst [vmem:[%s441 + $0x328] sm:$0xff] %v2069
        %2396 = vst [vmem:[%s441 + $0x330] sm:$0xff] %v2260
        %2397 = vst [vmem:[%s441 + $0x338] sm:$0xff] %v2262
        %2398 = vst [vmem:[%s441 + $0x340] sm:$0xff] %v2073
        %2399 = vst [vmem:[%s441 + $0x348] sm:$0xff] %v2075
        %2400 = vst [vmem:[%s441 + $0x350] sm:$0xff] %v2266
        %2401 = vst [vmem:[%s441 + $0x358] sm:$0xff] %v2268
        %2402 = vst [vmem:[%s441 + $0x360] sm:$0xff] %v2077
        %2403 = vst [vmem:[%s441 + $0x368] sm:$0xff] %v2079
        %2404 = vst [vmem:[%s441 + $0x370] sm:$0xff] %v2270
        %2405 = vst [vmem:[%s441 + $0x378] sm:$0xff] %v2272
        %2406 = vst [vmem:[%s441 + $0x380] sm:$0xff] %v2083
        %2407 = vst [vmem:[%s441 + $0x388] sm:$0xff] %v2085
        %2408 = vst [vmem:[%s441 + $0x390] sm:$0xff] %v2276
        %2409 = vst [vmem:[%s441 + $0x398] sm:$0xff] %v2278
        %2410 = vst [vmem:[%s441 + $0x3a0] sm:$0xff] %v2087
        %2411 = vst [vmem:[%s441 + $0x3a8] sm:$0xff] %v2089
        %2412 = vst [vmem:[%s441 + $0x3b0] sm:$0xff] %v2280
        %2413 = vst [vmem:[%s441 + $0x3b8] sm:$0xff] %v2282
        %2414 = vst [vmem:[%s441 + $0x3c0] sm:$0xff] %v2093
        %2415 = vst [vmem:[%s441 + $0x3c8] sm:$0xff] %v2095
        %2416 = vst [vmem:[%s441 + $0x3d0] sm:$0xff] %v2286
        %2417 = vst [vmem:[%s441 + $0x3d8] sm:$0xff] %v2288
        %2418 = vst [vmem:[%s441 + $0x3e0] sm:$0xff] %v2097
        %2419 = vst [vmem:[%s441 + $0x3e8] sm:$0xff] %v2099
        %2420 = vst [vmem:[%s441 + $0x3f0] sm:$0xff] %v2290
        %2421 = vst [vmem:[%s441 + $0x3f8] sm:$0xff] %v2292
        %s2422 = sand.u32 %s213, 1
        %s2423 = scalar_lea.sflag [#allocation5], %s2422
        %s2424 = sand.u32 %s213, 1
        %s2425 = smul.addr %s2424, 1024
        %s2426 = scalar_lea.vmem [#allocation15], %s2425
        // Predicated region
        $region81: #{tpu_custom_call.1} parent=47 // pred_check
          %p2427 = pneg %p223
        $region82: #{tpu_custom_call.1} parent=47 // pred_check_branch
          %2429 = sbr.rel (%p2427) target = $region84
        $region83: #{tpu_custom_call.1} parent=47 // pred_region
          %s2430 = smul.u32 32, %s33
          %s2431 = smul.u32 4, %s34
          %s2433 = ssub.s32 16384, 16384
          %2434 = vsyncadd %s2423, %s2433
          %s2435 = smul.addr %s2430, 8
          %s2436 = sadd.s32 %s2431, %s2435
          %s2437 = smul.addr %s2436, 128
          %s2438 = scalar_lea.hbm %s7, %s2437
          %s2439 = sshll.u32 %s2426, 4
          %s2440 = int_to_ptr.vmem [resolvable:$true] %s2439
          %2445 = dma.vmem_to_hbm [thread:$0]  %s2440, 16384, %s2438, %s2423, 512, 1024, 32
        $region84: #{tpu_custom_call.1} parent=47 // pred_fallthru
          _
      $region48: #{tpu_custom_call.1} parent=5 // pred_fallthru
        _
      %p2446 = scmp.le.s32.totalorder 2, %s24
      // Predicated region
      $region85: #{tpu_custom_call.1} parent=5 // pred_check
        %p2447 = pneg %p2446
      $region86: #{tpu_custom_call.1} parent=5 // pred_check_branch
        %2449 = sbr.rel (%p2447) target = $region88
      $region87: #{tpu_custom_call.1} parent=5 // pred_region
        %s2450 = ssub.s32 %s24, 2
        // Predicated region
        $region89: #{tpu_custom_call.1} parent=87 // pred_check
          %p2451 = pneg %p229
        $region90: #{tpu_custom_call.1} parent=87 // pred_check_branch
          %2453 = sbr.rel (%p2451) target = $region92
        $region91: #{tpu_custom_call.1} parent=87 // pred_region
          %s2454 = sand.u32 %s214, 1
          %s2455 = scalar_lea.sflag [#allocation5], %s2454
          %s2456 = sand.u32 %s214, 1
          %s2457 = smul.addr %s2456, 1024
          %s2458 = scalar_lea.vmem [#allocation15], %s2457
          %2459 = dma.done %s2455, 16384
        $region92: #{tpu_custom_call.1} parent=87 // pred_fallthru
          _
      $region88: #{tpu_custom_call.1} parent=5 // pred_fallthru
        _
    $region6: #{tpu_custom_call.1} parent=1 // loop_footer
      %s28 = sadd.s32 1, %s24
    $region7: #{tpu_custom_call.1} parent=1 // loop_footer_branch
      %23 = sbr.rel target = $region3
    $region8: #{tpu_custom_call.1} parent=1 // loop_exit
      _
    %2460 = vsyncpa [#allocation4], 1
    %s2461 = scalar_lea.sflag [#allocation4], 1
    %2462 = vsyncpa %s2461, 1
    %2463 = vsyncpa [#allocation7], 1
    %2464 = vsyncpa [#allocation10], 1
    %2465 = vsyncpa [#allocation13], 1
    %s2466 = scalar_lea.sflag [#allocation13], 1
    %2467 = vsyncpa %s2466, 1
    %2468 = vsyncpa [#allocation5], 1
    %s2469 = scalar_lea.sflag [#allocation5], 1
    %2470 = vsyncpa %s2469, 1

</llo_original>
